<compile_context>
chip_gen: v6e
topology: v6e:2x2x1
jax: 0.10.0
libtpu: 0.0.40
codegen_flags: <defaults>
</compile_context>

<pallas_src>
import math
from functools import partial

import jax
import jax.numpy as jnp
from jax.experimental import pallas as pl
from jax.experimental.pallas import tpu as pltpu


# ----------------------------- kernel helpers -------------------------------

def _layernorm(x, gamma, beta, eps=1e-5):
    mean = jnp.mean(x, axis=-1, keepdims=True)
    var = jnp.mean((x - mean) ** 2, axis=-1, keepdims=True)
    return (x - mean) * jax.lax.rsqrt(var + eps) * gamma + beta


# ----------------------------- fused kernel ----------------------------------

def fused_transformer_kernel(
    # scalar prefetch
    flags_ref,                                   # SMEM (L,) int32: has_attn_ln
    # inputs (per-(batch-tile, layer) blocks)
    x_ref,                                       # (TB*S, D) f32 input tile
    ln_a_g_ref, ln_a_b_ref,                      # (1, D)
    wqkv_ref, bq_ref, bv_ref,                    # (D, 3D), (1, D), (1, D)
    wo_ref, bo_ref,                              # (D, D), (1, D)
    ln_f_g_ref, ln_f_b_ref,                      # (1, D)
    w1a_ref, b1a_ref, w1b_ref, b1b_ref,          # (D, F), (1, F)
    w2_ref, b2_ref,                              # (F, D), (1, D)
    h_ln_g_ref, h_ln_b_ref, h_w_ref, h_b_ref,    # head params
    # output
    o_ref,                                       # (TB, d_out)
    # scratch
    x_scr,                                       # VMEM (TB*S, D) f32 residual
    *, n_heads, seq_len, compute_dtype):
    l = pl.program_id(1)
    n_layers = pl.num_programs(1)
    S = seq_len
    H = n_heads
    rows, D = x_ref.shape
    TB = rows // S
    dh = D // H
    scale = 1.0 / math.sqrt(dh)
    cdt = compute_dtype

    # ---- layer 0 of this batch tile: load residual into VMEM scratch -------
    @pl.when(l == 0)
    def _():
        x_scr[...] = x_ref[...]

    x = x_scr[...]                               # (TB*S, D) f32

    # ------------- attention stage (prenorm; block 0 may skip LN) -----------
    ln_x = _layernorm(x, ln_a_g_ref[...], ln_a_b_ref[...])
    xr = jnp.where(flags_ref[l] != 0, ln_x, x)   # runtime has_attn_ln flag

    # one fused, lane-dense QKV matmul: (TB*S, D) @ (D, 3D)
    qkv = jnp.dot(xr.astype(cdt), wqkv_ref[...],
                  preferred_element_type=jnp.float32)          # (TB*S, 3D) f32
    q = (qkv[:, :D] + bq_ref[...]) * scale
    k = qkv[:, D:2 * D]                          # key bias cancels in softmax
    v = qkv[:, 2 * D:] + bv_ref[...]

    head_outs = []
    for h in range(H):                           # static unroll; heads split on
        sl = slice(h * dh, (h + 1) * dh)         # the activation side only
        qh = q[:, sl].reshape(TB, S, dh)
        kh = k[:, sl].reshape(TB, S, dh)
        vh = v[:, sl].reshape(TB, S, dh)
        logits = jnp.einsum('bqd,bkd->bqk', qh.astype(cdt), kh.astype(cdt),
                            preferred_element_type=jnp.float32)  # (TB,S,S) f32
        logits = logits - jnp.max(logits, axis=-1, keepdims=True)
        p = jnp.exp(logits)
        denom = jnp.sum(p, axis=-1, keepdims=True)
        p = p * pl.reciprocal(denom, approx=True)                # EUP, not VPU
        oh = jnp.einsum('bqk,bkd->bqd', p.astype(cdt), vh.astype(cdt),
                        preferred_element_type=jnp.float32)      # (TB,S,dh)
        head_outs.append(oh.reshape(TB * S, dh))
    attn = jnp.concatenate(head_outs, axis=-1)                   # (TB*S, D)
    # single dense output projection (replaces per-head K=dh matmuls + adds)
    attn = jnp.dot(attn.astype(cdt), wo_ref[...],
                   preferred_element_type=jnp.float32) + bo_ref[...]
    x = x + attn                                 # residual dropout = 0

    # ------------------- FFN stage (prenorm, ReGLU) --------------------------
    xr = _layernorm(x, ln_f_g_ref[...], ln_f_b_ref[...])
    xr_c = xr.astype(cdt)
    a = jnp.dot(xr_c, w1a_ref[...], preferred_element_type=jnp.float32) + b1a_ref[...]
    g = jnp.dot(xr_c, w1b_ref[...], preferred_element_type=jnp.float32) + b1b_ref[...]
    act = a * jnp.maximum(g, 0.0)                # ReGLU
    x = x + jnp.dot(act.astype(cdt), w2_ref[...],
                    preferred_element_type=jnp.float32) + b2_ref[...]

    x_scr[...] = x                               # carry residual to next layer

    # ----------------- BERT-like head on the last token (last layer) ---------
    @pl.when(l == n_layers - 1)
    def _():
        # direct strided read of row (S-1) of every batch element in the tile
        x_last = x_scr[pl.ds(S - 1, TB, stride=S), :]            # (TB, D)
        xh = _layernorm(x_last, h_ln_g_ref[...], h_ln_b_ref[...])
        xh = jnp.maximum(xh, 0.0)                                 # ReLU
        o_ref[...] = jnp.dot(xh.astype(cdt), h_w_ref[...],
                             preferred_element_type=jnp.float32) + h_b_ref[...]


# --------------------------- host-side packing --------------------------------

def pack_params(blocks):
    d_hidden = blocks[0]["w2"].shape[0]

    def stack(fn):
        return jnp.stack([fn(p) for p in blocks], axis=0)

    packed = dict(
        ln_a_g=stack(lambda p: p["ln_a_g"]),                         # (L,1,D)
        ln_a_b=stack(lambda p: p["ln_a_b"]),
        # lane-dense fused QKV weights: (L, D, 3D)
        wqkv=stack(lambda p: jnp.concatenate([p["wq"], p["wk"], p["wv"]],
                                             axis=1)),
        bq=stack(lambda p: p["bq"]),                                 # (L,1,D)
        bv=stack(lambda p: p["bv"]),
        wo=stack(lambda p: p["wo"]),                                 # (L,D,D)
        bo=stack(lambda p: p["bo"]),
        ln_f_g=stack(lambda p: p["ln_f_g"]),
        ln_f_b=stack(lambda p: p["ln_f_b"]),
        w1a=stack(lambda p: p["w1"][:, :d_hidden]),                  # (L,D,F)
        b1a=stack(lambda p: p["b1"][:, :d_hidden]),
        w1b=stack(lambda p: p["w1"][:, d_hidden:]),
        b1b=stack(lambda p: p["b1"][:, d_hidden:]),
        w2=stack(lambda p: p["w2"]),                                 # (L,F,D)
        b2=stack(lambda p: p["b2"]),
    )
    flags = jnp.array([1 if p["has_attn_ln"] else 0 for p in blocks],
                      dtype=jnp.int32)
    return packed, flags


def transformer_forward(x, blocks, head, *, n_heads, batch_tile=None,
                        compute_dtype=jnp.float32):
    B, S, D = x.shape
    L = len(blocks)
    d_out = head["w"].shape[1]
    d_hidden = blocks[0]["w2"].shape[0]
    packed, flags = pack_params(blocks)

    if batch_tile is None:
        batch_tile = B
    assert B % batch_tile == 0, "batch must be divisible by batch_tile"
    TB = batch_tile
    nbt = B // TB
    cdt = compute_dtype

    wcast = lambda a: a.astype(cdt)              # matmul operands only

    x_in = x.reshape(nbt, TB * S, D)

    # index_maps receive (batch_tile_idx, layer_idx, *scalar_prefetch_refs)
    tile_map = lambda b, l, f: (b, 0, 0)         # batch-tile resident arrays
    layer_map = lambda b, l, f: (l, 0, 0)        # per-layer weights
    const_map2 = lambda b, l, f: (0, 0)          # head params (grid-invariant)

    def lspec(a):                                # per-layer (L, r, c) array
        return pl.BlockSpec((None, a.shape[1], a.shape[2]), layer_map)

    in_specs = [
        pl.BlockSpec((None, TB * S, D), tile_map),                   # x
        lspec(packed["ln_a_g"]), lspec(packed["ln_a_b"]),
        lspec(packed["wqkv"]), lspec(packed["bq"]), lspec(packed["bv"]),
        lspec(packed["wo"]), lspec(packed["bo"]),
        lspec(packed["ln_f_g"]), lspec(packed["ln_f_b"]),
        lspec(packed["w1a"]), lspec(packed["b1a"]),
        lspec(packed["w1b"]), lspec(packed["b1b"]),
        lspec(packed["w2"]), lspec(packed["b2"]),
        pl.BlockSpec((1, D), const_map2),                            # h_ln_g
        pl.BlockSpec((1, D), const_map2),                            # h_ln_b
        pl.BlockSpec((D, d_out), const_map2),                        # h_w
        pl.BlockSpec((1, d_out), const_map2),                        # h_b
    ]
    out_specs = pl.BlockSpec((None, TB, d_out), tile_map)

    grid_spec = pltpu.PrefetchScalarGridSpec(
        num_scalar_prefetch=1,
        grid=(nbt, L),
        in_specs=in_specs,
        out_specs=out_specs,
        scratch_shapes=[pltpu.VMEM((TB * S, D), jnp.float32)],
    )

    # TODO(synk): for large models on v5e set vmem_limit_bytes explicitly and
    # re-derive TB for v7x's 64 MiB VMEM.
    out = pl.pallas_call(
        partial(fused_transformer_kernel, n_heads=n_heads, seq_len=S,
                compute_dtype=cdt),
        out_shape=jax.ShapeDtypeStruct((nbt, TB, d_out), jnp.float32),
        grid_spec=grid_spec,
        compiler_params=pltpu.CompilerParams(
            dimension_semantics=("parallel", "arbitrary")),
    )(
        flags, x_in,
        packed["ln_a_g"], packed["ln_a_b"],
        wcast(packed["wqkv"]), packed["bq"], packed["bv"],
        wcast(packed["wo"]), packed["bo"],
        packed["ln_f_g"], packed["ln_f_b"],
        wcast(packed["w1a"]), packed["b1a"],
        wcast(packed["w1b"]), packed["b1b"],
        wcast(packed["w2"]), packed["b2"],
        head["ln_g"], head["ln_b"], wcast(head["w"]), head["b"],
    )
    return out.reshape(B, d_out)


# ------------------------- pure-JAX reference ---------------------------------

def reference_forward(x, blocks, head_params, *, n_heads):
    def ln(x, g, b, eps=1e-5):
        m = jnp.mean(x, -1, keepdims=True)
        v = jnp.mean((x - m) ** 2, -1, keepdims=True)
        return (x - m) / jnp.sqrt(v + eps) * g + b

    B, S, D = x.shape
    dh = D // n_heads
    for p in blocks:
        xr = ln(x, p["ln_a_g"][0], p["ln_a_b"][0]) if p["has_attn_ln"] else x
        q = xr @ p["wq"] + p["bq"][0]
        k = xr @ p["wk"] + p["bk"][0]
        v = xr @ p["wv"] + p["bv"][0]
        qh = q.reshape(B, S, n_heads, dh).transpose(0, 2, 1, 3)
        kh = k.reshape(B, S, n_heads, dh).transpose(0, 2, 1, 3)
        vh = v.reshape(B, S, n_heads, dh).transpose(0, 2, 1, 3)
        logits = jnp.einsum("bhqd,bhkd->bhqk", qh, kh) / math.sqrt(dh)
        probs = jax.nn.softmax(logits, axis=-1)
        o = jnp.einsum("bhqk,bhkd->bhqd", probs, vh)
        o = o.transpose(0, 2, 1, 3).reshape(B, S, D)
        o = o @ p["wo"] + p["bo"][0]
        x = x + o
        xr = ln(x, p["ln_f_g"][0], p["ln_f_b"][0])
        h1 = xr @ p["w1"] + p["b1"][0]
        dhid = p["w2"].shape[0]
        act = h1[..., :dhid] * jax.nn.relu(h1[..., dhid:])
        x = x + (act @ p["w2"] + p["b2"][0])
    xl = x[:, -1]
    xl = ln(xl, head_params["ln_g"][0], head_params["ln_b"][0])
    xl = jax.nn.relu(xl)
    return xl @ head_params["w"] + head_params["b"][0]


# ---------------------------- parameter init ----------------------------------

def init_params(key, *, d_token, n_blocks, ffn_d_hidden, d_out,
                prenormalization=True, first_prenormalization=False):
    def lin(k, fan_in, fan_out):
        bound = 1.0 / math.sqrt(fan_in)
        return jax.random.uniform(k, (fan_in, fan_out), jnp.float32,
                                  -bound, bound)

    keys = iter(jax.random.split(key, n_blocks * 16 + 8))
    blocks = []
    for layer_idx in range(n_blocks):
        has_attn_ln = bool(layer_idx) or (not prenormalization) \
            or first_prenormalization
        p = {
            "has_attn_ln": has_attn_ln,
            "ln_a_g": jnp.ones((1, d_token), jnp.float32)
                      + 0.1 * jax.random.normal(next(keys), (1, d_token)),
            "ln_a_b": 0.1 * jax.random.normal(next(keys), (1, d_token)),
            "wq": lin(next(keys), d_token, d_token),
            "bq": jnp.zeros((1, d_token), jnp.float32),
            "wk": lin(next(keys), d_token, d_token),
            "bk": jnp.zeros((1, d_token), jnp.float32),
            "wv": lin(next(keys), d_token, d_token),
            "bv": jnp.zeros((1, d_token), jnp.float32),
            "wo": lin(next(keys), d_token, d_token),
            "bo": jnp.zeros((1, d_token), jnp.float32),
            "ln_f_g": jnp.ones((1, d_token), jnp.float32)
                      + 0.1 * jax.random.normal(next(keys), (1, d_token)),
            "ln_f_b": 0.1 * jax.random.normal(next(keys), (1, d_token)),
            # ReGLU -> first linear outputs 2 * d_hidden
            "w1": lin(next(keys), d_token, 2 * ffn_d_hidden),
            "b1": 0.01 * jax.random.normal(next(keys), (1, 2 * ffn_d_hidden)),
            "w2": lin(next(keys), ffn_d_hidden, d_token),
            "b2": 0.01 * jax.random.normal(next(keys), (1, d_token)),
        }
        blocks.append(p)
    head = {
        "ln_g": jnp.ones((1, d_token), jnp.float32)
                + 0.1 * jax.random.normal(next(keys), (1, d_token)),
        "ln_b": 0.1 * jax.random.normal(next(keys), (1, d_token)),
        "w": lin(next(keys), d_token, d_out),
        "b": jnp.zeros((1, d_out), jnp.float32),
    }
    return blocks, head


# ----------------------------------- main -------------------------------------

if __name__ == "__main__":
    B, S, D = 4, 8, 32          # (n_objects, n_tokens, d_token)
    N_HEADS = 4
    FFN_D_HIDDEN = 64
    N_BLOCKS = 2
    D_OUT = 1
    BATCH_TILE = 2              # 2 batch tiles -> exercises the parallel axis

    key = jax.random.PRNGKey(0)
    kx, kp = jax.random.split(key)
    x = jax.random.normal(kx, (B, S, D), jnp.float32)
    blocks, head = init_params(kp, d_token=D, n_blocks=N_BLOCKS,
                               ffn_d_hidden=FFN_D_HIDDEN, d_out=D_OUT)

    # TODO(synk): dropout (attention/ffn/residual), attention-prob saving
    # hooks, last_layer_query_idx and Linformer kv-compression are
    # None/identity in this config and therefore not lowered into the kernel.

    ref = reference_forward(x, blocks, head, n_heads=N_HEADS)

    # f32 matmul path (bit-accurate up to approx-reciprocal softmax)
    out = transformer_forward(x, blocks, head, n_heads=N_HEADS,
                              batch_tile=BATCH_TILE,
                              compute_dtype=jnp.float32)
    out = jax.block_until_ready(out)
    assert out.shape == (B, D_OUT)
    assert jnp.allclose(out, ref, atol=2e-3, rtol=2e-3), (out, ref)

    # bf16 matmul path (v6e/v7x MXU-native; LN/softmax statistics stay f32)
    out_bf16 = transformer_forward(x, blocks, head, n_heads=N_HEADS,
                                   batch_tile=BATCH_TILE,
                                   compute_dtype=jnp.bfloat16)
    out_bf16 = jax.block_until_ready(out_bf16)
    assert out_bf16.shape == (B, D_OUT)
    assert bool(jnp.all(jnp.isfinite(out_bf16)))
    assert float(jnp.max(jnp.abs(out_bf16 - ref))) < \
        0.1 * (1.0 + float(jnp.max(jnp.abs(ref))))

    print("KERNEL_OK")
</pallas_src>

<mosaic_0001>
module attributes {stable_mosaic.version = 11 : i64} {
  func.func @fused_transformer_kernel(%arg0: i32, %arg1: i32, %arg2: memref<2xi32, #tpu.memory_space<smem>>, %arg3: memref<1x16x32xf32, #tpu.memory_space<vmem>>, %arg4: memref<1x1x32xf32, #tpu.memory_space<vmem>>, %arg5: memref<1x1x32xf32, #tpu.memory_space<vmem>>, %arg6: memref<1x32x96xf32, #tpu.memory_space<vmem>>, %arg7: memref<1x1x32xf32, #tpu.memory_space<vmem>>, %arg8: memref<1x1x32xf32, #tpu.memory_space<vmem>>, %arg9: memref<1x32x32xf32, #tpu.memory_space<vmem>>, %arg10: memref<1x1x32xf32, #tpu.memory_space<vmem>>, %arg11: memref<1x1x32xf32, #tpu.memory_space<vmem>>, %arg12: memref<1x1x32xf32, #tpu.memory_space<vmem>>, %arg13: memref<1x32x64xf32, #tpu.memory_space<vmem>>, %arg14: memref<1x1x64xf32, #tpu.memory_space<vmem>>, %arg15: memref<1x32x64xf32, #tpu.memory_space<vmem>>, %arg16: memref<1x1x64xf32, #tpu.memory_space<vmem>>, %arg17: memref<1x64x32xf32, #tpu.memory_space<vmem>>, %arg18: memref<1x1x32xf32, #tpu.memory_space<vmem>>, %arg19: memref<1x32xf32, #tpu.memory_space<vmem>>, %arg20: memref<1x32xf32, #tpu.memory_space<vmem>>, %arg21: memref<32x1xf32, #tpu.memory_space<vmem>>, %arg22: memref<1x1xf32, #tpu.memory_space<vmem>>, %arg23: memref<1x2x1xf32, #tpu.memory_space<vmem>>, %arg24: memref<16x32xf32, #tpu.memory_space<vmem>>) attributes {dimension_semantics = [#tpu.dimension_semantics<parallel>, #tpu.dimension_semantics<arbitrary>], iteration_bounds = array<i64: 2, 2>, scalar_prefetch = 1 : i64, scratch_operands = 1 : i64, tpu.core_type = #tpu.core_type<tc>, window_params = [{transform_indices = @transform_0, window_bounds = array<i64: 1, 16, 32>}, {transform_indices = @transform_1, window_bounds = array<i64: 1, 1, 32>}, {transform_indices = @transform_2, window_bounds = array<i64: 1, 1, 32>}, {transform_indices = @transform_3, window_bounds = array<i64: 1, 32, 96>}, {transform_indices = @transform_4, window_bounds = array<i64: 1, 1, 32>}, {transform_indices = @transform_5, window_bounds = array<i64: 1, 1, 32>}, {transform_indices = @transform_6, window_bounds = array<i64: 1, 32, 32>}, {transform_indices = @transform_7, window_bounds = array<i64: 1, 1, 32>}, {transform_indices = @transform_8, window_bounds = array<i64: 1, 1, 32>}, {transform_indices = @transform_9, window_bounds = array<i64: 1, 1, 32>}, {transform_indices = @transform_10, window_bounds = array<i64: 1, 32, 64>}, {transform_indices = @transform_11, window_bounds = array<i64: 1, 1, 64>}, {transform_indices = @transform_12, window_bounds = array<i64: 1, 32, 64>}, {transform_indices = @transform_13, window_bounds = array<i64: 1, 1, 64>}, {transform_indices = @transform_14, window_bounds = array<i64: 1, 64, 32>}, {transform_indices = @transform_15, window_bounds = array<i64: 1, 1, 32>}, {pipeline_mode = #tpu.pipeline_mode<synchronous>, transform_indices = @transform_16, window_bounds = array<i64: 1, 32>}, {pipeline_mode = #tpu.pipeline_mode<synchronous>, transform_indices = @transform_17, window_bounds = array<i64: 1, 32>}, {pipeline_mode = #tpu.pipeline_mode<synchronous>, transform_indices = @transform_18, window_bounds = array<i64: 32, 1>}, {pipeline_mode = #tpu.pipeline_mode<synchronous>, transform_indices = @transform_19, window_bounds = array<i64: 1, 1>}, {transform_indices = @transform_20, window_bounds = array<i64: 1, 2, 1>}]} {
    %c0_i32 = arith.constant 0 : i32
    %0 = arith.cmpi eq, %arg1, %c0_i32 : i32
    %1 = arith.extui %0 : i1 to i32
    %c0_i32_0 = arith.constant 0 : i32
    %2 = arith.cmpi ne, %1, %c0_i32_0 : i32
    scf.if %2 {
      %c0_83 = arith.constant 0 : index
      %c0_84 = arith.constant 0 : index
      %c0_85 = arith.constant 0 : index
      %190 = vector.load %arg3[%c0_83, %c0_84, %c0_85] : memref<1x16x32xf32, #tpu.memory_space<vmem>>, vector<1x16x32xf32>
      %191 = vector.shape_cast %190 : vector<1x16x32xf32> to vector<16x32xf32>
      %c0_86 = arith.constant 0 : index
      %c0_87 = arith.constant 0 : index
      %192 = vector.load %arg24[%c0_86, %c0_87] : memref<16x32xf32, #tpu.memory_space<vmem>>, vector<16x32xf32>
      tpu.vector_store %arg24[%c0_86, %c0_87], %191 {strides = array<i32>} : memref<16x32xf32, #tpu.memory_space<vmem>>, vector<16x32xf32>,
    } else {
    }
    %c0 = arith.constant 0 : index
    %c0_1 = arith.constant 0 : index
    %3 = vector.load %arg24[%c0, %c0_1] : memref<16x32xf32, #tpu.memory_space<vmem>>, vector<16x32xf32>
    %c0_2 = arith.constant 0 : index
    %c0_3 = arith.constant 0 : index
    %c0_4 = arith.constant 0 : index
    %4 = vector.load %arg4[%c0_2, %c0_3, %c0_4] : memref<1x1x32xf32, #tpu.memory_space<vmem>>, vector<1x1x32xf32>
    %5 = vector.shape_cast %4 : vector<1x1x32xf32> to vector<1x32xf32>
    %c0_5 = arith.constant 0 : index
    %c0_6 = arith.constant 0 : index
    %c0_7 = arith.constant 0 : index
    %6 = vector.load %arg5[%c0_5, %c0_6, %c0_7] : memref<1x1x32xf32, #tpu.memory_space<vmem>>, vector<1x1x32xf32>
    %7 = vector.shape_cast %6 : vector<1x1x32xf32> to vector<1x32xf32>
    %cst = arith.constant dense<0.000000e+00> : vector<16xf32>
    %8 = vector.multi_reduction <add>, %3, %cst [1] : vector<16x32xf32> to vector<16xf32>
    %9 = vector.shape_cast %8 : vector<16xf32> to vector<16x1xf32>
    %cst_8 = arith.constant 3.200000e+01 : f32
    %10 = vector.broadcast %cst_8 : f32 to vector<16x1xf32>
    %11 = arith.divf %9, %10 : vector<16x1xf32>
    %12 = vector.broadcast %11 : vector<16x1xf32> to vector<16x32xf32>
    %13 = arith.subf %3, %12 : vector<16x32xf32>
    %14 = arith.mulf %13, %13 : vector<16x32xf32>
    %cst_9 = arith.constant dense<0.000000e+00> : vector<16xf32>
    %15 = vector.multi_reduction <add>, %14, %cst_9 [1] : vector<16x32xf32> to vector<16xf32>
    %16 = vector.shape_cast %15 : vector<16xf32> to vector<16x1xf32>
    %cst_10 = arith.constant 3.200000e+01 : f32
    %17 = vector.broadcast %cst_10 : f32 to vector<16x1xf32>
    %18 = arith.divf %16, %17 : vector<16x1xf32>
    %19 = vector.broadcast %11 : vector<16x1xf32> to vector<16x32xf32>
    %20 = arith.subf %3, %19 : vector<16x32xf32>
    %cst_11 = arith.constant 9.99999974E-6 : f32
    %21 = vector.broadcast %cst_11 : f32 to vector<16x1xf32>
    %22 = arith.addf %18, %21 : vector<16x1xf32>
    %23 = math.rsqrt %22 : vector<16x1xf32>
    %24 = vector.broadcast %23 : vector<16x1xf32> to vector<16x32xf32>
    %25 = arith.mulf %20, %24 : vector<16x32xf32>
    %26 = vector.broadcast %5 : vector<1x32xf32> to vector<16x32xf32>
    %27 = arith.mulf %25, %26 : vector<16x32xf32>
    %28 = vector.broadcast %7 : vector<1x32xf32> to vector<16x32xf32>
    %29 = arith.addf %27, %28 : vector<16x32xf32>
    %30 = arith.index_cast %arg1 : i32 to index
    %31 = memref.load %arg2[%30] : memref<2xi32, #tpu.memory_space<smem>>
    %c0_i32_12 = arith.constant 0 : i32
    %32 = arith.cmpi ne, %31, %c0_i32_12 : i32
    %33 = arith.select %32, %29, %3 : vector<16x32xf32>
    %c0_13 = arith.constant 0 : index
    %c0_14 = arith.constant 0 : index
    %c0_15 = arith.constant 0 : index
    %34 = vector.load %arg6[%c0_13, %c0_14, %c0_15] : memref<1x32x96xf32, #tpu.memory_space<vmem>>, vector<1x32x96xf32>
    %35 = vector.shape_cast %34 : vector<1x32x96xf32> to vector<32x96xf32>
    %cst_16 = arith.constant dense<0.000000e+00> : vector<16x96xf32>
    %36 = tpu.matmul %33, %35, %cst_16 {dimension_numbers = #tpu.dot_dimension_numbers<[1], [0], [0], [1], [0, 0, 1, 1], [], []>} : vector<16x32xf32>, vector<32x96xf32>, vector<16x96xf32> -> vector<16x96xf32>
    %37 = vector.extract_strided_slice %36 {offsets = [0, 0], sizes = [16, 32], strides = [1, 1]} : vector<16x96xf32> to vector<16x32xf32>
    %c0_17 = arith.constant 0 : index
    %c0_18 = arith.constant 0 : index
    %c0_19 = arith.constant 0 : index
    %38 = vector.load %arg7[%c0_17, %c0_18, %c0_19] : memref<1x1x32xf32, #tpu.memory_space<vmem>>, vector<1x1x32xf32>
    %39 = vector.shape_cast %38 : vector<1x1x32xf32> to vector<1x32xf32>
    %40 = vector.broadcast %39 : vector<1x32xf32> to vector<16x32xf32>
    %41 = arith.addf %37, %40 : vector<16x32xf32>
    %cst_20 = arith.constant 0.353553385 : f32
    %42 = vector.broadcast %cst_20 : f32 to vector<16x32xf32>
    %43 = arith.mulf %41, %42 : vector<16x32xf32>
    %44 = vector.extract_strided_slice %36 {offsets = [0, 32], sizes = [16, 32], strides = [1, 1]} : vector<16x96xf32> to vector<16x32xf32>
    %45 = vector.extract_strided_slice %36 {offsets = [0, 64], sizes = [16, 32], strides = [1, 1]} : vector<16x96xf32> to vector<16x32xf32>
    %c0_21 = arith.constant 0 : index
    %c0_22 = arith.constant 0 : index
    %c0_23 = arith.constant 0 : index
    %46 = vector.load %arg8[%c0_21, %c0_22, %c0_23] : memref<1x1x32xf32, #tpu.memory_space<vmem>>, vector<1x1x32xf32>
    %47 = vector.shape_cast %46 : vector<1x1x32xf32> to vector<1x32xf32>
    %48 = vector.broadcast %47 : vector<1x32xf32> to vector<16x32xf32>
    %49 = arith.addf %45, %48 : vector<16x32xf32>
    %50 = vector.extract_strided_slice %43 {offsets = [0, 0], sizes = [16, 8], strides = [1, 1]} : vector<16x32xf32> to vector<16x8xf32>
    %51 = vector.shape_cast %50 : vector<16x8xf32> to vector<2x8x8xf32>
    %52 = vector.extract_strided_slice %44 {offsets = [0, 0], sizes = [16, 8], strides = [1, 1]} : vector<16x32xf32> to vector<16x8xf32>
    %53 = vector.shape_cast %52 : vector<16x8xf32> to vector<2x8x8xf32>
    %54 = vector.extract_strided_slice %49 {offsets = [0, 0], sizes = [16, 8], strides = [1, 1]} : vector<16x32xf32> to vector<16x8xf32>
    %55 = vector.shape_cast %54 : vector<16x8xf32> to vector<2x8x8xf32>
    "tpu.trace_start"() <{level = 10 : i32, message = "bqd,bkd->bqk"}> : () -> ()
    %cst_24 = arith.constant dense<0.000000e+00> : vector<2x8x8xf32>
    %56 = tpu.matmul %51, %53, %cst_24 {dimension_numbers = #tpu.dot_dimension_numbers<[2], [2], [1], [1], [0, 0, 0, 1, 1, 1], [0], [0]>} : vector<2x8x8xf32>, vector<2x8x8xf32>, vector<2x8x8xf32> -> vector<2x8x8xf32>
    "tpu.trace_stop"() : () -> ()
    %cst_25 = arith.constant dense<0xFF800000> : vector<2x8xf32>
    %57 = vector.multi_reduction <maximumf>, %56, %cst_25 [2] : vector<2x8x8xf32> to vector<2x8xf32>
    %58 = vector.shape_cast %57 : vector<2x8xf32> to vector<2x8x1xf32>
    %59 = vector.broadcast %58 : vector<2x8x1xf32> to vector<2x8x8xf32>
    %60 = arith.subf %56, %59 : vector<2x8x8xf32>
    %61 = math.exp %60 : vector<2x8x8xf32>
    %cst_26 = arith.constant dense<0.000000e+00> : vector<2x8xf32>
    %62 = vector.multi_reduction <add>, %61, %cst_26 [2] : vector<2x8x8xf32> to vector<2x8xf32>
    %63 = vector.shape_cast %62 : vector<2x8xf32> to vector<2x8x1xf32>
    %64 = tpu.reciprocal %63 {approx = true} : vector<2x8x1xf32> -> vector<2x8x1xf32>
    %65 = vector.broadcast %64 : vector<2x8x1xf32> to vector<2x8x8xf32>
    %66 = arith.mulf %61, %65 : vector<2x8x8xf32>
    "tpu.trace_start"() <{level = 10 : i32, message = "bqk,bkd->bqd"}> : () -> ()
    %cst_27 = arith.constant dense<0.000000e+00> : vector<2x8x8xf32>
    %67 = tpu.matmul %66, %55, %cst_27 {dimension_numbers = #tpu.dot_dimension_numbers<[2], [1], [1], [2], [0, 0, 0, 1, 1, 2], [0], [0]>} : vector<2x8x8xf32>, vector<2x8x8xf32>, vector<2x8x8xf32> -> vector<2x8x8xf32>
    "tpu.trace_stop"() : () -> ()
    %68 = vector.shape_cast %67 : vector<2x8x8xf32> to vector<16x8xf32>
    %69 = vector.extract_strided_slice %43 {offsets = [0, 8], sizes = [16, 8], strides = [1, 1]} : vector<16x32xf32> to vector<16x8xf32>
    %70 = vector.shape_cast %69 : vector<16x8xf32> to vector<2x8x8xf32>
    %71 = vector.extract_strided_slice %44 {offsets = [0, 8], sizes = [16, 8], strides = [1, 1]} : vector<16x32xf32> to vector<16x8xf32>
    %72 = vector.shape_cast %71 : vector<16x8xf32> to vector<2x8x8xf32>
    %73 = vector.extract_strided_slice %49 {offsets = [0, 8], sizes = [16, 8], strides = [1, 1]} : vector<16x32xf32> to vector<16x8xf32>
    %74 = vector.shape_cast %73 : vector<16x8xf32> to vector<2x8x8xf32>
    "tpu.trace_start"() <{level = 10 : i32, message = "bqd,bkd->bqk"}> : () -> ()
    %cst_28 = arith.constant dense<0.000000e+00> : vector<2x8x8xf32>
    %75 = tpu.matmul %70, %72, %cst_28 {dimension_numbers = #tpu.dot_dimension_numbers<[2], [2], [1], [1], [0, 0, 0, 1, 1, 1], [0], [0]>} : vector<2x8x8xf32>, vector<2x8x8xf32>, vector<2x8x8xf32> -> vector<2x8x8xf32>
    "tpu.trace_stop"() : () -> ()
    %cst_29 = arith.constant dense<0xFF800000> : vector<2x8xf32>
    %76 = vector.multi_reduction <maximumf>, %75, %cst_29 [2] : vector<2x8x8xf32> to vector<2x8xf32>
    %77 = vector.shape_cast %76 : vector<2x8xf32> to vector<2x8x1xf32>
    %78 = vector.broadcast %77 : vector<2x8x1xf32> to vector<2x8x8xf32>
    %79 = arith.subf %75, %78 : vector<2x8x8xf32>
    %80 = math.exp %79 : vector<2x8x8xf32>
    %cst_30 = arith.constant dense<0.000000e+00> : vector<2x8xf32>
    %81 = vector.multi_reduction <add>, %80, %cst_30 [2] : vector<2x8x8xf32> to vector<2x8xf32>
    %82 = vector.shape_cast %81 : vector<2x8xf32> to vector<2x8x1xf32>
    %83 = tpu.reciprocal %82 {approx = true} : vector<2x8x1xf32> -> vector<2x8x1xf32>
    %84 = vector.broadcast %83 : vector<2x8x1xf32> to vector<2x8x8xf32>
    %85 = arith.mulf %80, %84 : vector<2x8x8xf32>
    "tpu.trace_start"() <{level = 10 : i32, message = "bqk,bkd->bqd"}> : () -> ()
    %cst_31 = arith.constant dense<0.000000e+00> : vector<2x8x8xf32>
    %86 = tpu.matmul %85, %74, %cst_31 {dimension_numbers = #tpu.dot_dimension_numbers<[2], [1], [1], [2], [0, 0, 0, 1, 1, 2], [0], [0]>} : vector<2x8x8xf32>, vector<2x8x8xf32>, vector<2x8x8xf32> -> vector<2x8x8xf32>
    "tpu.trace_stop"() : () -> ()
    %87 = vector.shape_cast %86 : vector<2x8x8xf32> to vector<16x8xf32>
    %88 = vector.extract_strided_slice %43 {offsets = [0, 16], sizes = [16, 8], strides = [1, 1]} : vector<16x32xf32> to vector<16x8xf32>
    %89 = vector.shape_cast %88 : vector<16x8xf32> to vector<2x8x8xf32>
    %90 = vector.extract_strided_slice %44 {offsets = [0, 16], sizes = [16, 8], strides = [1, 1]} : vector<16x32xf32> to vector<16x8xf32>
    %91 = vector.shape_cast %90 : vector<16x8xf32> to vector<2x8x8xf32>
    %92 = vector.extract_strided_slice %49 {offsets = [0, 16], sizes = [16, 8], strides = [1, 1]} : vector<16x32xf32> to vector<16x8xf32>
    %93 = vector.shape_cast %92 : vector<16x8xf32> to vector<2x8x8xf32>
    "tpu.trace_start"() <{level = 10 : i32, message = "bqd,bkd->bqk"}> : () -> ()
    %cst_32 = arith.constant dense<0.000000e+00> : vector<2x8x8xf32>
    %94 = tpu.matmul %89, %91, %cst_32 {dimension_numbers = #tpu.dot_dimension_numbers<[2], [2], [1], [1], [0, 0, 0, 1, 1, 1], [0], [0]>} : vector<2x8x8xf32>, vector<2x8x8xf32>, vector<2x8x8xf32> -> vector<2x8x8xf32>
    "tpu.trace_stop"() : () -> ()
    %cst_33 = arith.constant dense<0xFF800000> : vector<2x8xf32>
    %95 = vector.multi_reduction <maximumf>, %94, %cst_33 [2] : vector<2x8x8xf32> to vector<2x8xf32>
    %96 = vector.shape_cast %95 : vector<2x8xf32> to vector<2x8x1xf32>
    %97 = vector.broadcast %96 : vector<2x8x1xf32> to vector<2x8x8xf32>
    %98 = arith.subf %94, %97 : vector<2x8x8xf32>
    %99 = math.exp %98 : vector<2x8x8xf32>
    %cst_34 = arith.constant dense<0.000000e+00> : vector<2x8xf32>
    %100 = vector.multi_reduction <add>, %99, %cst_34 [2] : vector<2x8x8xf32> to vector<2x8xf32>
    %101 = vector.shape_cast %100 : vector<2x8xf32> to vector<2x8x1xf32>
    %102 = tpu.reciprocal %101 {approx = true} : vector<2x8x1xf32> -> vector<2x8x1xf32>
    %103 = vector.broadcast %102 : vector<2x8x1xf32> to vector<2x8x8xf32>
    %104 = arith.mulf %99, %103 : vector<2x8x8xf32>
    "tpu.trace_start"() <{level = 10 : i32, message = "bqk,bkd->bqd"}> : () -> ()
    %cst_35 = arith.constant dense<0.000000e+00> : vector<2x8x8xf32>
    %105 = tpu.matmul %104, %93, %cst_35 {dimension_numbers = #tpu.dot_dimension_numbers<[2], [1], [1], [2], [0, 0, 0, 1, 1, 2], [0], [0]>} : vector<2x8x8xf32>, vector<2x8x8xf32>, vector<2x8x8xf32> -> vector<2x8x8xf32>
    "tpu.trace_stop"() : () -> ()
    %106 = vector.shape_cast %105 : vector<2x8x8xf32> to vector<16x8xf32>
    %107 = vector.extract_strided_slice %43 {offsets = [0, 24], sizes = [16, 8], strides = [1, 1]} : vector<16x32xf32> to vector<16x8xf32>
    %108 = vector.shape_cast %107 : vector<16x8xf32> to vector<2x8x8xf32>
    %109 = vector.extract_strided_slice %44 {offsets = [0, 24], sizes = [16, 8], strides = [1, 1]} : vector<16x32xf32> to vector<16x8xf32>
    %110 = vector.shape_cast %109 : vector<16x8xf32> to vector<2x8x8xf32>
    %111 = vector.extract_strided_slice %49 {offsets = [0, 24], sizes = [16, 8], strides = [1, 1]} : vector<16x32xf32> to vector<16x8xf32>
    %112 = vector.shape_cast %111 : vector<16x8xf32> to vector<2x8x8xf32>
    "tpu.trace_start"() <{level = 10 : i32, message = "bqd,bkd->bqk"}> : () -> ()
    %cst_36 = arith.constant dense<0.000000e+00> : vector<2x8x8xf32>
    %113 = tpu.matmul %108, %110, %cst_36 {dimension_numbers = #tpu.dot_dimension_numbers<[2], [2], [1], [1], [0, 0, 0, 1, 1, 1], [0], [0]>} : vector<2x8x8xf32>, vector<2x8x8xf32>, vector<2x8x8xf32> -> vector<2x8x8xf32>
    "tpu.trace_stop"() : () -> ()
    %cst_37 = arith.constant dense<0xFF800000> : vector<2x8xf32>
    %114 = vector.multi_reduction <maximumf>, %113, %cst_37 [2] : vector<2x8x8xf32> to vector<2x8xf32>
    %115 = vector.shape_cast %114 : vector<2x8xf32> to vector<2x8x1xf32>
    %116 = vector.broadcast %115 : vector<2x8x1xf32> to vector<2x8x8xf32>
    %117 = arith.subf %113, %116 : vector<2x8x8xf32>
    %118 = math.exp %117 : vector<2x8x8xf32>
    %cst_38 = arith.constant dense<0.000000e+00> : vector<2x8xf32>
    %119 = vector.multi_reduction <add>, %118, %cst_38 [2] : vector<2x8x8xf32> to vector<2x8xf32>
    %120 = vector.shape_cast %119 : vector<2x8xf32> to vector<2x8x1xf32>
    %121 = tpu.reciprocal %120 {approx = true} : vector<2x8x1xf32> -> vector<2x8x1xf32>
    %122 = vector.broadcast %121 : vector<2x8x1xf32> to vector<2x8x8xf32>
    %123 = arith.mulf %118, %122 : vector<2x8x8xf32>
    "tpu.trace_start"() <{level = 10 : i32, message = "bqk,bkd->bqd"}> : () -> ()
    %cst_39 = arith.constant dense<0.000000e+00> : vector<2x8x8xf32>
    %124 = tpu.matmul %123, %112, %cst_39 {dimension_numbers = #tpu.dot_dimension_numbers<[2], [1], [1], [2], [0, 0, 0, 1, 1, 2], [0], [0]>} : vector<2x8x8xf32>, vector<2x8x8xf32>, vector<2x8x8xf32> -> vector<2x8x8xf32>
    "tpu.trace_stop"() : () -> ()
    %125 = vector.shape_cast %124 : vector<2x8x8xf32> to vector<16x8xf32>
    %126 = tpu.concatenate %68, %87, %106, %125 in 1 : vector<16x8xf32>, vector<16x8xf32>, vector<16x8xf32>, vector<16x8xf32> -> vector<16x32xf32>
    %c0_40 = arith.constant 0 : index
    %c0_41 = arith.constant 0 : index
    %c0_42 = arith.constant 0 : index
    %127 = vector.load %arg9[%c0_40, %c0_41, %c0_42] : memref<1x32x32xf32, #tpu.memory_space<vmem>>, vector<1x32x32xf32>
    %128 = vector.shape_cast %127 : vector<1x32x32xf32> to vector<32x32xf32>
    %cst_43 = arith.constant dense<0.000000e+00> : vector<16x32xf32>
    %129 = tpu.matmul %126, %128, %cst_43 {dimension_numbers = #tpu.dot_dimension_numbers<[1], [0], [0], [1], [0, 0, 1, 1], [], []>} : vector<16x32xf32>, vector<32x32xf32>, vector<16x32xf32> -> vector<16x32xf32>
    %c0_44 = arith.constant 0 : index
    %c0_45 = arith.constant 0 : index
    %c0_46 = arith.constant 0 : index
    %130 = vector.load %arg10[%c0_44, %c0_45, %c0_46] : memref<1x1x32xf32, #tpu.memory_space<vmem>>, vector<1x1x32xf32>
    %131 = vector.shape_cast %130 : vector<1x1x32xf32> to vector<1x32xf32>
    %132 = vector.broadcast %131 : vector<1x32xf32> to vector<16x32xf32>
    %133 = arith.addf %129, %132 : vector<16x32xf32>
    %134 = arith.addf %3, %133 : vector<16x32xf32>
    %c0_47 = arith.constant 0 : index
    %c0_48 = arith.constant 0 : index
    %c0_49 = arith.constant 0 : index
    %135 = vector.load %arg11[%c0_47, %c0_48, %c0_49] : memref<1x1x32xf32, #tpu.memory_space<vmem>>, vector<1x1x32xf32>
    %136 = vector.shape_cast %135 : vector<1x1x32xf32> to vector<1x32xf32>
    %c0_50 = arith.constant 0 : index
    %c0_51 = arith.constant 0 : index
    %c0_52 = arith.constant 0 : index
    %137 = vector.load %arg12[%c0_50, %c0_51, %c0_52] : memref<1x1x32xf32, #tpu.memory_space<vmem>>, vector<1x1x32xf32>
    %138 = vector.shape_cast %137 : vector<1x1x32xf32> to vector<1x32xf32>
    %cst_53 = arith.constant dense<0.000000e+00> : vector<16xf32>
    %139 = vector.multi_reduction <add>, %134, %cst_53 [1] : vector<16x32xf32> to vector<16xf32>
    %140 = vector.shape_cast %139 : vector<16xf32> to vector<16x1xf32>
    %cst_54 = arith.constant 3.200000e+01 : f32
    %141 = vector.broadcast %cst_54 : f32 to vector<16x1xf32>
    %142 = arith.divf %140, %141 : vector<16x1xf32>
    %143 = vector.broadcast %142 : vector<16x1xf32> to vector<16x32xf32>
    %144 = arith.subf %134, %143 : vector<16x32xf32>
    %145 = arith.mulf %144, %144 : vector<16x32xf32>
    %cst_55 = arith.constant dense<0.000000e+00> : vector<16xf32>
    %146 = vector.multi_reduction <add>, %145, %cst_55 [1] : vector<16x32xf32> to vector<16xf32>
    %147 = vector.shape_cast %146 : vector<16xf32> to vector<16x1xf32>
    %cst_56 = arith.constant 3.200000e+01 : f32
    %148 = vector.broadcast %cst_56 : f32 to vector<16x1xf32>
    %149 = arith.divf %147, %148 : vector<16x1xf32>
    %150 = vector.broadcast %142 : vector<16x1xf32> to vector<16x32xf32>
    %151 = arith.subf %134, %150 : vector<16x32xf32>
    %cst_57 = arith.constant 9.99999974E-6 : f32
    %152 = vector.broadcast %cst_57 : f32 to vector<16x1xf32>
    %153 = arith.addf %149, %152 : vector<16x1xf32>
    %154 = math.rsqrt %153 : vector<16x1xf32>
    %155 = vector.broadcast %154 : vector<16x1xf32> to vector<16x32xf32>
    %156 = arith.mulf %151, %155 : vector<16x32xf32>
    %157 = vector.broadcast %136 : vector<1x32xf32> to vector<16x32xf32>
    %158 = arith.mulf %156, %157 : vector<16x32xf32>
    %159 = vector.broadcast %138 : vector<1x32xf32> to vector<16x32xf32>
    %160 = arith.addf %158, %159 : vector<16x32xf32>
    %c0_58 = arith.constant 0 : index
    %c0_59 = arith.constant 0 : index
    %c0_60 = arith.constant 0 : index
    %161 = vector.load %arg13[%c0_58, %c0_59, %c0_60] : memref<1x32x64xf32, #tpu.memory_space<vmem>>, vector<1x32x64xf32>
    %162 = vector.shape_cast %161 : vector<1x32x64xf32> to vector<32x64xf32>
    %cst_61 = arith.constant dense<0.000000e+00> : vector<16x64xf32>
    %163 = tpu.matmul %160, %162, %cst_61 {dimension_numbers = #tpu.dot_dimension_numbers<[1], [0], [0], [1], [0, 0, 1, 1], [], []>} : vector<16x32xf32>, vector<32x64xf32>, vector<16x64xf32> -> vector<16x64xf32>
    %c0_62 = arith.constant 0 : index
    %c0_63 = arith.constant 0 : index
    %c0_64 = arith.constant 0 : index
    %164 = vector.load %arg14[%c0_62, %c0_63, %c0_64] : memref<1x1x64xf32, #tpu.memory_space<vmem>>, vector<1x1x64xf32>
    %165 = vector.shape_cast %164 : vector<1x1x64xf32> to vector<1x64xf32>
    %166 = vector.broadcast %165 : vector<1x64xf32> to vector<16x64xf32>
    %167 = arith.addf %163, %166 : vector<16x64xf32>
    %c0_65 = arith.constant 0 : index
    %c0_66 = arith.constant 0 : index
    %c0_67 = arith.constant 0 : index
    %168 = vector.load %arg15[%c0_65, %c0_66, %c0_67] : memref<1x32x64xf32, #tpu.memory_space<vmem>>, vector<1x32x64xf32>
    %169 = vector.shape_cast %168 : vector<1x32x64xf32> to vector<32x64xf32>
    %cst_68 = arith.constant dense<0.000000e+00> : vector<16x64xf32>
    %170 = tpu.matmul %160, %169, %cst_68 {dimension_numbers = #tpu.dot_dimension_numbers<[1], [0], [0], [1], [0, 0, 1, 1], [], []>} : vector<16x32xf32>, vector<32x64xf32>, vector<16x64xf32> -> vector<16x64xf32>
    %c0_69 = arith.constant 0 : index
    %c0_70 = arith.constant 0 : index
    %c0_71 = arith.constant 0 : index
    %171 = vector.load %arg16[%c0_69, %c0_70, %c0_71] : memref<1x1x64xf32, #tpu.memory_space<vmem>>, vector<1x1x64xf32>
    %172 = vector.shape_cast %171 : vector<1x1x64xf32> to vector<1x64xf32>
    %173 = vector.broadcast %172 : vector<1x64xf32> to vector<16x64xf32>
    %174 = arith.addf %170, %173 : vector<16x64xf32>
    %cst_72 = arith.constant 0.000000e+00 : f32
    %175 = vector.broadcast %cst_72 : f32 to vector<16x64xf32>
    %176 = arith.maximumf %174, %175 : vector<16x64xf32>
    %177 = arith.mulf %167, %176 : vector<16x64xf32>
    %c0_73 = arith.constant 0 : index
    %c0_74 = arith.constant 0 : index
    %c0_75 = arith.constant 0 : index
    %178 = vector.load %arg17[%c0_73, %c0_74, %c0_75] : memref<1x64x32xf32, #tpu.memory_space<vmem>>, vector<1x64x32xf32>
    %179 = vector.shape_cast %178 : vector<1x64x32xf32> to vector<64x32xf32>
    %cst_76 = arith.constant dense<0.000000e+00> : vector<16x32xf32>
    %180 = tpu.matmul %177, %179, %cst_76 {dimension_numbers = #tpu.dot_dimension_numbers<[1], [0], [0], [1], [0, 0, 1, 1], [], []>} : vector<16x64xf32>, vector<64x32xf32>, vector<16x32xf32> -> vector<16x32xf32>
    %181 = arith.addf %134, %180 : vector<16x32xf32>
    %c0_77 = arith.constant 0 : index
    %c0_78 = arith.constant 0 : index
    %c0_79 = arith.constant 0 : index
    %182 = vector.load %arg18[%c0_77, %c0_78, %c0_79] : memref<1x1x32xf32, #tpu.memory_space<vmem>>, vector<1x1x32xf32>
    %183 = vector.shape_cast %182 : vector<1x1x32xf32> to vector<1x32xf32>
    %184 = vector.broadcast %183 : vector<1x32xf32> to vector<16x32xf32>
    %185 = arith.addf %181, %184 : vector<16x32xf32>
    %c0_80 = arith.constant 0 : index
    %c0_81 = arith.constant 0 : index
    %186 = vector.load %arg24[%c0_80, %c0_81] : memref<16x32xf32, #tpu.memory_space<vmem>>, vector<16x32xf32>
    tpu.vector_store %arg24[%c0_80, %c0_81], %185 {strides = array<i32>} : memref<16x32xf32, #tpu.memory_space<vmem>>, vector<16x32xf32>,
    %c1_i32 = arith.constant 1 : i32
    %187 = arith.cmpi eq, %arg1, %c1_i32 : i32
    %188 = arith.extui %187 : i1 to i32
    %c0_i32_82 = arith.constant 0 : i32
    %189 = arith.cmpi ne, %188, %c0_i32_82 : i32
    scf.if %189 {
      %c7 = arith.constant 7 : index
      %c0_83 = arith.constant 0 : index
      %190 = tpu.strided_load %arg24[%c7, %c0_83] {strides = array<i32: 8, 1>} : memref<16x32xf32, #tpu.memory_space<vmem>>, vector<2x32xf32>
      %c0_84 = arith.constant 0 : index
      %c0_85 = arith.constant 0 : index
      %191 = vector.load %arg19[%c0_84, %c0_85] : memref<1x32xf32, #tpu.memory_space<vmem>>, vector<1x32xf32>
      %c0_86 = arith.constant 0 : index
      %c0_87 = arith.constant 0 : index
      %192 = vector.load %arg20[%c0_86, %c0_87] : memref<1x32xf32, #tpu.memory_space<vmem>>, vector<1x32xf32>
      %cst_88 = arith.constant dense<0.000000e+00> : vector<2xf32>
      %193 = vector.multi_reduction <add>, %190, %cst_88 [1] : vector<2x32xf32> to vector<2xf32>
      %194 = vector.shape_cast %193 : vector<2xf32> to vector<2x1xf32>
      %cst_89 = arith.constant 3.200000e+01 : f32
      %195 = vector.broadcast %cst_89 : f32 to vector<2x1xf32>
      %196 = arith.divf %194, %195 : vector<2x1xf32>
      %197 = vector.broadcast %196 : vector<2x1xf32> to vector<2x32xf32>
      %198 = arith.subf %190, %197 : vector<2x32xf32>
      %199 = arith.mulf %198, %198 : vector<2x32xf32>
      %cst_90 = arith.constant dense<0.000000e+00> : vector<2xf32>
      %200 = vector.multi_reduction <add>, %199, %cst_90 [1] : vector<2x32xf32> to vector<2xf32>
      %201 = vector.shape_cast %200 : vector<2xf32> to vector<2x1xf32>
      %cst_91 = arith.constant 3.200000e+01 : f32
      %202 = vector.broadcast %cst_91 : f32 to vector<2x1xf32>
      %203 = arith.divf %201, %202 : vector<2x1xf32>
      %204 = vector.broadcast %196 : vector<2x1xf32> to vector<2x32xf32>
      %205 = arith.subf %190, %204 : vector<2x32xf32>
      %cst_92 = arith.constant 9.99999974E-6 : f32
      %206 = vector.broadcast %cst_92 : f32 to vector<2x1xf32>
      %207 = arith.addf %203, %206 : vector<2x1xf32>
      %208 = math.rsqrt %207 : vector<2x1xf32>
      %209 = vector.broadcast %208 : vector<2x1xf32> to vector<2x32xf32>
      %210 = arith.mulf %205, %209 : vector<2x32xf32>
      %211 = vector.broadcast %191 : vector<1x32xf32> to vector<2x32xf32>
      %212 = arith.mulf %210, %211 : vector<2x32xf32>
      %213 = vector.broadcast %192 : vector<1x32xf32> to vector<2x32xf32>
      %214 = arith.addf %212, %213 : vector<2x32xf32>
      %cst_93 = arith.constant 0.000000e+00 : f32
      %215 = vector.broadcast %cst_93 : f32 to vector<2x32xf32>
      %216 = arith.maximumf %214, %215 : vector<2x32xf32>
      %c0_94 = arith.constant 0 : index
      %c0_95 = arith.constant 0 : index
      %217 = vector.load %arg21[%c0_94, %c0_95] : memref<32x1xf32, #tpu.memory_space<vmem>>, vector<32x1xf32>
      %cst_96 = arith.constant dense<0.000000e+00> : vector<2x1xf32>
      %218 = tpu.matmul %216, %217, %cst_96 {dimension_numbers = #tpu.dot_dimension_numbers<[1], [0], [0], [1], [0, 0, 1, 1], [], []>} : vector<2x32xf32>, vector<32x1xf32>, vector<2x1xf32> -> vector<2x1xf32>
      %c0_97 = arith.constant 0 : index
      %c0_98 = arith.constant 0 : index
      %219 = vector.load %arg22[%c0_97, %c0_98] : memref<1x1xf32, #tpu.memory_space<vmem>>, vector<1x1xf32>
      %220 = vector.broadcast %219 : vector<1x1xf32> to vector<2x1xf32>
      %221 = arith.addf %218, %220 : vector<2x1xf32>
      %c0_99 = arith.constant 0 : index
      %c0_100 = arith.constant 0 : index
      %c0_101 = arith.constant 0 : index
      %222 = vector.load %arg23[%c0_99, %c0_100, %c0_101] : memref<1x2x1xf32, #tpu.memory_space<vmem>>, vector<1x2x1xf32>
      %223 = vector.shape_cast %222 : vector<1x2x1xf32> to vector<2x1xf32>
      %224 = vector.shape_cast %221 : vector<2x1xf32> to vector<1x2x1xf32>
      tpu.vector_store %arg23[%c0_99, %c0_100, %c0_101], %224 {strides = array<i32>} : memref<1x2x1xf32, #tpu.memory_space<vmem>>, vector<1x2x1xf32>,
    } else {
    }
    return
  }
  func.func @transform_0(%arg0: i32, %arg1: i32, %arg2: memref<2xi32, #tpu.memory_space<smem>>) -> (i32, i32, i32) {
    %c0_i32 = arith.constant 0 : i32
    %c0_i32_0 = arith.constant 0 : i32
    %c0_i32_1 = arith.constant 0 : i32
    return %arg0, %c0_i32, %c0_i32_0 : i32, i32, i32
  }
  func.func @transform_1(%arg0: i32, %arg1: i32, %arg2: memref<2xi32, #tpu.memory_space<smem>>) -> (i32, i32, i32) {
    %c0_i32 = arith.constant 0 : i32
    %c0_i32_0 = arith.constant 0 : i32
    %c0_i32_1 = arith.constant 0 : i32
    return %arg1, %c0_i32, %c0_i32_0 : i32, i32, i32
  }
  func.func @transform_2(%arg0: i32, %arg1: i32, %arg2: memref<2xi32, #tpu.memory_space<smem>>) -> (i32, i32, i32) {
    %c0_i32 = arith.constant 0 : i32
    %c0_i32_0 = arith.constant 0 : i32
    %c0_i32_1 = arith.constant 0 : i32
    return %arg1, %c0_i32, %c0_i32_0 : i32, i32, i32
  }
  func.func @transform_3(%arg0: i32, %arg1: i32, %arg2: memref<2xi32, #tpu.memory_space<smem>>) -> (i32, i32, i32) {
    %c0_i32 = arith.constant 0 : i32
    %c0_i32_0 = arith.constant 0 : i32
    %c0_i32_1 = arith.constant 0 : i32
    return %arg1, %c0_i32, %c0_i32_0 : i32, i32, i32
  }
  func.func @transform_4(%arg0: i32, %arg1: i32, %arg2: memref<2xi32, #tpu.memory_space<smem>>) -> (i32, i32, i32) {
    %c0_i32 = arith.constant 0 : i32
    %c0_i32_0 = arith.constant 0 : i32
    %c0_i32_1 = arith.constant 0 : i32
    return %arg1, %c0_i32, %c0_i32_0 : i32, i32, i32
  }
  func.func @transform_5(%arg0: i32, %arg1: i32, %arg2: memref<2xi32, #tpu.memory_space<smem>>) -> (i32, i32, i32) {
    %c0_i32 = arith.constant 0 : i32
    %c0_i32_0 = arith.constant 0 : i32
    %c0_i32_1 = arith.constant 0 : i32
    return %arg1, %c0_i32, %c0_i32_0 : i32, i32, i32
  }
  func.func @transform_6(%arg0: i32, %arg1: i32, %arg2: memref<2xi32, #tpu.memory_space<smem>>) -> (i32, i32, i32) {
    %c0_i32 = arith.constant 0 : i32
    %c0_i32_0 = arith.constant 0 : i32
    %c0_i32_1 = arith.constant 0 : i32
    return %arg1, %c0_i32, %c0_i32_0 : i32, i32, i32
  }
  func.func @transform_7(%arg0: i32, %arg1: i32, %arg2: memref<2xi32, #tpu.memory_space<smem>>) -> (i32, i32, i32) {
    %c0_i32 = arith.constant 0 : i32
    %c0_i32_0 = arith.constant 0 : i32
    %c0_i32_1 = arith.constant 0 : i32
    return %arg1, %c0_i32, %c0_i32_0 : i32, i32, i32
  }
  func.func @transform_8(%arg0: i32, %arg1: i32, %arg2: memref<2xi32, #tpu.memory_space<smem>>) -> (i32, i32, i32) {
    %c0_i32 = arith.constant 0 : i32
    %c0_i32_0 = arith.constant 0 : i32
    %c0_i32_1 = arith.constant 0 : i32
    return %arg1, %c0_i32, %c0_i32_0 : i32, i32, i32
  }
  func.func @transform_9(%arg0: i32, %arg1: i32, %arg2: memref<2xi32, #tpu.memory_space<smem>>) -> (i32, i32, i32) {
    %c0_i32 = arith.constant 0 : i32
    %c0_i32_0 = arith.constant 0 : i32
    %c0_i32_1 = arith.constant 0 : i32
    return %arg1, %c0_i32, %c0_i32_0 : i32, i32, i32
  }
  func.func @transform_10(%arg0: i32, %arg1: i32, %arg2: memref<2xi32, #tpu.memory_space<smem>>) -> (i32, i32, i32) {
    %c0_i32 = arith.constant 0 : i32
    %c0_i32_0 = arith.constant 0 : i32
    %c0_i32_1 = arith.constant 0 : i32
    return %arg1, %c0_i32, %c0_i32_0 : i32, i32, i32
  }
  func.func @transform_11(%arg0: i32, %arg1: i32, %arg2: memref<2xi32, #tpu.memory_space<smem>>) -> (i32, i32, i32) {
    %c0_i32 = arith.constant 0 : i32
    %c0_i32_0 = arith.constant 0 : i32
    %c0_i32_1 = arith.constant 0 : i32
    return %arg1, %c0_i32, %c0_i32_0 : i32, i32, i32
  }
  func.func @transform_12(%arg0: i32, %arg1: i32, %arg2: memref<2xi32, #tpu.memory_space<smem>>) -> (i32, i32, i32) {
    %c0_i32 = arith.constant 0 : i32
    %c0_i32_0 = arith.constant 0 : i32
    %c0_i32_1 = arith.constant 0 : i32
    return %arg1, %c0_i32, %c0_i32_0 : i32, i32, i32
  }
  func.func @transform_13(%arg0: i32, %arg1: i32, %arg2: memref<2xi32, #tpu.memory_space<smem>>) -> (i32, i32, i32) {
    %c0_i32 = arith.constant 0 : i32
    %c0_i32_0 = arith.constant 0 : i32
    %c0_i32_1 = arith.constant 0 : i32
    return %arg1, %c0_i32, %c0_i32_0 : i32, i32, i32
  }
  func.func @transform_14(%arg0: i32, %arg1: i32, %arg2: memref<2xi32, #tpu.memory_space<smem>>) -> (i32, i32, i32) {
    %c0_i32 = arith.constant 0 : i32
    %c0_i32_0 = arith.constant 0 : i32
    %c0_i32_1 = arith.constant 0 : i32
    return %arg1, %c0_i32, %c0_i32_0 : i32, i32, i32
  }
  func.func @transform_15(%arg0: i32, %arg1: i32, %arg2: memref<2xi32, #tpu.memory_space<smem>>) -> (i32, i32, i32) {
    %c0_i32 = arith.constant 0 : i32
    %c0_i32_0 = arith.constant 0 : i32
    %c0_i32_1 = arith.constant 0 : i32
    return %arg1, %c0_i32, %c0_i32_0 : i32, i32, i32
  }
  func.func @transform_16(%arg0: i32, %arg1: i32, %arg2: memref<2xi32, #tpu.memory_space<smem>>) -> (i32, i32) {
    %c0_i32 = arith.constant 0 : i32
    %c0_i32_0 = arith.constant 0 : i32
    %c0_i32_1 = arith.constant 0 : i32
    return %c0_i32, %c0_i32_0 : i32, i32
  }
  func.func @transform_17(%arg0: i32, %arg1: i32, %arg2: memref<2xi32, #tpu.memory_space<smem>>) -> (i32, i32) {
    %c0_i32 = arith.constant 0 : i32
    %c0_i32_0 = arith.constant 0 : i32
    %c0_i32_1 = arith.constant 0 : i32
    return %c0_i32, %c0_i32_0 : i32, i32
  }
  func.func @transform_18(%arg0: i32, %arg1: i32, %arg2: memref<2xi32, #tpu.memory_space<smem>>) -> (i32, i32) {
    %c0_i32 = arith.constant 0 : i32
    %c0_i32_0 = arith.constant 0 : i32
    %c0_i32_1 = arith.constant 0 : i32
    return %c0_i32, %c0_i32_0 : i32, i32
  }
  func.func @transform_19(%arg0: i32, %arg1: i32, %arg2: memref<2xi32, #tpu.memory_space<smem>>) -> (i32, i32) {
    %c0_i32 = arith.constant 0 : i32
    %c0_i32_0 = arith.constant 0 : i32
    %c0_i32_1 = arith.constant 0 : i32
    return %c0_i32, %c0_i32_0 : i32, i32
  }
  func.func @transform_20(%arg0: i32, %arg1: i32, %arg2: memref<2xi32, #tpu.memory_space<smem>>) -> (i32, i32, i32) {
    %c0_i32 = arith.constant 0 : i32
    %c0_i32_0 = arith.constant 0 : i32
    %c0_i32_1 = arith.constant 0 : i32
    return %arg0, %c0_i32, %c0_i32_0 : i32, i32, i32
  }
}

</mosaic_0001>

<llo_original>
// kernel: tpu_custom_call.1
$region0: #{tpu_custom_call.1}
  #allocation0 [shape = 'u32[]', space=smem, size = 0x4, offset = 0x4, fixed_abs, tag = 'smem constant byte address 0x4 - core index']
  #allocation1 [shape = 'u32[144,128]{1,0:T(1,128)}', space=vmem, size = 0x12000, scoped, tag = 'internal scratch']
  #allocation2 [shape = 'f32[16,32]{1,0:T(8,128)}', space=vmem, size = 0x2000, scoped, tag = 'scratch operand']
  #allocation3 [shape = 's32[1]{0}', space=sflag, size = 0x4, scoped, tag = 'scoped memory for tpu_custom_call.1']
  #allocation4 [shape = 'u8[512]{0}', space=smem, size = 0x200, scoped, tag = 'prefetched SMEM operand 0']
  #allocation5 [shape = 'f32[1,1]{1,0:T(1,128)S(1)}', space=vmem, size = 0x200, scoped, tag = 'scoped memory for tpu_custom_call.1']
  %s0 = inlined_call_operand.hbm [shape: s32[2], index: 0, kind: input, shape index: {}]
  %s1 = inlined_call_operand.vmem [shape: f32[2,16,32], index: 1, kind: input, shape index: {}]
  %s2 = inlined_call_operand.vmem [shape: f32[2,1,32], index: 2, kind: input, shape index: {}]
  %s3 = inlined_call_operand.vmem [shape: f32[2,1,32], index: 3, kind: input, shape index: {}]
  %s4 = inlined_call_operand.vmem [shape: f32[2,32,96], index: 4, kind: input, shape index: {}]
  %s5 = inlined_call_operand.vmem [shape: f32[2,1,32], index: 5, kind: input, shape index: {}]
  %s6 = inlined_call_operand.vmem [shape: f32[2,1,32], index: 6, kind: input, shape index: {}]
  %s7 = inlined_call_operand.vmem [shape: f32[2,32,32], index: 7, kind: input, shape index: {}]
  %s8 = inlined_call_operand.vmem [shape: f32[2,1,32], index: 8, kind: input, shape index: {}]
  %s9 = inlined_call_operand.vmem [shape: f32[2,1,32], index: 9, kind: input, shape index: {}]
  %s10 = inlined_call_operand.vmem [shape: f32[2,1,32], index: 10, kind: input, shape index: {}]
  %s11 = inlined_call_operand.vmem [shape: f32[2,32,64], index: 11, kind: input, shape index: {}]
  %s12 = inlined_call_operand.vmem [shape: f32[2,1,64], index: 12, kind: input, shape index: {}]
  %s13 = inlined_call_operand.hbm [shape: f32[2,32,64], index: 13, kind: input, shape index: {}]
  %s14 = inlined_call_operand.vmem [shape: f32[2,1,64], index: 14, kind: input, shape index: {}]
  %s15 = inlined_call_operand.vmem [shape: f32[2,64,32], index: 15, kind: input, shape index: {}]
  %s16 = inlined_call_operand.vmem [shape: f32[2,1,32], index: 16, kind: input, shape index: {}]
  %s17 = inlined_call_operand.vmem [shape: f32[1,32], index: 17, kind: input, shape index: {}]
  %s18 = inlined_call_operand.vmem [shape: f32[1,32], index: 18, kind: input, shape index: {}]
  %s19 = inlined_call_operand.vmem [shape: f32[32,1], index: 19, kind: input, shape index: {}]
  %s20 = inlined_call_operand.<no memory space> [shape: f32[1,1], index: 20, kind: input, shape index: {}]
  %s21 = inlined_call_operand.vmem [shape: f32[2,2,1], index: 21, kind: output, shape index: {}]
  %s22 = sld [smem:[#allocation0]]
  $region125: #{tpu_custom_call.1} parent=0
    _
  %s24 = ssub.s32 1, %s22
  %s25 = scalar_select 0, %s24, %s22
  %27 = dma.hbm_to_smem %s0, 16, [#allocation4], [#allocation3]
  %v28 = vstv %s20
  %29 = vst [vmem:[#allocation5] sm:$0x1] %v28
  %30 = dma.done [#allocation3], 16
  %31 = sfence
  $region1: #{tpu_custom_call.1} parent=0
    #allocation6 [shape = 'u8[32768]{0}', space=vmem, size = 0x8000, scoped, tag = 'input window, operand 13']
    #allocation7 [shape = 's32[2]{0}', space=sflag, size = 0x8, scoped, tag = 'scoped memory for tpu_custom_call.1']
    %32 = vsyncpa [#allocation7], 0
    %s33 = scalar_lea.sflag [#allocation7], 1
    %34 = vsyncpa %s33, 0
    loop: start=0, step=1, limit=6
    $region2: #{tpu_custom_call.1} parent=1 // loop_pre_header
      _
    $region3: #{tpu_custom_call.1} parent=1 // loop_header
      %s36 = sphi 0, %s40
      %p37 = scmp.ge.s32.totalorder %s36, 6
      %s43 = sphi 0, %s55
      %s44 = sphi 0, %s51
      %s45 = sphi 0, %s43
      %s46 = sphi 0, %s44
      %s47 = sphi 0, %s45
      %s48 = sphi 0, %s46
      %s58 = sphi 0, %s60
      %s61 = sphi 0, %s58
      %s62 = sphi 0, %s61
      %s78 = sphi 0, %s62
      %s84 = sphi 0, %s86
      %s87 = sphi 0, %s84
      %s88 = sphi 0, %s87
      %s104 = sphi 0, %s88
      %s110 = sphi 0, %s112
      %s113 = sphi 0, %s110
      %s114 = sphi 0, %s113
      %s130 = sphi 0, %s114
      %s136 = sphi 0, %s138
      %s139 = sphi 0, %s136
      %s140 = sphi 0, %s139
      %s156 = sphi 0, %s140
      %s162 = sphi 0, %s164
      %s165 = sphi 0, %s162
      %s166 = sphi 0, %s165
      %s182 = sphi 0, %s166
      %s188 = sphi 0, %s190
      %s191 = sphi 0, %s188
      %s192 = sphi 0, %s191
      %s208 = sphi 0, %s192
      %s214 = sphi 0, %s216
      %s217 = sphi 0, %s214
      %s218 = sphi 0, %s217
      %s234 = sphi 0, %s218
      %s240 = sphi 0, %s242
      %s243 = sphi 0, %s240
      %s244 = sphi 0, %s243
      %s260 = sphi 0, %s244
      %s266 = sphi 0, %s268
      %s269 = sphi 0, %s266
      %s270 = sphi 0, %s269
      %s286 = sphi 0, %s270
      %s292 = sphi 0, %s294
      %s295 = sphi 0, %s292
      %s296 = sphi 0, %s295
      %s312 = sphi 0, %s296
      %s318 = sphi 0, %s320
      %s321 = sphi 0, %s318
      %s322 = sphi 0, %s321
      %s338 = sphi 0, %s322
      %s344 = sphi 0, %s346
      %s347 = sphi 0, %s344
      %s348 = sphi 0, %s347
      %s364 = sphi 0, %s348
      %s370 = sphi 0, %s372
      %s373 = sphi 0, %s370
      %s374 = sphi 0, %s373
      %s390 = sphi 0, %s374
      %s396 = sphi 0, %s398
      %s399 = sphi 0, %s396
      %s400 = sphi 0, %s399
      %s416 = sphi 0, %s400
      %s422 = sphi 0, %s424
      %s425 = sphi 0, %s422
      %s426 = sphi 0, %s425
      %s442 = sphi 0, %s426
      %s448 = sphi 0, %s450
      %s451 = sphi 0, %s448
      %s452 = sphi 0, %s451
      %s468 = sphi 0, %s452
      %s472 = sphi 0, %s472
      %s474 = sphi 0, %s472
      %s475 = sphi 0, %s474
      %s489 = sphi 0, %s475
      %s493 = sphi 0, %s493
      %s495 = sphi 0, %s493
      %s496 = sphi 0, %s495
      %s510 = sphi 0, %s496
      %s514 = sphi 0, %s514
      %s516 = sphi 0, %s514
      %s517 = sphi 0, %s516
      %s531 = sphi 0, %s517
      %s535 = sphi 0, %s535
      %s537 = sphi 0, %s535
      %s538 = sphi 0, %s537
      %s552 = sphi 0, %s538
      %s558 = sphi 0, %s560
      %s561 = sphi 0, %s558
      %s562 = sphi 0, %s561
      %s578 = sphi 0, %s562
    $region4: #{tpu_custom_call.1} parent=1 // loop_header_branch
      %39 = sbr.rel (%p37) target = $region8
    $region5: #{tpu_custom_call.1} parent=1 // loop_body
      %s41 = ssub.s32 %s36, 1
      %s42 = ssub.s32 %s36, 2
      %s49 = sadd.s32 1, %s44
      %p50 = scmp.ge.s32.totalorder %s49, 2
      %s51 = scalar_select %p50, 0, %s49
      %s52 = sadd.s32 1, %s43
      %s53 = scalar_select %p50, %s52, %s43
      %p54 = scmp.ge.s32.totalorder %s53, 2
      %s55 = scalar_select %p54, 0, %s53
      %s56 = ssub.s32 %s43, %s55
      %p57 = scmp.eq.s32.totalorder %s56, 0
      %s59 = sadd.s32 %s58, 1
      %s60 = scalar_select %p57, %s58, %s59
      %p63 = pneg %p57
      %p64 = scmp.eq.s32.totalorder %s36, 3
      %p65 = por %p63, %p64
      %p66 = scmp.ne.s32.totalorder %s58, %s61
      %p67 = scmp.eq.s32.totalorder %s36, 0
      %p68 = por %p66, %p67
      %p69 = scmp.ne.s32.totalorder %s58, %s61
      %p70 = scmp.eq.s32.totalorder %s41, 3
      %p71 = por %p69, %p70
      %p72 = scmp.ne.s32.totalorder %s61, %s62
      %p73 = scmp.eq.s32.totalorder %s41, 0
      %p74 = por %p72, %p73
      %p75 = scmp.ne.s32.totalorder %s61, %s62
      %p76 = scmp.eq.s32.totalorder %s42, 3
      %p77 = por %p75, %p76
      %p79 = scmp.ne.s32.totalorder %s62, %s78
      %p80 = scmp.eq.s32.totalorder %s42, 0
      %p81 = por %p79, %p80
      %s82 = ssub.s32 %s44, %s51
      %p83 = scmp.eq.s32.totalorder %s82, 0
      %s85 = sadd.s32 %s84, 1
      %s86 = scalar_select %p83, %s84, %s85
      %p89 = pneg %p83
      %p90 = scmp.eq.s32.totalorder %s36, 3
      %p91 = por %p89, %p90
      %p92 = scmp.ne.s32.totalorder %s84, %s87
      %p93 = scmp.eq.s32.totalorder %s36, 0
      %p94 = por %p92, %p93
      %p95 = scmp.ne.s32.totalorder %s84, %s87
      %p96 = scmp.eq.s32.totalorder %s41, 3
      %p97 = por %p95, %p96
      %p98 = scmp.ne.s32.totalorder %s87, %s88
      %p99 = scmp.eq.s32.totalorder %s41, 0
      %p100 = por %p98, %p99
      %p101 = scmp.ne.s32.totalorder %s87, %s88
      %p102 = scmp.eq.s32.totalorder %s42, 3
      %p103 = por %p101, %p102
      %p105 = scmp.ne.s32.totalorder %s88, %s104
      %p106 = scmp.eq.s32.totalorder %s42, 0
      %p107 = por %p105, %p106
      %s108 = ssub.s32 %s44, %s51
      %p109 = scmp.eq.s32.totalorder %s108, 0
      %s111 = sadd.s32 %s110, 1
      %s112 = scalar_select %p109, %s110, %s111
      %p115 = pneg %p109
      %p116 = scmp.eq.s32.totalorder %s36, 3
      %p117 = por %p115, %p116
      %p118 = scmp.ne.s32.totalorder %s110, %s113
      %p119 = scmp.eq.s32.totalorder %s36, 0
      %p120 = por %p118, %p119
      %p121 = scmp.ne.s32.totalorder %s110, %s113
      %p122 = scmp.eq.s32.totalorder %s41, 3
      %p123 = por %p121, %p122
      %p124 = scmp.ne.s32.totalorder %s113, %s114
      %p125 = scmp.eq.s32.totalorder %s41, 0
      %p126 = por %p124, %p125
      %p127 = scmp.ne.s32.totalorder %s113, %s114
      %p128 = scmp.eq.s32.totalorder %s42, 3
      %p129 = por %p127, %p128
      %p131 = scmp.ne.s32.totalorder %s114, %s130
      %p132 = scmp.eq.s32.totalorder %s42, 0
      %p133 = por %p131, %p132
      %s134 = ssub.s32 %s44, %s51
      %p135 = scmp.eq.s32.totalorder %s134, 0
      %s137 = sadd.s32 %s136, 1
      %s138 = scalar_select %p135, %s136, %s137
      %p141 = pneg %p135
      %p142 = scmp.eq.s32.totalorder %s36, 3
      %p143 = por %p141, %p142
      %p144 = scmp.ne.s32.totalorder %s136, %s139
      %p145 = scmp.eq.s32.totalorder %s36, 0
      %p146 = por %p144, %p145
      %p147 = scmp.ne.s32.totalorder %s136, %s139
      %p148 = scmp.eq.s32.totalorder %s41, 3
      %p149 = por %p147, %p148
      %p150 = scmp.ne.s32.totalorder %s139, %s140
      %p151 = scmp.eq.s32.totalorder %s41, 0
      %p152 = por %p150, %p151
      %p153 = scmp.ne.s32.totalorder %s139, %s140
      %p154 = scmp.eq.s32.totalorder %s42, 3
      %p155 = por %p153, %p154
      %p157 = scmp.ne.s32.totalorder %s140, %s156
      %p158 = scmp.eq.s32.totalorder %s42, 0
      %p159 = por %p157, %p158
      %s160 = ssub.s32 %s44, %s51
      %p161 = scmp.eq.s32.totalorder %s160, 0
      %s163 = sadd.s32 %s162, 1
      %s164 = scalar_select %p161, %s162, %s163
      %p167 = pneg %p161
      %p168 = scmp.eq.s32.totalorder %s36, 3
      %p169 = por %p167, %p168
      %p170 = scmp.ne.s32.totalorder %s162, %s165
      %p171 = scmp.eq.s32.totalorder %s36, 0
      %p172 = por %p170, %p171
      %p173 = scmp.ne.s32.totalorder %s162, %s165
      %p174 = scmp.eq.s32.totalorder %s41, 3
      %p175 = por %p173, %p174
      %p176 = scmp.ne.s32.totalorder %s165, %s166
      %p177 = scmp.eq.s32.totalorder %s41, 0
      %p178 = por %p176, %p177
      %p179 = scmp.ne.s32.totalorder %s165, %s166
      %p180 = scmp.eq.s32.totalorder %s42, 3
      %p181 = por %p179, %p180
      %p183 = scmp.ne.s32.totalorder %s166, %s182
      %p184 = scmp.eq.s32.totalorder %s42, 0
      %p185 = por %p183, %p184
      %s186 = ssub.s32 %s44, %s51
      %p187 = scmp.eq.s32.totalorder %s186, 0
      %s189 = sadd.s32 %s188, 1
      %s190 = scalar_select %p187, %s188, %s189
      %p193 = pneg %p187
      %p194 = scmp.eq.s32.totalorder %s36, 3
      %p195 = por %p193, %p194
      %p196 = scmp.ne.s32.totalorder %s188, %s191
      %p197 = scmp.eq.s32.totalorder %s36, 0
      %p198 = por %p196, %p197
      %p199 = scmp.ne.s32.totalorder %s188, %s191
      %p200 = scmp.eq.s32.totalorder %s41, 3
      %p201 = por %p199, %p200
      %p202 = scmp.ne.s32.totalorder %s191, %s192
      %p203 = scmp.eq.s32.totalorder %s41, 0
      %p204 = por %p202, %p203
      %p205 = scmp.ne.s32.totalorder %s191, %s192
      %p206 = scmp.eq.s32.totalorder %s42, 3
      %p207 = por %p205, %p206
      %p209 = scmp.ne.s32.totalorder %s192, %s208
      %p210 = scmp.eq.s32.totalorder %s42, 0
      %p211 = por %p209, %p210
      %s212 = ssub.s32 %s44, %s51
      %p213 = scmp.eq.s32.totalorder %s212, 0
      %s215 = sadd.s32 %s214, 1
      %s216 = scalar_select %p213, %s214, %s215
      %p219 = pneg %p213
      %p220 = scmp.eq.s32.totalorder %s36, 3
      %p221 = por %p219, %p220
      %p222 = scmp.ne.s32.totalorder %s214, %s217
      %p223 = scmp.eq.s32.totalorder %s36, 0
      %p224 = por %p222, %p223
      %p225 = scmp.ne.s32.totalorder %s214, %s217
      %p226 = scmp.eq.s32.totalorder %s41, 3
      %p227 = por %p225, %p226
      %p228 = scmp.ne.s32.totalorder %s217, %s218
      %p229 = scmp.eq.s32.totalorder %s41, 0
      %p230 = por %p228, %p229
      %p231 = scmp.ne.s32.totalorder %s217, %s218
      %p232 = scmp.eq.s32.totalorder %s42, 3
      %p233 = por %p231, %p232
      %p235 = scmp.ne.s32.totalorder %s218, %s234
      %p236 = scmp.eq.s32.totalorder %s42, 0
      %p237 = por %p235, %p236
      %s238 = ssub.s32 %s44, %s51
      %p239 = scmp.eq.s32.totalorder %s238, 0
      %s241 = sadd.s32 %s240, 1
      %s242 = scalar_select %p239, %s240, %s241
      %p245 = pneg %p239
      %p246 = scmp.eq.s32.totalorder %s36, 3
      %p247 = por %p245, %p246
      %p248 = scmp.ne.s32.totalorder %s240, %s243
      %p249 = scmp.eq.s32.totalorder %s36, 0
      %p250 = por %p248, %p249
      %p251 = scmp.ne.s32.totalorder %s240, %s243
      %p252 = scmp.eq.s32.totalorder %s41, 3
      %p253 = por %p251, %p252
      %p254 = scmp.ne.s32.totalorder %s243, %s244
      %p255 = scmp.eq.s32.totalorder %s41, 0
      %p256 = por %p254, %p255
      %p257 = scmp.ne.s32.totalorder %s243, %s244
      %p258 = scmp.eq.s32.totalorder %s42, 3
      %p259 = por %p257, %p258
      %p261 = scmp.ne.s32.totalorder %s244, %s260
      %p262 = scmp.eq.s32.totalorder %s42, 0
      %p263 = por %p261, %p262
      %s264 = ssub.s32 %s44, %s51
      %p265 = scmp.eq.s32.totalorder %s264, 0
      %s267 = sadd.s32 %s266, 1
      %s268 = scalar_select %p265, %s266, %s267
      %p271 = pneg %p265
      %p272 = scmp.eq.s32.totalorder %s36, 3
      %p273 = por %p271, %p272
      %p274 = scmp.ne.s32.totalorder %s266, %s269
      %p275 = scmp.eq.s32.totalorder %s36, 0
      %p276 = por %p274, %p275
      %p277 = scmp.ne.s32.totalorder %s266, %s269
      %p278 = scmp.eq.s32.totalorder %s41, 3
      %p279 = por %p277, %p278
      %p280 = scmp.ne.s32.totalorder %s269, %s270
      %p281 = scmp.eq.s32.totalorder %s41, 0
      %p282 = por %p280, %p281
      %p283 = scmp.ne.s32.totalorder %s269, %s270
      %p284 = scmp.eq.s32.totalorder %s42, 3
      %p285 = por %p283, %p284
      %p287 = scmp.ne.s32.totalorder %s270, %s286
      %p288 = scmp.eq.s32.totalorder %s42, 0
      %p289 = por %p287, %p288
      %s290 = ssub.s32 %s44, %s51
      %p291 = scmp.eq.s32.totalorder %s290, 0
      %s293 = sadd.s32 %s292, 1
      %s294 = scalar_select %p291, %s292, %s293
      %p297 = pneg %p291
      %p298 = scmp.eq.s32.totalorder %s36, 3
      %p299 = por %p297, %p298
      %p300 = scmp.ne.s32.totalorder %s292, %s295
      %p301 = scmp.eq.s32.totalorder %s36, 0
      %p302 = por %p300, %p301
      %p303 = scmp.ne.s32.totalorder %s292, %s295
      %p304 = scmp.eq.s32.totalorder %s41, 3
      %p305 = por %p303, %p304
      %p306 = scmp.ne.s32.totalorder %s295, %s296
      %p307 = scmp.eq.s32.totalorder %s41, 0
      %p308 = por %p306, %p307
      %p309 = scmp.ne.s32.totalorder %s295, %s296
      %p310 = scmp.eq.s32.totalorder %s42, 3
      %p311 = por %p309, %p310
      %p313 = scmp.ne.s32.totalorder %s296, %s312
      %p314 = scmp.eq.s32.totalorder %s42, 0
      %p315 = por %p313, %p314
      %s316 = ssub.s32 %s44, %s51
      %p317 = scmp.eq.s32.totalorder %s316, 0
      %s319 = sadd.s32 %s318, 1
      %s320 = scalar_select %p317, %s318, %s319
      %p323 = pneg %p317
      %p324 = scmp.eq.s32.totalorder %s36, 3
      %p325 = por %p323, %p324
      %p326 = scmp.ne.s32.totalorder %s318, %s321
      %p327 = scmp.eq.s32.totalorder %s36, 0
      %p328 = por %p326, %p327
      %p329 = scmp.ne.s32.totalorder %s318, %s321
      %p330 = scmp.eq.s32.totalorder %s41, 3
      %p331 = por %p329, %p330
      %p332 = scmp.ne.s32.totalorder %s321, %s322
      %p333 = scmp.eq.s32.totalorder %s41, 0
      %p334 = por %p332, %p333
      %p335 = scmp.ne.s32.totalorder %s321, %s322
      %p336 = scmp.eq.s32.totalorder %s42, 3
      %p337 = por %p335, %p336
      %p339 = scmp.ne.s32.totalorder %s322, %s338
      %p340 = scmp.eq.s32.totalorder %s42, 0
      %p341 = por %p339, %p340
      %s342 = ssub.s32 %s44, %s51
      %p343 = scmp.eq.s32.totalorder %s342, 0
      %s345 = sadd.s32 %s344, 1
      %s346 = scalar_select %p343, %s344, %s345
      %p349 = pneg %p343
      %p350 = scmp.eq.s32.totalorder %s36, 3
      %p351 = por %p349, %p350
      %p352 = scmp.ne.s32.totalorder %s344, %s347
      %p353 = scmp.eq.s32.totalorder %s36, 0
      %p354 = por %p352, %p353
      %p355 = scmp.ne.s32.totalorder %s344, %s347
      %p356 = scmp.eq.s32.totalorder %s41, 3
      %p357 = por %p355, %p356
      %p358 = scmp.ne.s32.totalorder %s347, %s348
      %p359 = scmp.eq.s32.totalorder %s41, 0
      %p360 = por %p358, %p359
      %p361 = scmp.ne.s32.totalorder %s347, %s348
      %p362 = scmp.eq.s32.totalorder %s42, 3
      %p363 = por %p361, %p362
      %p365 = scmp.ne.s32.totalorder %s348, %s364
      %p366 = scmp.eq.s32.totalorder %s42, 0
      %p367 = por %p365, %p366
      %s368 = ssub.s32 %s44, %s51
      %p369 = scmp.eq.s32.totalorder %s368, 0
      %s371 = sadd.s32 %s370, 1
      %s372 = scalar_select %p369, %s370, %s371
      %p375 = pneg %p369
      %p376 = scmp.eq.s32.totalorder %s36, 3
      %p377 = por %p375, %p376
      %p378 = scmp.ne.s32.totalorder %s370, %s373
      %p379 = scmp.eq.s32.totalorder %s36, 0
      %p380 = por %p378, %p379
      %p381 = scmp.ne.s32.totalorder %s370, %s373
      %p382 = scmp.eq.s32.totalorder %s41, 3
      %p383 = por %p381, %p382
      %p384 = scmp.ne.s32.totalorder %s373, %s374
      %p385 = scmp.eq.s32.totalorder %s41, 0
      %p386 = por %p384, %p385
      %p387 = scmp.ne.s32.totalorder %s373, %s374
      %p388 = scmp.eq.s32.totalorder %s42, 3
      %p389 = por %p387, %p388
      %p391 = scmp.ne.s32.totalorder %s374, %s390
      %p392 = scmp.eq.s32.totalorder %s42, 0
      %p393 = por %p391, %p392
      %s394 = ssub.s32 %s44, %s51
      %p395 = scmp.eq.s32.totalorder %s394, 0
      %s397 = sadd.s32 %s396, 1
      %s398 = scalar_select %p395, %s396, %s397
      %p401 = pneg %p395
      %p402 = scmp.eq.s32.totalorder %s36, 3
      %p403 = por %p401, %p402
      %p404 = scmp.ne.s32.totalorder %s396, %s399
      %p405 = scmp.eq.s32.totalorder %s36, 0
      %p406 = por %p404, %p405
      %p407 = scmp.ne.s32.totalorder %s396, %s399
      %p408 = scmp.eq.s32.totalorder %s41, 3
      %p409 = por %p407, %p408
      %p410 = scmp.ne.s32.totalorder %s399, %s400
      %p411 = scmp.eq.s32.totalorder %s41, 0
      %p412 = por %p410, %p411
      %p413 = scmp.ne.s32.totalorder %s399, %s400
      %p414 = scmp.eq.s32.totalorder %s42, 3
      %p415 = por %p413, %p414
      %p417 = scmp.ne.s32.totalorder %s400, %s416
      %p418 = scmp.eq.s32.totalorder %s42, 0
      %p419 = por %p417, %p418
      %s420 = ssub.s32 %s44, %s51
      %p421 = scmp.eq.s32.totalorder %s420, 0
      %s423 = sadd.s32 %s422, 1
      %s424 = scalar_select %p421, %s422, %s423
      %p427 = pneg %p421
      %p428 = scmp.eq.s32.totalorder %s36, 3
      %p429 = por %p427, %p428
      %p430 = scmp.ne.s32.totalorder %s422, %s425
      %p431 = scmp.eq.s32.totalorder %s36, 0
      %p432 = por %p430, %p431
      %p433 = scmp.ne.s32.totalorder %s422, %s425
      %p434 = scmp.eq.s32.totalorder %s41, 3
      %p435 = por %p433, %p434
      %p436 = scmp.ne.s32.totalorder %s425, %s426
      %p437 = scmp.eq.s32.totalorder %s41, 0
      %p438 = por %p436, %p437
      %p439 = scmp.ne.s32.totalorder %s425, %s426
      %p440 = scmp.eq.s32.totalorder %s42, 3
      %p441 = por %p439, %p440
      %p443 = scmp.ne.s32.totalorder %s426, %s442
      %p444 = scmp.eq.s32.totalorder %s42, 0
      %p445 = por %p443, %p444
      %s446 = ssub.s32 %s44, %s51
      %p447 = scmp.eq.s32.totalorder %s446, 0
      %s449 = sadd.s32 %s448, 1
      %s450 = scalar_select %p447, %s448, %s449
      %p453 = pneg %p447
      %p454 = scmp.eq.s32.totalorder %s36, 3
      %p455 = por %p453, %p454
      %p456 = scmp.ne.s32.totalorder %s448, %s451
      %p457 = scmp.eq.s32.totalorder %s36, 0
      %p458 = por %p456, %p457
      %p459 = scmp.ne.s32.totalorder %s448, %s451
      %p460 = scmp.eq.s32.totalorder %s41, 3
      %p461 = por %p459, %p460
      %p462 = scmp.ne.s32.totalorder %s451, %s452
      %p463 = scmp.eq.s32.totalorder %s41, 0
      %p464 = por %p462, %p463
      %p465 = scmp.ne.s32.totalorder %s451, %s452
      %p466 = scmp.eq.s32.totalorder %s42, 3
      %p467 = por %p465, %p466
      %p469 = scmp.ne.s32.totalorder %s452, %s468
      %p470 = scmp.eq.s32.totalorder %s42, 0
      %p471 = por %p469, %p470
      %s473 = sadd.s32 %s472, 1
      %p476 = scmp.eq.s32.totalorder %s36, 3
      %p477 = scmp.ne.s32.totalorder %s472, %s474
      %p478 = scmp.eq.s32.totalorder %s36, 0
      %p479 = por %p477, %p478
      %p480 = scmp.ne.s32.totalorder %s472, %s474
      %p481 = scmp.eq.s32.totalorder %s41, 3
      %p482 = por %p480, %p481
      %p483 = scmp.ne.s32.totalorder %s474, %s475
      %p484 = scmp.eq.s32.totalorder %s41, 0
      %p485 = por %p483, %p484
      %p486 = scmp.ne.s32.totalorder %s474, %s475
      %p487 = scmp.eq.s32.totalorder %s42, 3
      %p488 = por %p486, %p487
      %p490 = scmp.ne.s32.totalorder %s475, %s489
      %p491 = scmp.eq.s32.totalorder %s42, 0
      %p492 = por %p490, %p491
      %s494 = sadd.s32 %s493, 1
      %p497 = scmp.eq.s32.totalorder %s36, 3
      %p498 = scmp.ne.s32.totalorder %s493, %s495
      %p499 = scmp.eq.s32.totalorder %s36, 0
      %p500 = por %p498, %p499
      %p501 = scmp.ne.s32.totalorder %s493, %s495
      %p502 = scmp.eq.s32.totalorder %s41, 3
      %p503 = por %p501, %p502
      %p504 = scmp.ne.s32.totalorder %s495, %s496
      %p505 = scmp.eq.s32.totalorder %s41, 0
      %p506 = por %p504, %p505
      %p507 = scmp.ne.s32.totalorder %s495, %s496
      %p508 = scmp.eq.s32.totalorder %s42, 3
      %p509 = por %p507, %p508
      %p511 = scmp.ne.s32.totalorder %s496, %s510
      %p512 = scmp.eq.s32.totalorder %s42, 0
      %p513 = por %p511, %p512
      %s515 = sadd.s32 %s514, 1
      %p518 = scmp.eq.s32.totalorder %s36, 3
      %p519 = scmp.ne.s32.totalorder %s514, %s516
      %p520 = scmp.eq.s32.totalorder %s36, 0
      %p521 = por %p519, %p520
      %p522 = scmp.ne.s32.totalorder %s514, %s516
      %p523 = scmp.eq.s32.totalorder %s41, 3
      %p524 = por %p522, %p523
      %p525 = scmp.ne.s32.totalorder %s516, %s517
      %p526 = scmp.eq.s32.totalorder %s41, 0
      %p527 = por %p525, %p526
      %p528 = scmp.ne.s32.totalorder %s516, %s517
      %p529 = scmp.eq.s32.totalorder %s42, 3
      %p530 = por %p528, %p529
      %p532 = scmp.ne.s32.totalorder %s517, %s531
      %p533 = scmp.eq.s32.totalorder %s42, 0
      %p534 = por %p532, %p533
      %s536 = sadd.s32 %s535, 1
      %p539 = scmp.eq.s32.totalorder %s36, 3
      %p540 = scmp.ne.s32.totalorder %s535, %s537
      %p541 = scmp.eq.s32.totalorder %s36, 0
      %p542 = por %p540, %p541
      %p543 = scmp.ne.s32.totalorder %s535, %s537
      %p544 = scmp.eq.s32.totalorder %s41, 3
      %p545 = por %p543, %p544
      %p546 = scmp.ne.s32.totalorder %s537, %s538
      %p547 = scmp.eq.s32.totalorder %s41, 0
      %p548 = por %p546, %p547
      %p549 = scmp.ne.s32.totalorder %s537, %s538
      %p550 = scmp.eq.s32.totalorder %s42, 3
      %p551 = por %p549, %p550
      %p553 = scmp.ne.s32.totalorder %s538, %s552
      %p554 = scmp.eq.s32.totalorder %s42, 0
      %p555 = por %p553, %p554
      %s556 = ssub.s32 %s43, %s55
      %p557 = scmp.eq.s32.totalorder %s556, 0
      %s559 = sadd.s32 %s558, 1
      %s560 = scalar_select %p557, %s558, %s559
      %p563 = pneg %p557
      %p564 = scmp.eq.s32.totalorder %s36, 3
      %p565 = por %p563, %p564
      %p566 = scmp.ne.s32.totalorder %s558, %s561
      %p567 = scmp.eq.s32.totalorder %s36, 0
      %p568 = por %p566, %p567
      %p569 = scmp.ne.s32.totalorder %s558, %s561
      %p570 = scmp.eq.s32.totalorder %s41, 3
      %p571 = por %p569, %p570
      %p572 = scmp.ne.s32.totalorder %s561, %s562
      %p573 = scmp.eq.s32.totalorder %s41, 0
      %p574 = por %p572, %p573
      %p575 = scmp.ne.s32.totalorder %s561, %s562
      %p576 = scmp.eq.s32.totalorder %s42, 3
      %p577 = por %p575, %p576
      %p579 = scmp.ne.s32.totalorder %s562, %s578
      %p580 = scmp.eq.s32.totalorder %s42, 0
      %p581 = por %p579, %p580
      %p582 = scmp.le.s32.totalorder 1, %s36
      %p583 = scmp.lt.s32.totalorder %s36, 5
      %p584 = pnand %p582, %p583
      %p585 = pneg %p584
      // Predicated region
      $region9: #{tpu_custom_call.1} parent=5 // pred_check
        _
      $region10: #{tpu_custom_call.1} parent=5 // pred_check_branch
        %587 = sbr.rel (%p584) target = $region12
      $region11: #{tpu_custom_call.1} parent=5 // pred_region
        %s588 = ssub.s32 %s36, 1
        // Predicated region
        $region13: #{tpu_custom_call.1} parent=11 // pred_check
          %p589 = pneg %p485
        $region14: #{tpu_custom_call.1} parent=11 // pred_check_branch
          %591 = sbr.rel (%p589) target = $region16
        $region15: #{tpu_custom_call.1} parent=11 // pred_region
          _
        $region16: #{tpu_custom_call.1} parent=11 // pred_fallthru
          _
        // Predicated region
        $region17: #{tpu_custom_call.1} parent=11 // pred_check
          %p592 = pneg %p506
        $region18: #{tpu_custom_call.1} parent=11 // pred_check_branch
          %594 = sbr.rel (%p592) target = $region20
        $region19: #{tpu_custom_call.1} parent=11 // pred_region
          _
        $region20: #{tpu_custom_call.1} parent=11 // pred_fallthru
          _
        // Predicated region
        $region21: #{tpu_custom_call.1} parent=11 // pred_check
          %p595 = pneg %p527
        $region22: #{tpu_custom_call.1} parent=11 // pred_check_branch
          %597 = sbr.rel (%p595) target = $region24
        $region23: #{tpu_custom_call.1} parent=11 // pred_region
          _
        $region24: #{tpu_custom_call.1} parent=11 // pred_fallthru
          _
        // Predicated region
        $region25: #{tpu_custom_call.1} parent=11 // pred_check
          %p598 = pneg %p548
        $region26: #{tpu_custom_call.1} parent=11 // pred_check_branch
          %600 = sbr.rel (%p598) target = $region28
        $region27: #{tpu_custom_call.1} parent=11 // pred_region
          _
        $region28: #{tpu_custom_call.1} parent=11 // pred_fallthru
          _
      $region12: #{tpu_custom_call.1} parent=5 // pred_fallthru
        _
      %p601 = scmp.lt.s32.totalorder %s36, 4
      // Predicated region
      $region29: #{tpu_custom_call.1} parent=5 // pred_check
        %p602 = pneg %p601
      $region30: #{tpu_custom_call.1} parent=5 // pred_check_branch
        %604 = sbr.rel (%p602) target = $region32
      $region31: #{tpu_custom_call.1} parent=5 // pred_region
        // Predicated region
        $region33: #{tpu_custom_call.1} parent=31 // pred_check
          %p605 = pneg %p68
        $region34: #{tpu_custom_call.1} parent=31 // pred_check_branch
          %607 = sbr.rel (%p605) target = $region36
        $region35: #{tpu_custom_call.1} parent=31 // pred_region
          %p608 = scmp.lt.s32.totalorder %s43, 1
          %s609 = scalar_select %p608, %s43, 1
          %s610 = smul.addr %s609, 2
          %s611 = smul.addr %s610, 8
          %s612 = scalar_lea.vmem %s1, %s611
        $region36: #{tpu_custom_call.1} parent=31 // pred_fallthru
          _
        // Predicated region
        $region37: #{tpu_custom_call.1} parent=31 // pred_check
          %p613 = pneg %p94
        $region38: #{tpu_custom_call.1} parent=31 // pred_check_branch
          %615 = sbr.rel (%p613) target = $region40
        $region39: #{tpu_custom_call.1} parent=31 // pred_region
          %p616 = scmp.lt.s32.totalorder %s44, 1
          %s617 = scalar_select %p616, %s44, 1
          %s618 = scalar_lea.vmem %s2, %s617
        $region40: #{tpu_custom_call.1} parent=31 // pred_fallthru
          _
        // Predicated region
        $region41: #{tpu_custom_call.1} parent=31 // pred_check
          %p619 = pneg %p120
        $region42: #{tpu_custom_call.1} parent=31 // pred_check_branch
          %621 = sbr.rel (%p619) target = $region44
        $region43: #{tpu_custom_call.1} parent=31 // pred_region
          %p622 = scmp.lt.s32.totalorder %s44, 1
          %s623 = scalar_select %p622, %s44, 1
          %s624 = scalar_lea.vmem %s3, %s623
        $region44: #{tpu_custom_call.1} parent=31 // pred_fallthru
          _
        // Predicated region
        $region45: #{tpu_custom_call.1} parent=31 // pred_check
          %p625 = pneg %p146
        $region46: #{tpu_custom_call.1} parent=31 // pred_check_branch
          %627 = sbr.rel (%p625) target = $region48
        $region47: #{tpu_custom_call.1} parent=31 // pred_region
          %p628 = scmp.lt.s32.totalorder %s44, 1
          %s629 = scalar_select %p628, %s44, 1
          %s630 = smul.addr %s629, 4
          %s631 = smul.addr %s630, 8
          %s632 = scalar_lea.vmem %s4, %s631
        $region48: #{tpu_custom_call.1} parent=31 // pred_fallthru
          _
        // Predicated region
        $region49: #{tpu_custom_call.1} parent=31 // pred_check
          %p633 = pneg %p172
        $region50: #{tpu_custom_call.1} parent=31 // pred_check_branch
          %635 = sbr.rel (%p633) target = $region52
        $region51: #{tpu_custom_call.1} parent=31 // pred_region
          %p636 = scmp.lt.s32.totalorder %s44, 1
          %s637 = scalar_select %p636, %s44, 1
          %s638 = scalar_lea.vmem %s5, %s637
        $region52: #{tpu_custom_call.1} parent=31 // pred_fallthru
          _
        // Predicated region
        $region53: #{tpu_custom_call.1} parent=31 // pred_check
          %p639 = pneg %p198
        $region54: #{tpu_custom_call.1} parent=31 // pred_check_branch
          %641 = sbr.rel (%p639) target = $region56
        $region55: #{tpu_custom_call.1} parent=31 // pred_region
          %p642 = scmp.lt.s32.totalorder %s44, 1
          %s643 = scalar_select %p642, %s44, 1
          %s644 = scalar_lea.vmem %s6, %s643
        $region56: #{tpu_custom_call.1} parent=31 // pred_fallthru
          _
        // Predicated region
        $region57: #{tpu_custom_call.1} parent=31 // pred_check
          %p645 = pneg %p224
        $region58: #{tpu_custom_call.1} parent=31 // pred_check_branch
          %647 = sbr.rel (%p645) target = $region60
        $region59: #{tpu_custom_call.1} parent=31 // pred_region
          %p648 = scmp.lt.s32.totalorder %s44, 1
          %s649 = scalar_select %p648, %s44, 1
          %s650 = smul.addr %s649, 4
          %s651 = smul.addr %s650, 8
          %s652 = scalar_lea.vmem %s7, %s651
        $region60: #{tpu_custom_call.1} parent=31 // pred_fallthru
          _
        // Predicated region
        $region61: #{tpu_custom_call.1} parent=31 // pred_check
          %p653 = pneg %p250
        $region62: #{tpu_custom_call.1} parent=31 // pred_check_branch
          %655 = sbr.rel (%p653) target = $region64
        $region63: #{tpu_custom_call.1} parent=31 // pred_region
          %p656 = scmp.lt.s32.totalorder %s44, 1
          %s657 = scalar_select %p656, %s44, 1
          %s658 = scalar_lea.vmem %s8, %s657
        $region64: #{tpu_custom_call.1} parent=31 // pred_fallthru
          _
        // Predicated region
        $region65: #{tpu_custom_call.1} parent=31 // pred_check
          %p659 = pneg %p276
        $region66: #{tpu_custom_call.1} parent=31 // pred_check_branch
          %661 = sbr.rel (%p659) target = $region68
        $region67: #{tpu_custom_call.1} parent=31 // pred_region
          %p662 = scmp.lt.s32.totalorder %s44, 1
          %s663 = scalar_select %p662, %s44, 1
          %s664 = scalar_lea.vmem %s9, %s663
        $region68: #{tpu_custom_call.1} parent=31 // pred_fallthru
          _
        // Predicated region
        $region69: #{tpu_custom_call.1} parent=31 // pred_check
          %p665 = pneg %p302
        $region70: #{tpu_custom_call.1} parent=31 // pred_check_branch
          %667 = sbr.rel (%p665) target = $region72
        $region71: #{tpu_custom_call.1} parent=31 // pred_region
          %p668 = scmp.lt.s32.totalorder %s44, 1
          %s669 = scalar_select %p668, %s44, 1
          %s670 = scalar_lea.vmem %s10, %s669
        $region72: #{tpu_custom_call.1} parent=31 // pred_fallthru
          _
        // Predicated region
        $region73: #{tpu_custom_call.1} parent=31 // pred_check
          %p671 = pneg %p328
        $region74: #{tpu_custom_call.1} parent=31 // pred_check_branch
          %673 = sbr.rel (%p671) target = $region76
        $region75: #{tpu_custom_call.1} parent=31 // pred_region
          %p674 = scmp.lt.s32.totalorder %s44, 1
          %s675 = scalar_select %p674, %s44, 1
          %s676 = smul.addr %s675, 4
          %s677 = smul.addr %s676, 8
          %s678 = scalar_lea.vmem %s11, %s677
        $region76: #{tpu_custom_call.1} parent=31 // pred_fallthru
          _
        // Predicated region
        $region77: #{tpu_custom_call.1} parent=31 // pred_check
          %p679 = pneg %p354
        $region78: #{tpu_custom_call.1} parent=31 // pred_check_branch
          %681 = sbr.rel (%p679) target = $region80
        $region79: #{tpu_custom_call.1} parent=31 // pred_region
          %p682 = scmp.lt.s32.totalorder %s44, 1
          %s683 = scalar_select %p682, %s44, 1
          %s684 = scalar_lea.vmem %s12, %s683
        $region80: #{tpu_custom_call.1} parent=31 // pred_fallthru
          _
        // Predicated region
        $region81: #{tpu_custom_call.1} parent=31 // pred_check
          %p685 = pneg %p380
        $region82: #{tpu_custom_call.1} parent=31 // pred_check_branch
          %687 = sbr.rel (%p685) target = $region84
        $region83: #{tpu_custom_call.1} parent=31 // pred_region
          %s688 = sand.u32 %s370, 1
          %s689 = scalar_lea.sflag [#allocation7], %s688
          %s690 = sand.u32 %s370, 1
          %s691 = smul.addr %s690, 32
          %s692 = scalar_lea.vmem [#allocation6], %s691
          %s694 = ssub.s32 512, 512
          %695 = vsyncadd %s689, %s694
          %s696 = smul.addr %s44, 4
          %s697 = smul.addr %s696, 128
          %s698 = scalar_lea.hbm %s13, %s697
          %s699 = sshll.u32 %s692, 4
          %s700 = int_to_ptr.vmem [resolvable:$true] %s699
          %705 = dma.hbm_to_vmem [thread:$0]  %s698, 512, %s700, %s689, 128, 128, 8
        $region84: #{tpu_custom_call.1} parent=31 // pred_fallthru
          _
        // Predicated region
        $region85: #{tpu_custom_call.1} parent=31 // pred_check
          %p706 = pneg %p406
        $region86: #{tpu_custom_call.1} parent=31 // pred_check_branch
          %708 = sbr.rel (%p706) target = $region88
        $region87: #{tpu_custom_call.1} parent=31 // pred_region
          %p709 = scmp.lt.s32.totalorder %s44, 1
          %s710 = scalar_select %p709, %s44, 1
          %s711 = scalar_lea.vmem %s14, %s710
        $region88: #{tpu_custom_call.1} parent=31 // pred_fallthru
          _
        // Predicated region
        $region89: #{tpu_custom_call.1} parent=31 // pred_check
          %p712 = pneg %p432
        $region90: #{tpu_custom_call.1} parent=31 // pred_check_branch
          %714 = sbr.rel (%p712) target = $region92
        $region91: #{tpu_custom_call.1} parent=31 // pred_region
          %p715 = scmp.lt.s32.totalorder %s44, 1
          %s716 = scalar_select %p715, %s44, 1
          %s717 = smul.addr %s716, 8
          %s718 = smul.addr %s717, 8
          %s719 = scalar_lea.vmem %s15, %s718
        $region92: #{tpu_custom_call.1} parent=31 // pred_fallthru
          _
        // Predicated region
        $region93: #{tpu_custom_call.1} parent=31 // pred_check
          %p720 = pneg %p458
        $region94: #{tpu_custom_call.1} parent=31 // pred_check_branch
          %722 = sbr.rel (%p720) target = $region96
        $region95: #{tpu_custom_call.1} parent=31 // pred_region
          %p723 = scmp.lt.s32.totalorder %s44, 1
          %s724 = scalar_select %p723, %s44, 1
          %s725 = scalar_lea.vmem %s16, %s724
        $region96: #{tpu_custom_call.1} parent=31 // pred_fallthru
          _
      $region32: #{tpu_custom_call.1} parent=5 // pred_fallthru
        _
      %p726 = scmp.le.s32.totalorder 1, %s36
      %p727 = scmp.lt.s32.totalorder %s36, 5
      %p728 = pnand %p726, %p727
      %p729 = pneg %p728
      // Predicated region
      $region97: #{tpu_custom_call.1} parent=5 // pred_check
        _
      $region98: #{tpu_custom_call.1} parent=5 // pred_check_branch
        %731 = sbr.rel (%p728) target = $region100
      $region99: #{tpu_custom_call.1} parent=5 // pred_region
        %s732 = ssub.s32 %s36, 1
        %s733 = sand.u32 %s373, 1
        %s734 = scalar_lea.sflag [#allocation7], %s733
        %s735 = sand.u32 %s373, 1
        %s736 = smul.addr %s735, 32
        %s737 = scalar_lea.vmem [#allocation6], %s736
        // Predicated region
        $region101: #{tpu_custom_call.1} parent=99 // pred_check
          %p738 = pneg %p386
        $region102: #{tpu_custom_call.1} parent=99 // pred_check_branch
          %740 = sbr.rel (%p738) target = $region104
        $region103: #{tpu_custom_call.1} parent=99 // pred_region
          %741 = dma.done %s734, 512
        $region104: #{tpu_custom_call.1} parent=99 // pred_fallthru
          _
        %p742 = scmp.lt.s32.totalorder %s45, 1
        %s743 = scalar_select %p742, %s45, 1
        %s744 = smul.addr %s743, 2
        %s745 = smul.addr %s744, 8
        %s746 = scalar_lea.vmem %s1, %s745
        %p747 = pneg %p74
        %p748 = pneg %p71
        %p749 = scmp.lt.s32.totalorder %s46, 1
        %s750 = scalar_select %p749, %s46, 1
        %s751 = scalar_lea.vmem %s2, %s750
        %p752 = pneg %p100
        %p753 = pneg %p97
        %p754 = scmp.lt.s32.totalorder %s46, 1
        %s755 = scalar_select %p754, %s46, 1
        %s756 = scalar_lea.vmem %s3, %s755
        %p757 = pneg %p126
        %p758 = pneg %p123
        %p759 = scmp.lt.s32.totalorder %s46, 1
        %s760 = scalar_select %p759, %s46, 1
        %s761 = smul.addr %s760, 4
        %s762 = smul.addr %s761, 8
        %s763 = scalar_lea.vmem %s4, %s762
        %p764 = pneg %p152
        %p765 = pneg %p149
        %p766 = scmp.lt.s32.totalorder %s46, 1
        %s767 = scalar_select %p766, %s46, 1
        %s768 = scalar_lea.vmem %s5, %s767
        %p769 = pneg %p178
        %p770 = pneg %p175
        %p771 = scmp.lt.s32.totalorder %s46, 1
        %s772 = scalar_select %p771, %s46, 1
        %s773 = scalar_lea.vmem %s6, %s772
        %p774 = pneg %p204
        %p775 = pneg %p201
        %p776 = scmp.lt.s32.totalorder %s46, 1
        %s777 = scalar_select %p776, %s46, 1
        %s778 = smul.addr %s777, 4
        %s779 = smul.addr %s778, 8
        %s780 = scalar_lea.vmem %s7, %s779
        %p781 = pneg %p230
        %p782 = pneg %p227
        %p783 = scmp.lt.s32.totalorder %s46, 1
        %s784 = scalar_select %p783, %s46, 1
        %s785 = scalar_lea.vmem %s8, %s784
        %p786 = pneg %p256
        %p787 = pneg %p253
        %p788 = scmp.lt.s32.totalorder %s46, 1
        %s789 = scalar_select %p788, %s46, 1
        %s790 = scalar_lea.vmem %s9, %s789
        %p791 = pneg %p282
        %p792 = pneg %p279
        %p793 = scmp.lt.s32.totalorder %s46, 1
        %s794 = scalar_select %p793, %s46, 1
        %s795 = scalar_lea.vmem %s10, %s794
        %p796 = pneg %p308
        %p797 = pneg %p305
        %p798 = scmp.lt.s32.totalorder %s46, 1
        %s799 = scalar_select %p798, %s46, 1
        %s800 = smul.addr %s799, 4
        %s801 = smul.addr %s800, 8
        %s802 = scalar_lea.vmem %s11, %s801
        %p803 = pneg %p334
        %p804 = pneg %p331
        %p805 = scmp.lt.s32.totalorder %s46, 1
        %s806 = scalar_select %p805, %s46, 1
        %s807 = scalar_lea.vmem %s12, %s806
        %p808 = pneg %p360
        %p809 = pneg %p357
        %s810 = sand.u32 %s373, 1
        %s811 = scalar_lea.sflag [#allocation7], %s810
        %s812 = sand.u32 %s373, 1
        %s813 = smul.addr %s812, 32
        %s814 = scalar_lea.vmem [#allocation6], %s813
        %p815 = pneg %p386
        %p816 = pneg %p383
        %p817 = scmp.lt.s32.totalorder %s46, 1
        %s818 = scalar_select %p817, %s46, 1
        %s819 = scalar_lea.vmem %s14, %s818
        %p820 = pneg %p412
        %p821 = pneg %p409
        %p822 = scmp.lt.s32.totalorder %s46, 1
        %s823 = scalar_select %p822, %s46, 1
        %s824 = smul.addr %s823, 8
        %s825 = smul.addr %s824, 8
        %s826 = scalar_lea.vmem %s15, %s825
        %p827 = pneg %p438
        %p828 = pneg %p435
        %p829 = scmp.lt.s32.totalorder %s46, 1
        %s830 = scalar_select %p829, %s46, 1
        %s831 = scalar_lea.vmem %s16, %s830
        %p832 = pneg %p464
        %p833 = pneg %p461
        %p834 = pneg %p485
        %p835 = pneg %p482
        %p836 = pneg %p506
        %p837 = pneg %p503
        %p838 = pneg %p527
        %p839 = pneg %p524
        %p840 = pneg %p548
        %p841 = pneg %p545
        %p842 = pneg %p574
        %p843 = pneg %p571
        %p844 = scmp.lt.s32.totalorder %s45, 1
        %s845 = scalar_select %p844, %s45, 1
        %s846 = smul.addr %s845, 2
        %s847 = scalar_lea.vmem %s21, %s846
        %p848 = scmp.lt.s32.totalorder %s45, 1
        %s849 = scalar_select %p848, %s45, 1
        %s850 = smul.addr %s849, 2
        %s851 = smul.addr %s850, 8
        %s852 = scalar_lea.vmem %s1, %s851
        %p853 = scmp.lt.s32.totalorder %s46, 1
        %s854 = scalar_select %p853, %s46, 1
        %s855 = scalar_lea.vmem %s2, %s854
        %p856 = scmp.lt.s32.totalorder %s46, 1
        %s857 = scalar_select %p856, %s46, 1
        %s858 = scalar_lea.vmem %s3, %s857
        %p859 = scmp.lt.s32.totalorder %s46, 1
        %s860 = scalar_select %p859, %s46, 1
        %s861 = smul.addr %s860, 4
        %s862 = smul.addr %s861, 8
        %s863 = scalar_lea.vmem %s4, %s862
        %p864 = scmp.lt.s32.totalorder %s46, 1
        %s865 = scalar_select %p864, %s46, 1
        %s866 = scalar_lea.vmem %s5, %s865
        %p867 = scmp.lt.s32.totalorder %s46, 1
        %s868 = scalar_select %p867, %s46, 1
        %s869 = scalar_lea.vmem %s6, %s868
        %p870 = scmp.lt.s32.totalorder %s46, 1
        %s871 = scalar_select %p870, %s46, 1
        %s872 = smul.addr %s871, 4
        %s873 = smul.addr %s872, 8
        %s874 = scalar_lea.vmem %s7, %s873
        %p875 = scmp.lt.s32.totalorder %s46, 1
        %s876 = scalar_select %p875, %s46, 1
        %s877 = scalar_lea.vmem %s8, %s876
        %p878 = scmp.lt.s32.totalorder %s46, 1
        %s879 = scalar_select %p878, %s46, 1
        %s880 = scalar_lea.vmem %s9, %s879
        %p881 = scmp.lt.s32.totalorder %s46, 1
        %s882 = scalar_select %p881, %s46, 1
        %s883 = scalar_lea.vmem %s10, %s882
        %p884 = scmp.lt.s32.totalorder %s46, 1
        %s885 = scalar_select %p884, %s46, 1
        %s886 = smul.addr %s885, 4
        %s887 = smul.addr %s886, 8
        %s888 = scalar_lea.vmem %s11, %s887
        %p889 = scmp.lt.s32.totalorder %s46, 1
        %s890 = scalar_select %p889, %s46, 1
        %s891 = scalar_lea.vmem %s12, %s890
        %p892 = scmp.lt.s32.totalorder %s46, 1
        %s893 = scalar_select %p892, %s46, 1
        %s894 = scalar_lea.vmem %s14, %s893
        %p895 = scmp.lt.s32.totalorder %s46, 1
        %s896 = scalar_select %p895, %s46, 1
        %s897 = smul.addr %s896, 8
        %s898 = smul.addr %s897, 8
        %s899 = scalar_lea.vmem %s15, %s898
        %p900 = scmp.lt.s32.totalorder %s46, 1
        %s901 = scalar_select %p900, %s46, 1
        %s902 = scalar_lea.vmem %s16, %s901
        %p903 = scmp.lt.s32.totalorder %s45, 1
        %s904 = scalar_select %p903, %s45, 1
        %s905 = smul.addr %s904, 2
        %s906 = scalar_lea.vmem %s21, %s905
        %p907 = scmp.eq.s32.totalorder %s46, 0
        // Predicated region
        $region105: #{tpu_custom_call.1} parent=99 // pred_check
          %p908 = pneg %p907
        $region106: #{tpu_custom_call.1} parent=99 // pred_check_branch
          %910 = sbr.rel (%p908) target = $region108
        $region107: #{tpu_custom_call.1} parent=99 // pred_region
          %v911 = vld [vmem:[%s852] sm:$0xff]
          %v912 = vld [vmem:[%s852 + $0x8] sm:$0xff]
          %vm913 = vcmask 261120
          %914 = vst.msk [vmem:[#allocation2] sm:$0xff] %vm913, %v911
          %915 = vst.msk [vmem:[#allocation2 + $0x8] sm:$0xff] %vm913, %v912
        $region108: #{tpu_custom_call.1} parent=99 // pred_fallthru
          _
        %v916 = vld [vmem:[#allocation2] sm:$0xff]
        %v917 = vld [vmem:[#allocation2 + $0x8] sm:$0xff]
        %v918 = vld [vmem:[%s855] sm:$0x1]
        %v919 = vld [vmem:[%s858] sm:$0x1]
        %vm920 = vcmask 261120
        %v921 = vsel %vm920, %v916, 0.0
        %922 = vadd.xlane.f32.xlu0 %v921
        %v923 = vpop.xlane.xlu0 %922
        %v924 = vsel %vm920, %v917, 0.0
        %925 = vadd.xlane.f32.xlu0 %v924
        %v926 = vpop.xlane.xlu0 %925
        %v927 = vrcp.pop 32.0
        %v928 = vmul.f32 %v923, %v927
        %v929 = vmul.f32 %v926, %v927
        %v930 = vsub.f32 %v916, %v928
        %v931 = vsub.f32 %v917, %v929
        %v932 = vmul.f32 %v930, %v930
        %v933 = vmul.f32 %v931, %v931
        %v934 = vsel %vm920, %v932, 0.0
        %935 = vadd.xlane.f32.xlu0 %v934
        %v936 = vpop.xlane.xlu0 %935
        %v937 = vsel %vm920, %v933, 0.0
        %938 = vadd.xlane.f32.xlu0 %v937
        %v939 = vpop.xlane.xlu0 %938
        %v940 = vmul.f32 %v936, %v927
        %v941 = vmul.f32 %v939, %v927
        %v942 = vadd.f32 %v940, 1e-05
        %v943 = vadd.f32 %v941, 1e-05
        %v944 = vrsqrt.pop %v942
        %v945 = vrsqrt.pop %v943
        %v946 = vmul.f32 %v930, %v944
        %v947 = vmul.f32 %v931, %v945
        %v949 = vlaneseq
        %v950 = vshrl.u32 %v949, 7
        %v951 = vsub.s32 0, %v950
        %v952 = vrot.slane %v918, %v951
        %v954 = vmul.f32 %v946, %v952
        %v955 = vmul.f32 %v947, %v952
        %v957 = vlaneseq
        %v958 = vshrl.u32 %v957, 7
        %v959 = vsub.s32 0, %v958
        %v960 = vrot.slane %v919, %v959
        %v962 = vadd.f32 %v954, %v960
        %v963 = vadd.f32 %v955, %v960
        %s964 = sld [smem:[#allocation4 + %s46]]
        %p965 = scmp.ne.s32.totalorder %s964, 0
        %s966 = scalar_select %p965, 1, 0
        %v967 = vstv %s966
        %vm968 = vcmp.eq.s32.totalorder %v967, 1
        %v969 = vsel %vm968, %v962, %v916
        %v970 = vsel %vm968, %v963, %v917
        %v971 = vld [vmem:[%s863] sm:$0xff]
        %v972 = vld [vmem:[%s863 + $0x8] sm:$0xff]
        %v973 = vld [vmem:[%s863 + $0x10] sm:$0xff]
        %v974 = vld [vmem:[%s863 + $0x18] sm:$0xff]
        %v976 = vsel %vm920, %v969, 0
        %v979 = vsel %vm920, %v970, 0
        %981 = vmatprep.subr.mxu0 0.0
        %982 = vmatpush1.msra.mxu0 0.0
        %983 = vmatprep.subr.mxu0 0.0
        %984 = vmatpush1.msra.mxu0 0.0
        %985 = vmatprep.subr.mxu0 0.0
        %986 = vmatpush1.msra.mxu0 0.0
        %987 = vmatprep.subr.mxu0 0.0
        %988 = vmatpush1.msra.mxu0 0.0
        %989 = vmatprep.subr.mxu0 0.0
        %990 = vmatpush1.msra.mxu0 0.0
        %991 = vmatprep.subr.mxu0 0.0
        %992 = vmatpush1.msra.mxu0 0.0
        %993 = vmatprep.subr.mxu0 0.0
        %994 = vmatpush1.msra.mxu0 0.0
        %995 = vmatprep.subr.mxu0 0.0
        %996 = vmatpush1.msra.mxu0 0.0
        %997 = vmatprep.subr.mxu0 0.0
        %998 = vmatpush1.msra.mxu0 0.0
        %999 = vmatprep.subr.mxu0 0.0
        %1000 = vmatpush1.msra.mxu0 0.0
        %1001 = vmatprep.subr.mxu0 0.0
        %1002 = vmatpush1.msra.mxu0 0.0
        %1003 = vmatprep.subr.mxu0 0.0
        %1004 = vmatpush1.msra.mxu0 0.0
        %1005 = vmatprep.subr.mxu0 0.0
        %1006 = vmatpush1.msra.mxu0 %v974
        %1007 = vmatprep.subr.mxu0 0.0
        %1008 = vmatpush1.msra.mxu0 %v973
        %1009 = vmatprep.subr.mxu0 0.0
        %1010 = vmatpush1.msra.mxu0 %v972
        %1011 = vmatprep.subr.mxu0 0.0
        %1012 = vmatpush1.msra.mxu0 %v971
        %1013 = vmatprep.subr.mxu0 0.0
        %1014 = vmatpush2.msra.mxu0 0.0
        %1015 = vmatprep.subr.mxu0 0.0
        %1016 = vmatpush2.msra.mxu0 0.0
        %1017 = vmatprep.subr.mxu0 0.0
        %1018 = vmatpush2.msra.mxu0 0.0
        %1019 = vmatprep.subr.mxu0 0.0
        %1020 = vmatpush2.msra.mxu0 0.0
        %1021 = vmatprep.subr.mxu0 0.0
        %1022 = vmatpush2.msra.mxu0 0.0
        %1023 = vmatprep.subr.mxu0 0.0
        %1024 = vmatpush2.msra.mxu0 0.0
        %1025 = vmatprep.subr.mxu0 0.0
        %1026 = vmatpush2.msra.mxu0 0.0
        %1027 = vmatprep.subr.mxu0 0.0
        %1028 = vmatpush2.msra.mxu0 0.0
        %1029 = vmatprep.subr.mxu0 0.0
        %1030 = vmatpush2.msra.mxu0 0.0
        %1031 = vmatprep.subr.mxu0 0.0
        %1032 = vmatpush2.msra.mxu0 0.0
        %1033 = vmatprep.subr.mxu0 0.0
        %1034 = vmatpush2.msra.mxu0 0.0
        %1035 = vmatprep.subr.mxu0 0.0
        %1036 = vmatpush2.msra.mxu0 0.0
        %1037 = vmatprep.subr.mxu0 0.0
        %1038 = vmatpush2.msra.mxu0 0.0
        %1039 = vmatprep.subr.mxu0 0.0
        %1040 = vmatpush2.msra.mxu0 0.0
        %1041 = vmatprep.subr.mxu0 0.0
        %1042 = vmatpush2.msra.mxu0 0.0
        %1043 = vmatprep.subr.mxu0 0.0
        %1044 = vmatpush2.msra.mxu0 0.0
        %1045 = vmatprep.mubr.f32.mxu0 0.0
        %1046 = vmatmul.mubr.f32.gmra.mxu0 %v976
        %v1047 = vpop.f32.mrf.mxu0
        %v1048 = vadd.f32 0.0, %v1047
        %v1049 = vpop.f32.mrf.mxu0
        %1050 = vmatprep.mubr.f32.mxu0 0.0
        %1051 = vmatmul.mubr.f32.gmra.mxu0 %v979
        %v1052 = vpop.f32.mrf.mxu0
        %v1053 = vadd.f32 0.0, %v1052
        %v1054 = vpop.f32.mrf.mxu0
        %1055 = vdwg.mxu0
        %v1056 = vld [vmem:[%s866] sm:$0x1]
        %v1058 = vlaneseq
        %v1059 = vshrl.u32 %v1058, 7
        %v1060 = vsub.s32 0, %v1059
        %v1061 = vrot.slane %v1056, %v1060
        %v1063 = vadd.f32 %v1048, %v1061
        %v1064 = vadd.f32 %v1053, %v1061
        %v1065 = vmul.f32 %v1063, 0.35355338
        %v1066 = vmul.f32 %v1064, 0.35355338
        %v1067 = vld [vmem:[%s869] sm:$0x1]
        %v1069 = vlaneseq
        %v1070 = vshrl.u32 %v1069, 7
        %v1071 = vsub.s32 0, %v1070
        %v1072 = vrot.slane %v1067, %v1071
        %1073 = vrot.lane.b32.xlu0 %v1072, 64
        %v1074 = vpop.permute.xlu0 %1073
        %v1076 = vadd.f32 %v1048, %v1074
        %v1077 = vadd.f32 %v1053, %v1074
        %1079 = vrot.lane.b32.xlu0 %v1048, 96
        %v1080 = vpop.permute.xlu0 %1079
        %vm1081 = vcmask 64512
        %v1083 = vsel %vm1081, %v1065, 0
        %v1085 = vsel %vm1081, %v1080, 0
        %1087 = vmatprep.subr.mxu0 0.0
        %1088 = vmatpush1.xpose.msra.mxu0 0.0
        %1089 = vmatprep.subr.mxu0 0.0
        %1090 = vmatpush1.xpose.msra.mxu0 0.0
        %1091 = vmatprep.subr.mxu0 0.0
        %1092 = vmatpush1.xpose.msra.mxu0 0.0
        %1093 = vmatprep.subr.mxu0 0.0
        %1094 = vmatpush1.xpose.msra.mxu0 0.0
        %1095 = vmatprep.subr.mxu0 0.0
        %1096 = vmatpush1.xpose.msra.mxu0 0.0
        %1097 = vmatprep.subr.mxu0 0.0
        %1098 = vmatpush1.xpose.msra.mxu0 0.0
        %1099 = vmatprep.subr.mxu0 0.0
        %1100 = vmatpush1.xpose.msra.mxu0 0.0
        %1101 = vmatprep.subr.mxu0 0.0
        %1102 = vmatpush1.xpose.msra.mxu0 0.0
        %1103 = vmatprep.subr.mxu0 0.0
        %1104 = vmatpush1.xpose.msra.mxu0 0.0
        %1105 = vmatprep.subr.mxu0 0.0
        %1106 = vmatpush1.xpose.msra.mxu0 0.0
        %1107 = vmatprep.subr.mxu0 0.0
        %1108 = vmatpush1.xpose.msra.mxu0 0.0
        %1109 = vmatprep.subr.mxu0 0.0
        %1110 = vmatpush1.xpose.msra.mxu0 0.0
        %1111 = vmatprep.subr.mxu0 0.0
        %1112 = vmatpush1.xpose.msra.mxu0 0.0
        %1113 = vmatprep.subr.mxu0 0.0
        %1114 = vmatpush1.xpose.msra.mxu0 0.0
        %1115 = vmatprep.subr.mxu0 0.0
        %1116 = vmatpush1.xpose.msra.mxu0 0.0
        %1117 = vmatprep.subr.mxu0 0.0
        %1118 = vmatpush1.xpose.msra.mxu0 %v1085
        %1119 = vmatprep.subr.mxu0 0.0
        %1120 = vmatpush2.xpose.msra.mxu0 0.0
        %1121 = vmatprep.subr.mxu0 0.0
        %1122 = vmatpush2.xpose.msra.mxu0 0.0
        %1123 = vmatprep.subr.mxu0 0.0
        %1124 = vmatpush2.xpose.msra.mxu0 0.0
        %1125 = vmatprep.subr.mxu0 0.0
        %1126 = vmatpush2.xpose.msra.mxu0 0.0
        %1127 = vmatprep.subr.mxu0 0.0
        %1128 = vmatpush2.xpose.msra.mxu0 0.0
        %1129 = vmatprep.subr.mxu0 0.0
        %1130 = vmatpush2.xpose.msra.mxu0 0.0
        %1131 = vmatprep.subr.mxu0 0.0
        %1132 = vmatpush2.xpose.msra.mxu0 0.0
        %1133 = vmatprep.subr.mxu0 0.0
        %1134 = vmatpush2.xpose.msra.mxu0 0.0
        %1135 = vmatprep.subr.mxu0 0.0
        %1136 = vmatpush2.xpose.msra.mxu0 0.0
        %1137 = vmatprep.subr.mxu0 0.0
        %1138 = vmatpush2.xpose.msra.mxu0 0.0
        %1139 = vmatprep.subr.mxu0 0.0
        %1140 = vmatpush2.xpose.msra.mxu0 0.0
        %1141 = vmatprep.subr.mxu0 0.0
        %1142 = vmatpush2.xpose.msra.mxu0 0.0
        %1143 = vmatprep.subr.mxu0 0.0
        %1144 = vmatpush2.xpose.msra.mxu0 0.0
        %1145 = vmatprep.subr.mxu0 0.0
        %1146 = vmatpush2.xpose.msra.mxu0 0.0
        %1147 = vmatprep.subr.mxu0 0.0
        %1148 = vmatpush2.xpose.msra.mxu0 0.0
        %1149 = vmatprep.subr.mxu0 0.0
        %1150 = vmatpush2.xpose.msra.mxu0 0.0
        %1151 = vmatprep.mubr.f32.mxu0 0.0
        %1152 = vmatmul.mubr.f32.gmra.mxu0 %v1083
        %v1153 = vpop.f32.mrf.mxu0
        %v1154 = vadd.f32 0.0, %v1153
        %v1155 = vpop.f32.mrf.mxu0
        %1156 = vdwg.mxu0
        %1158 = vrot.lane.b32.xlu0 %v1053, 96
        %v1159 = vpop.permute.xlu0 %1158
        %v1161 = vsel %vm1081, %v1066, 0
        %v1163 = vsel %vm1081, %v1159, 0
        %1165 = vmatprep.subr.mxu0 0.0
        %1166 = vmatpush1.xpose.msra.mxu0 0.0
        %1167 = vmatprep.subr.mxu0 0.0
        %1168 = vmatpush1.xpose.msra.mxu0 0.0
        %1169 = vmatprep.subr.mxu0 0.0
        %1170 = vmatpush1.xpose.msra.mxu0 0.0
        %1171 = vmatprep.subr.mxu0 0.0
        %1172 = vmatpush1.xpose.msra.mxu0 0.0
        %1173 = vmatprep.subr.mxu0 0.0
        %1174 = vmatpush1.xpose.msra.mxu0 0.0
        %1175 = vmatprep.subr.mxu0 0.0
        %1176 = vmatpush1.xpose.msra.mxu0 0.0
        %1177 = vmatprep.subr.mxu0 0.0
        %1178 = vmatpush1.xpose.msra.mxu0 0.0
        %1179 = vmatprep.subr.mxu0 0.0
        %1180 = vmatpush1.xpose.msra.mxu0 0.0
        %1181 = vmatprep.subr.mxu0 0.0
        %1182 = vmatpush1.xpose.msra.mxu0 0.0
        %1183 = vmatprep.subr.mxu0 0.0
        %1184 = vmatpush1.xpose.msra.mxu0 0.0
        %1185 = vmatprep.subr.mxu0 0.0
        %1186 = vmatpush1.xpose.msra.mxu0 0.0
        %1187 = vmatprep.subr.mxu0 0.0
        %1188 = vmatpush1.xpose.msra.mxu0 0.0
        %1189 = vmatprep.subr.mxu0 0.0
        %1190 = vmatpush1.xpose.msra.mxu0 0.0
        %1191 = vmatprep.subr.mxu0 0.0
        %1192 = vmatpush1.xpose.msra.mxu0 0.0
        %1193 = vmatprep.subr.mxu0 0.0
        %1194 = vmatpush1.xpose.msra.mxu0 0.0
        %1195 = vmatprep.subr.mxu0 0.0
        %1196 = vmatpush1.xpose.msra.mxu0 %v1163
        %1197 = vmatprep.subr.mxu0 0.0
        %1198 = vmatpush2.xpose.msra.mxu0 0.0
        %1199 = vmatprep.subr.mxu0 0.0
        %1200 = vmatpush2.xpose.msra.mxu0 0.0
        %1201 = vmatprep.subr.mxu0 0.0
        %1202 = vmatpush2.xpose.msra.mxu0 0.0
        %1203 = vmatprep.subr.mxu0 0.0
        %1204 = vmatpush2.xpose.msra.mxu0 0.0
        %1205 = vmatprep.subr.mxu0 0.0
        %1206 = vmatpush2.xpose.msra.mxu0 0.0
        %1207 = vmatprep.subr.mxu0 0.0
        %1208 = vmatpush2.xpose.msra.mxu0 0.0
        %1209 = vmatprep.subr.mxu0 0.0
        %1210 = vmatpush2.xpose.msra.mxu0 0.0
        %1211 = vmatprep.subr.mxu0 0.0
        %1212 = vmatpush2.xpose.msra.mxu0 0.0
        %1213 = vmatprep.subr.mxu0 0.0
        %1214 = vmatpush2.xpose.msra.mxu0 0.0
        %1215 = vmatprep.subr.mxu0 0.0
        %1216 = vmatpush2.xpose.msra.mxu0 0.0
        %1217 = vmatprep.subr.mxu0 0.0
        %1218 = vmatpush2.xpose.msra.mxu0 0.0
        %1219 = vmatprep.subr.mxu0 0.0
        %1220 = vmatpush2.xpose.msra.mxu0 0.0
        %1221 = vmatprep.subr.mxu0 0.0
        %1222 = vmatpush2.xpose.msra.mxu0 0.0
        %1223 = vmatprep.subr.mxu0 0.0
        %1224 = vmatpush2.xpose.msra.mxu0 0.0
        %1225 = vmatprep.subr.mxu0 0.0
        %1226 = vmatpush2.xpose.msra.mxu0 0.0
        %1227 = vmatprep.subr.mxu0 0.0
        %1228 = vmatpush2.xpose.msra.mxu0 0.0
        %1229 = vmatprep.mubr.f32.mxu0 0.0
        %1230 = vmatmul.mubr.f32.gmra.mxu0 %v1161
        %v1231 = vpop.f32.mrf.mxu0
        %v1232 = vadd.f32 0.0, %v1231
        %v1233 = vpop.f32.mrf.mxu0
        %1234 = vdwg.mxu0
        %v1235 = vsel %vm1081, %v1154, -inf
        %1236 = vmax.xlane.f32.xlu0 %v1235
        %v1237 = vpop.xlane.xlu0 %1236
        %v1238 = vsel %vm1081, %v1232, -inf
        %1239 = vmax.xlane.f32.xlu0 %v1238
        %v1240 = vpop.xlane.xlu0 %1239
        %v1241 = vsub.f32 %v1154, %v1237
        %v1242 = vsub.f32 %v1232, %v1240
        %v1243 = vmul.f32 %v1241, 1.442695
        %v1244 = vpow.pop %v1243
        %v1245 = vmul.f32 %v1242, 1.442695
        %v1246 = vpow.pop %v1245
        %v1247 = vsel %vm1081, %v1244, 0.0
        %1248 = vadd.xlane.f32.xlu0 %v1247
        %v1249 = vpop.xlane.xlu0 %1248
        %v1250 = vsel %vm1081, %v1246, 0.0
        %1251 = vadd.xlane.f32.xlu0 %v1250
        %v1252 = vpop.xlane.xlu0 %1251
        %v1253 = vrcp.pop %v1249
        %v1254 = vrcp.pop %v1252
        %v1255 = vmul.f32 %v1244, %v1253
        %v1256 = vmul.f32 %v1246, %v1254
        %1258 = vrot.lane.b32.xlu0 %v1076, 64
        %v1259 = vpop.permute.xlu0 %1258
        %v1262 = vsel %vm1081, %v1255, 0
        %1264 = vmatprep.subr.mxu0 0.0
        %1265 = vmatpush1.msra.mxu0 0.0
        %1266 = vmatprep.subr.mxu0 0.0
        %1267 = vmatpush1.msra.mxu0 0.0
        %1268 = vmatprep.subr.mxu0 0.0
        %1269 = vmatpush1.msra.mxu0 0.0
        %1270 = vmatprep.subr.mxu0 0.0
        %1271 = vmatpush1.msra.mxu0 0.0
        %1272 = vmatprep.subr.mxu0 0.0
        %1273 = vmatpush1.msra.mxu0 0.0
        %1274 = vmatprep.subr.mxu0 0.0
        %1275 = vmatpush1.msra.mxu0 0.0
        %1276 = vmatprep.subr.mxu0 0.0
        %1277 = vmatpush1.msra.mxu0 0.0
        %1278 = vmatprep.subr.mxu0 0.0
        %1279 = vmatpush1.msra.mxu0 0.0
        %1280 = vmatprep.subr.mxu0 0.0
        %1281 = vmatpush1.msra.mxu0 0.0
        %1282 = vmatprep.subr.mxu0 0.0
        %1283 = vmatpush1.msra.mxu0 0.0
        %1284 = vmatprep.subr.mxu0 0.0
        %1285 = vmatpush1.msra.mxu0 0.0
        %1286 = vmatprep.subr.mxu0 0.0
        %1287 = vmatpush1.msra.mxu0 0.0
        %1288 = vmatprep.subr.mxu0 0.0
        %1289 = vmatpush1.msra.mxu0 0.0
        %1290 = vmatprep.subr.mxu0 0.0
        %1291 = vmatpush1.msra.mxu0 0.0
        %1292 = vmatprep.subr.mxu0 0.0
        %1293 = vmatpush1.msra.mxu0 0.0
        %1294 = vmatprep.subr.mxu0 0.0
        %1295 = vmatpush1.msra.mxu0 %v1259
        %1296 = vmatprep.subr.mxu0 0.0
        %1297 = vmatpush2.msra.mxu0 0.0
        %1298 = vmatprep.subr.mxu0 0.0
        %1299 = vmatpush2.msra.mxu0 0.0
        %1300 = vmatprep.subr.mxu0 0.0
        %1301 = vmatpush2.msra.mxu0 0.0
        %1302 = vmatprep.subr.mxu0 0.0
        %1303 = vmatpush2.msra.mxu0 0.0
        %1304 = vmatprep.subr.mxu0 0.0
        %1305 = vmatpush2.msra.mxu0 0.0
        %1306 = vmatprep.subr.mxu0 0.0
        %1307 = vmatpush2.msra.mxu0 0.0
        %1308 = vmatprep.subr.mxu0 0.0
        %1309 = vmatpush2.msra.mxu0 0.0
        %1310 = vmatprep.subr.mxu0 0.0
        %1311 = vmatpush2.msra.mxu0 0.0
        %1312 = vmatprep.subr.mxu0 0.0
        %1313 = vmatpush2.msra.mxu0 0.0
        %1314 = vmatprep.subr.mxu0 0.0
        %1315 = vmatpush2.msra.mxu0 0.0
        %1316 = vmatprep.subr.mxu0 0.0
        %1317 = vmatpush2.msra.mxu0 0.0
        %1318 = vmatprep.subr.mxu0 0.0
        %1319 = vmatpush2.msra.mxu0 0.0
        %1320 = vmatprep.subr.mxu0 0.0
        %1321 = vmatpush2.msra.mxu0 0.0
        %1322 = vmatprep.subr.mxu0 0.0
        %1323 = vmatpush2.msra.mxu0 0.0
        %1324 = vmatprep.subr.mxu0 0.0
        %1325 = vmatpush2.msra.mxu0 0.0
        %1326 = vmatprep.subr.mxu0 0.0
        %1327 = vmatpush2.msra.mxu0 0.0
        %1328 = vmatprep.mubr.f32.mxu0 0.0
        %1329 = vmatmul.mubr.f32.gmra.mxu0 %v1262
        %v1330 = vpop.f32.mrf.mxu0
        %v1331 = vadd.f32 0.0, %v1330
        %v1332 = vpop.f32.mrf.mxu0
        %1333 = vdwg.mxu0
        %1335 = vrot.lane.b32.xlu0 %v1077, 64
        %v1336 = vpop.permute.xlu0 %1335
        %v1339 = vsel %vm1081, %v1256, 0
        %1341 = vmatprep.subr.mxu0 0.0
        %1342 = vmatpush1.msra.mxu0 0.0
        %1343 = vmatprep.subr.mxu0 0.0
        %1344 = vmatpush1.msra.mxu0 0.0
        %1345 = vmatprep.subr.mxu0 0.0
        %1346 = vmatpush1.msra.mxu0 0.0
        %1347 = vmatprep.subr.mxu0 0.0
        %1348 = vmatpush1.msra.mxu0 0.0
        %1349 = vmatprep.subr.mxu0 0.0
        %1350 = vmatpush1.msra.mxu0 0.0
        %1351 = vmatprep.subr.mxu0 0.0
        %1352 = vmatpush1.msra.mxu0 0.0
        %1353 = vmatprep.subr.mxu0 0.0
        %1354 = vmatpush1.msra.mxu0 0.0
        %1355 = vmatprep.subr.mxu0 0.0
        %1356 = vmatpush1.msra.mxu0 0.0
        %1357 = vmatprep.subr.mxu0 0.0
        %1358 = vmatpush1.msra.mxu0 0.0
        %1359 = vmatprep.subr.mxu0 0.0
        %1360 = vmatpush1.msra.mxu0 0.0
        %1361 = vmatprep.subr.mxu0 0.0
        %1362 = vmatpush1.msra.mxu0 0.0
        %1363 = vmatprep.subr.mxu0 0.0
        %1364 = vmatpush1.msra.mxu0 0.0
        %1365 = vmatprep.subr.mxu0 0.0
        %1366 = vmatpush1.msra.mxu0 0.0
        %1367 = vmatprep.subr.mxu0 0.0
        %1368 = vmatpush1.msra.mxu0 0.0
        %1369 = vmatprep.subr.mxu0 0.0
        %1370 = vmatpush1.msra.mxu0 0.0
        %1371 = vmatprep.subr.mxu0 0.0
        %1372 = vmatpush1.msra.mxu0 %v1336
        %1373 = vmatprep.subr.mxu0 0.0
        %1374 = vmatpush2.msra.mxu0 0.0
        %1375 = vmatprep.subr.mxu0 0.0
        %1376 = vmatpush2.msra.mxu0 0.0
        %1377 = vmatprep.subr.mxu0 0.0
        %1378 = vmatpush2.msra.mxu0 0.0
        %1379 = vmatprep.subr.mxu0 0.0
        %1380 = vmatpush2.msra.mxu0 0.0
        %1381 = vmatprep.subr.mxu0 0.0
        %1382 = vmatpush2.msra.mxu0 0.0
        %1383 = vmatprep.subr.mxu0 0.0
        %1384 = vmatpush2.msra.mxu0 0.0
        %1385 = vmatprep.subr.mxu0 0.0
        %1386 = vmatpush2.msra.mxu0 0.0
        %1387 = vmatprep.subr.mxu0 0.0
        %1388 = vmatpush2.msra.mxu0 0.0
        %1389 = vmatprep.subr.mxu0 0.0
        %1390 = vmatpush2.msra.mxu0 0.0
        %1391 = vmatprep.subr.mxu0 0.0
        %1392 = vmatpush2.msra.mxu0 0.0
        %1393 = vmatprep.subr.mxu0 0.0
        %1394 = vmatpush2.msra.mxu0 0.0
        %1395 = vmatprep.subr.mxu0 0.0
        %1396 = vmatpush2.msra.mxu0 0.0
        %1397 = vmatprep.subr.mxu0 0.0
        %1398 = vmatpush2.msra.mxu0 0.0
        %1399 = vmatprep.subr.mxu0 0.0
        %1400 = vmatpush2.msra.mxu0 0.0
        %1401 = vmatprep.subr.mxu0 0.0
        %1402 = vmatpush2.msra.mxu0 0.0
        %1403 = vmatprep.subr.mxu0 0.0
        %1404 = vmatpush2.msra.mxu0 0.0
        %1405 = vmatprep.mubr.f32.mxu0 0.0
        %1406 = vmatmul.mubr.f32.gmra.mxu0 %v1339
        %v1407 = vpop.f32.mrf.mxu0
        %v1408 = vadd.f32 0.0, %v1407
        %v1409 = vpop.f32.mrf.mxu0
        %1410 = vdwg.mxu0
        %1411 = vrot.lane.b32.xlu0 %v1065, 120
        %v1412 = vpop.permute.xlu0 %1411
        %1413 = vrot.lane.b32.xlu0 %v1048, 88
        %v1414 = vpop.permute.xlu0 %1413
        %v1415 = vsel %vm1081, %v1412, 0
        %v1417 = vsel %vm1081, %v1414, 0
        %1419 = vmatprep.subr.mxu0 0.0
        %1420 = vmatpush1.xpose.msra.mxu0 0.0
        %1421 = vmatprep.subr.mxu0 0.0
        %1422 = vmatpush1.xpose.msra.mxu0 0.0
        %1423 = vmatprep.subr.mxu0 0.0
        %1424 = vmatpush1.xpose.msra.mxu0 0.0
        %1425 = vmatprep.subr.mxu0 0.0
        %1426 = vmatpush1.xpose.msra.mxu0 0.0
        %1427 = vmatprep.subr.mxu0 0.0
        %1428 = vmatpush1.xpose.msra.mxu0 0.0
        %1429 = vmatprep.subr.mxu0 0.0
        %1430 = vmatpush1.xpose.msra.mxu0 0.0
        %1431 = vmatprep.subr.mxu0 0.0
        %1432 = vmatpush1.xpose.msra.mxu0 0.0
        %1433 = vmatprep.subr.mxu0 0.0
        %1434 = vmatpush1.xpose.msra.mxu0 0.0
        %1435 = vmatprep.subr.mxu0 0.0
        %1436 = vmatpush1.xpose.msra.mxu0 0.0
        %1437 = vmatprep.subr.mxu0 0.0
        %1438 = vmatpush1.xpose.msra.mxu0 0.0
        %1439 = vmatprep.subr.mxu0 0.0
        %1440 = vmatpush1.xpose.msra.mxu0 0.0
        %1441 = vmatprep.subr.mxu0 0.0
        %1442 = vmatpush1.xpose.msra.mxu0 0.0
        %1443 = vmatprep.subr.mxu0 0.0
        %1444 = vmatpush1.xpose.msra.mxu0 0.0
        %1445 = vmatprep.subr.mxu0 0.0
        %1446 = vmatpush1.xpose.msra.mxu0 0.0
        %1447 = vmatprep.subr.mxu0 0.0
        %1448 = vmatpush1.xpose.msra.mxu0 0.0
        %1449 = vmatprep.subr.mxu0 0.0
        %1450 = vmatpush1.xpose.msra.mxu0 %v1417
        %1451 = vmatprep.subr.mxu0 0.0
        %1452 = vmatpush2.xpose.msra.mxu0 0.0
        %1453 = vmatprep.subr.mxu0 0.0
        %1454 = vmatpush2.xpose.msra.mxu0 0.0
        %1455 = vmatprep.subr.mxu0 0.0
        %1456 = vmatpush2.xpose.msra.mxu0 0.0
        %1457 = vmatprep.subr.mxu0 0.0
        %1458 = vmatpush2.xpose.msra.mxu0 0.0
        %1459 = vmatprep.subr.mxu0 0.0
        %1460 = vmatpush2.xpose.msra.mxu0 0.0
        %1461 = vmatprep.subr.mxu0 0.0
        %1462 = vmatpush2.xpose.msra.mxu0 0.0
        %1463 = vmatprep.subr.mxu0 0.0
        %1464 = vmatpush2.xpose.msra.mxu0 0.0
        %1465 = vmatprep.subr.mxu0 0.0
        %1466 = vmatpush2.xpose.msra.mxu0 0.0
        %1467 = vmatprep.subr.mxu0 0.0
        %1468 = vmatpush2.xpose.msra.mxu0 0.0
        %1469 = vmatprep.subr.mxu0 0.0
        %1470 = vmatpush2.xpose.msra.mxu0 0.0
        %1471 = vmatprep.subr.mxu0 0.0
        %1472 = vmatpush2.xpose.msra.mxu0 0.0
        %1473 = vmatprep.subr.mxu0 0.0
        %1474 = vmatpush2.xpose.msra.mxu0 0.0
        %1475 = vmatprep.subr.mxu0 0.0
        %1476 = vmatpush2.xpose.msra.mxu0 0.0
        %1477 = vmatprep.subr.mxu0 0.0
        %1478 = vmatpush2.xpose.msra.mxu0 0.0
        %1479 = vmatprep.subr.mxu0 0.0
        %1480 = vmatpush2.xpose.msra.mxu0 0.0
        %1481 = vmatprep.subr.mxu0 0.0
        %1482 = vmatpush2.xpose.msra.mxu0 0.0
        %1483 = vmatprep.mubr.f32.mxu0 0.0
        %1484 = vmatmul.mubr.f32.gmra.mxu0 %v1415
        %v1485 = vpop.f32.mrf.mxu0
        %v1486 = vadd.f32 0.0, %v1485
        %v1487 = vpop.f32.mrf.mxu0
        %1488 = vdwg.mxu0
        %1489 = vrot.lane.b32.xlu0 %v1066, 120
        %v1490 = vpop.permute.xlu0 %1489
        %1491 = vrot.lane.b32.xlu0 %v1053, 88
        %v1492 = vpop.permute.xlu0 %1491
        %v1493 = vsel %vm1081, %v1490, 0
        %v1495 = vsel %vm1081, %v1492, 0
        %1497 = vmatprep.subr.mxu0 0.0
        %1498 = vmatpush1.xpose.msra.mxu0 0.0
        %1499 = vmatprep.subr.mxu0 0.0
        %1500 = vmatpush1.xpose.msra.mxu0 0.0
        %1501 = vmatprep.subr.mxu0 0.0
        %1502 = vmatpush1.xpose.msra.mxu0 0.0
        %1503 = vmatprep.subr.mxu0 0.0
        %1504 = vmatpush1.xpose.msra.mxu0 0.0
        %1505 = vmatprep.subr.mxu0 0.0
        %1506 = vmatpush1.xpose.msra.mxu0 0.0
        %1507 = vmatprep.subr.mxu0 0.0
        %1508 = vmatpush1.xpose.msra.mxu0 0.0
        %1509 = vmatprep.subr.mxu0 0.0
        %1510 = vmatpush1.xpose.msra.mxu0 0.0
        %1511 = vmatprep.subr.mxu0 0.0
        %1512 = vmatpush1.xpose.msra.mxu0 0.0
        %1513 = vmatprep.subr.mxu0 0.0
        %1514 = vmatpush1.xpose.msra.mxu0 0.0
        %1515 = vmatprep.subr.mxu0 0.0
        %1516 = vmatpush1.xpose.msra.mxu0 0.0
        %1517 = vmatprep.subr.mxu0 0.0
        %1518 = vmatpush1.xpose.msra.mxu0 0.0
        %1519 = vmatprep.subr.mxu0 0.0
        %1520 = vmatpush1.xpose.msra.mxu0 0.0
        %1521 = vmatprep.subr.mxu0 0.0
        %1522 = vmatpush1.xpose.msra.mxu0 0.0
        %1523 = vmatprep.subr.mxu0 0.0
        %1524 = vmatpush1.xpose.msra.mxu0 0.0
        %1525 = vmatprep.subr.mxu0 0.0
        %1526 = vmatpush1.xpose.msra.mxu0 0.0
        %1527 = vmatprep.subr.mxu0 0.0
        %1528 = vmatpush1.xpose.msra.mxu0 %v1495
        %1529 = vmatprep.subr.mxu0 0.0
        %1530 = vmatpush2.xpose.msra.mxu0 0.0
        %1531 = vmatprep.subr.mxu0 0.0
        %1532 = vmatpush2.xpose.msra.mxu0 0.0
        %1533 = vmatprep.subr.mxu0 0.0
        %1534 = vmatpush2.xpose.msra.mxu0 0.0
        %1535 = vmatprep.subr.mxu0 0.0
        %1536 = vmatpush2.xpose.msra.mxu0 0.0
        %1537 = vmatprep.subr.mxu0 0.0
        %1538 = vmatpush2.xpose.msra.mxu0 0.0
        %1539 = vmatprep.subr.mxu0 0.0
        %1540 = vmatpush2.xpose.msra.mxu0 0.0
        %1541 = vmatprep.subr.mxu0 0.0
        %1542 = vmatpush2.xpose.msra.mxu0 0.0
        %1543 = vmatprep.subr.mxu0 0.0
        %1544 = vmatpush2.xpose.msra.mxu0 0.0
        %1545 = vmatprep.subr.mxu0 0.0
        %1546 = vmatpush2.xpose.msra.mxu0 0.0
        %1547 = vmatprep.subr.mxu0 0.0
        %1548 = vmatpush2.xpose.msra.mxu0 0.0
        %1549 = vmatprep.subr.mxu0 0.0
        %1550 = vmatpush2.xpose.msra.mxu0 0.0
        %1551 = vmatprep.subr.mxu0 0.0
        %1552 = vmatpush2.xpose.msra.mxu0 0.0
        %1553 = vmatprep.subr.mxu0 0.0
        %1554 = vmatpush2.xpose.msra.mxu0 0.0
        %1555 = vmatprep.subr.mxu0 0.0
        %1556 = vmatpush2.xpose.msra.mxu0 0.0
        %1557 = vmatprep.subr.mxu0 0.0
        %1558 = vmatpush2.xpose.msra.mxu0 0.0
        %1559 = vmatprep.subr.mxu0 0.0
        %1560 = vmatpush2.xpose.msra.mxu0 0.0
        %1561 = vmatprep.mubr.f32.mxu0 0.0
        %1562 = vmatmul.mubr.f32.gmra.mxu0 %v1493
        %v1563 = vpop.f32.mrf.mxu0
        %v1564 = vadd.f32 0.0, %v1563
        %v1565 = vpop.f32.mrf.mxu0
        %1566 = vdwg.mxu0
        %v1567 = vsel %vm1081, %v1486, -inf
        %1568 = vmax.xlane.f32.xlu0 %v1567
        %v1569 = vpop.xlane.xlu0 %1568
        %v1570 = vsel %vm1081, %v1564, -inf
        %1571 = vmax.xlane.f32.xlu0 %v1570
        %v1572 = vpop.xlane.xlu0 %1571
        %v1573 = vsub.f32 %v1486, %v1569
        %v1574 = vsub.f32 %v1564, %v1572
        %v1575 = vmul.f32 %v1573, 1.442695
        %v1576 = vpow.pop %v1575
        %v1577 = vmul.f32 %v1574, 1.442695
        %v1578 = vpow.pop %v1577
        %v1579 = vsel %vm1081, %v1576, 0.0
        %1580 = vadd.xlane.f32.xlu0 %v1579
        %v1581 = vpop.xlane.xlu0 %1580
        %v1582 = vsel %vm1081, %v1578, 0.0
        %1583 = vadd.xlane.f32.xlu0 %v1582
        %v1584 = vpop.xlane.xlu0 %1583
        %v1585 = vrcp.pop %v1581
        %v1586 = vrcp.pop %v1584
        %v1587 = vmul.f32 %v1576, %v1585
        %v1588 = vmul.f32 %v1578, %v1586
        %1589 = vrot.lane.b32.xlu0 %v1076, 56
        %v1590 = vpop.permute.xlu0 %1589
        %v1593 = vsel %vm1081, %v1587, 0
        %1595 = vmatprep.subr.mxu0 0.0
        %1596 = vmatpush1.msra.mxu0 0.0
        %1597 = vmatprep.subr.mxu0 0.0
        %1598 = vmatpush1.msra.mxu0 0.0
        %1599 = vmatprep.subr.mxu0 0.0
        %1600 = vmatpush1.msra.mxu0 0.0
        %1601 = vmatprep.subr.mxu0 0.0
        %1602 = vmatpush1.msra.mxu0 0.0
        %1603 = vmatprep.subr.mxu0 0.0
        %1604 = vmatpush1.msra.mxu0 0.0
        %1605 = vmatprep.subr.mxu0 0.0
        %1606 = vmatpush1.msra.mxu0 0.0
        %1607 = vmatprep.subr.mxu0 0.0
        %1608 = vmatpush1.msra.mxu0 0.0
        %1609 = vmatprep.subr.mxu0 0.0
        %1610 = vmatpush1.msra.mxu0 0.0
        %1611 = vmatprep.subr.mxu0 0.0
        %1612 = vmatpush1.msra.mxu0 0.0
        %1613 = vmatprep.subr.mxu0 0.0
        %1614 = vmatpush1.msra.mxu0 0.0
        %1615 = vmatprep.subr.mxu0 0.0
        %1616 = vmatpush1.msra.mxu0 0.0
        %1617 = vmatprep.subr.mxu0 0.0
        %1618 = vmatpush1.msra.mxu0 0.0
        %1619 = vmatprep.subr.mxu0 0.0
        %1620 = vmatpush1.msra.mxu0 0.0
        %1621 = vmatprep.subr.mxu0 0.0
        %1622 = vmatpush1.msra.mxu0 0.0
        %1623 = vmatprep.subr.mxu0 0.0
        %1624 = vmatpush1.msra.mxu0 0.0
        %1625 = vmatprep.subr.mxu0 0.0
        %1626 = vmatpush1.msra.mxu0 %v1590
        %1627 = vmatprep.subr.mxu0 0.0
        %1628 = vmatpush2.msra.mxu0 0.0
        %1629 = vmatprep.subr.mxu0 0.0
        %1630 = vmatpush2.msra.mxu0 0.0
        %1631 = vmatprep.subr.mxu0 0.0
        %1632 = vmatpush2.msra.mxu0 0.0
        %1633 = vmatprep.subr.mxu0 0.0
        %1634 = vmatpush2.msra.mxu0 0.0
        %1635 = vmatprep.subr.mxu0 0.0
        %1636 = vmatpush2.msra.mxu0 0.0
        %1637 = vmatprep.subr.mxu0 0.0
        %1638 = vmatpush2.msra.mxu0 0.0
        %1639 = vmatprep.subr.mxu0 0.0
        %1640 = vmatpush2.msra.mxu0 0.0
        %1641 = vmatprep.subr.mxu0 0.0
        %1642 = vmatpush2.msra.mxu0 0.0
        %1643 = vmatprep.subr.mxu0 0.0
        %1644 = vmatpush2.msra.mxu0 0.0
        %1645 = vmatprep.subr.mxu0 0.0
        %1646 = vmatpush2.msra.mxu0 0.0
        %1647 = vmatprep.subr.mxu0 0.0
        %1648 = vmatpush2.msra.mxu0 0.0
        %1649 = vmatprep.subr.mxu0 0.0
        %1650 = vmatpush2.msra.mxu0 0.0
        %1651 = vmatprep.subr.mxu0 0.0
        %1652 = vmatpush2.msra.mxu0 0.0
        %1653 = vmatprep.subr.mxu0 0.0
        %1654 = vmatpush2.msra.mxu0 0.0
        %1655 = vmatprep.subr.mxu0 0.0
        %1656 = vmatpush2.msra.mxu0 0.0
        %1657 = vmatprep.subr.mxu0 0.0
        %1658 = vmatpush2.msra.mxu0 0.0
        %1659 = vmatprep.mubr.f32.mxu0 0.0
        %1660 = vmatmul.mubr.f32.gmra.mxu0 %v1593
        %v1661 = vpop.f32.mrf.mxu0
        %v1662 = vadd.f32 0.0, %v1661
        %v1663 = vpop.f32.mrf.mxu0
        %1664 = vdwg.mxu0
        %1665 = vrot.lane.b32.xlu0 %v1077, 56
        %v1666 = vpop.permute.xlu0 %1665
        %v1669 = vsel %vm1081, %v1588, 0
        %1671 = vmatprep.subr.mxu0 0.0
        %1672 = vmatpush1.msra.mxu0 0.0
        %1673 = vmatprep.subr.mxu0 0.0
        %1674 = vmatpush1.msra.mxu0 0.0
        %1675 = vmatprep.subr.mxu0 0.0
        %1676 = vmatpush1.msra.mxu0 0.0
        %1677 = vmatprep.subr.mxu0 0.0
        %1678 = vmatpush1.msra.mxu0 0.0
        %1679 = vmatprep.subr.mxu0 0.0
        %1680 = vmatpush1.msra.mxu0 0.0
        %1681 = vmatprep.subr.mxu0 0.0
        %1682 = vmatpush1.msra.mxu0 0.0
        %1683 = vmatprep.subr.mxu0 0.0
        %1684 = vmatpush1.msra.mxu0 0.0
        %1685 = vmatprep.subr.mxu0 0.0
        %1686 = vmatpush1.msra.mxu0 0.0
        %1687 = vmatprep.subr.mxu0 0.0
        %1688 = vmatpush1.msra.mxu0 0.0
        %1689 = vmatprep.subr.mxu0 0.0
        %1690 = vmatpush1.msra.mxu0 0.0
        %1691 = vmatprep.subr.mxu0 0.0
        %1692 = vmatpush1.msra.mxu0 0.0
        %1693 = vmatprep.subr.mxu0 0.0
        %1694 = vmatpush1.msra.mxu0 0.0
        %1695 = vmatprep.subr.mxu0 0.0
        %1696 = vmatpush1.msra.mxu0 0.0
        %1697 = vmatprep.subr.mxu0 0.0
        %1698 = vmatpush1.msra.mxu0 0.0
        %1699 = vmatprep.subr.mxu0 0.0
        %1700 = vmatpush1.msra.mxu0 0.0
        %1701 = vmatprep.subr.mxu0 0.0
        %1702 = vmatpush1.msra.mxu0 %v1666
        %1703 = vmatprep.subr.mxu0 0.0
        %1704 = vmatpush2.msra.mxu0 0.0
        %1705 = vmatprep.subr.mxu0 0.0
        %1706 = vmatpush2.msra.mxu0 0.0
        %1707 = vmatprep.subr.mxu0 0.0
        %1708 = vmatpush2.msra.mxu0 0.0
        %1709 = vmatprep.subr.mxu0 0.0
        %1710 = vmatpush2.msra.mxu0 0.0
        %1711 = vmatprep.subr.mxu0 0.0
        %1712 = vmatpush2.msra.mxu0 0.0
        %1713 = vmatprep.subr.mxu0 0.0
        %1714 = vmatpush2.msra.mxu0 0.0
        %1715 = vmatprep.subr.mxu0 0.0
        %1716 = vmatpush2.msra.mxu0 0.0
        %1717 = vmatprep.subr.mxu0 0.0
        %1718 = vmatpush2.msra.mxu0 0.0
        %1719 = vmatprep.subr.mxu0 0.0
        %1720 = vmatpush2.msra.mxu0 0.0
        %1721 = vmatprep.subr.mxu0 0.0
        %1722 = vmatpush2.msra.mxu0 0.0
        %1723 = vmatprep.subr.mxu0 0.0
        %1724 = vmatpush2.msra.mxu0 0.0
        %1725 = vmatprep.subr.mxu0 0.0
        %1726 = vmatpush2.msra.mxu0 0.0
        %1727 = vmatprep.subr.mxu0 0.0
        %1728 = vmatpush2.msra.mxu0 0.0
        %1729 = vmatprep.subr.mxu0 0.0
        %1730 = vmatpush2.msra.mxu0 0.0
        %1731 = vmatprep.subr.mxu0 0.0
        %1732 = vmatpush2.msra.mxu0 0.0
        %1733 = vmatprep.subr.mxu0 0.0
        %1734 = vmatpush2.msra.mxu0 0.0
        %1735 = vmatprep.mubr.f32.mxu0 0.0
        %1736 = vmatmul.mubr.f32.gmra.mxu0 %v1669
        %v1737 = vpop.f32.mrf.mxu0
        %v1738 = vadd.f32 0.0, %v1737
        %v1739 = vpop.f32.mrf.mxu0
        %1740 = vdwg.mxu0
        %1741 = vrot.lane.b32.xlu0 %v1065, 112
        %v1742 = vpop.permute.xlu0 %1741
        %1743 = vrot.lane.b32.xlu0 %v1048, 80
        %v1744 = vpop.permute.xlu0 %1743
        %v1745 = vsel %vm1081, %v1742, 0
        %v1747 = vsel %vm1081, %v1744, 0
        %1749 = vmatprep.subr.mxu0 0.0
        %1750 = vmatpush1.xpose.msra.mxu0 0.0
        %1751 = vmatprep.subr.mxu0 0.0
        %1752 = vmatpush1.xpose.msra.mxu0 0.0
        %1753 = vmatprep.subr.mxu0 0.0
        %1754 = vmatpush1.xpose.msra.mxu0 0.0
        %1755 = vmatprep.subr.mxu0 0.0
        %1756 = vmatpush1.xpose.msra.mxu0 0.0
        %1757 = vmatprep.subr.mxu0 0.0
        %1758 = vmatpush1.xpose.msra.mxu0 0.0
        %1759 = vmatprep.subr.mxu0 0.0
        %1760 = vmatpush1.xpose.msra.mxu0 0.0
        %1761 = vmatprep.subr.mxu0 0.0
        %1762 = vmatpush1.xpose.msra.mxu0 0.0
        %1763 = vmatprep.subr.mxu0 0.0
        %1764 = vmatpush1.xpose.msra.mxu0 0.0
        %1765 = vmatprep.subr.mxu0 0.0
        %1766 = vmatpush1.xpose.msra.mxu0 0.0
        %1767 = vmatprep.subr.mxu0 0.0
        %1768 = vmatpush1.xpose.msra.mxu0 0.0
        %1769 = vmatprep.subr.mxu0 0.0
        %1770 = vmatpush1.xpose.msra.mxu0 0.0
        %1771 = vmatprep.subr.mxu0 0.0
        %1772 = vmatpush1.xpose.msra.mxu0 0.0
        %1773 = vmatprep.subr.mxu0 0.0
        %1774 = vmatpush1.xpose.msra.mxu0 0.0
        %1775 = vmatprep.subr.mxu0 0.0
        %1776 = vmatpush1.xpose.msra.mxu0 0.0
        %1777 = vmatprep.subr.mxu0 0.0
        %1778 = vmatpush1.xpose.msra.mxu0 0.0
        %1779 = vmatprep.subr.mxu0 0.0
        %1780 = vmatpush1.xpose.msra.mxu0 %v1747
        %1781 = vmatprep.subr.mxu0 0.0
        %1782 = vmatpush2.xpose.msra.mxu0 0.0
        %1783 = vmatprep.subr.mxu0 0.0
        %1784 = vmatpush2.xpose.msra.mxu0 0.0
        %1785 = vmatprep.subr.mxu0 0.0
        %1786 = vmatpush2.xpose.msra.mxu0 0.0
        %1787 = vmatprep.subr.mxu0 0.0
        %1788 = vmatpush2.xpose.msra.mxu0 0.0
        %1789 = vmatprep.subr.mxu0 0.0
        %1790 = vmatpush2.xpose.msra.mxu0 0.0
        %1791 = vmatprep.subr.mxu0 0.0
        %1792 = vmatpush2.xpose.msra.mxu0 0.0
        %1793 = vmatprep.subr.mxu0 0.0
        %1794 = vmatpush2.xpose.msra.mxu0 0.0
        %1795 = vmatprep.subr.mxu0 0.0
        %1796 = vmatpush2.xpose.msra.mxu0 0.0
        %1797 = vmatprep.subr.mxu0 0.0
        %1798 = vmatpush2.xpose.msra.mxu0 0.0
        %1799 = vmatprep.subr.mxu0 0.0
        %1800 = vmatpush2.xpose.msra.mxu0 0.0
        %1801 = vmatprep.subr.mxu0 0.0
        %1802 = vmatpush2.xpose.msra.mxu0 0.0
        %1803 = vmatprep.subr.mxu0 0.0
        %1804 = vmatpush2.xpose.msra.mxu0 0.0
        %1805 = vmatprep.subr.mxu0 0.0
        %1806 = vmatpush2.xpose.msra.mxu0 0.0
        %1807 = vmatprep.subr.mxu0 0.0
        %1808 = vmatpush2.xpose.msra.mxu0 0.0
        %1809 = vmatprep.subr.mxu0 0.0
        %1810 = vmatpush2.xpose.msra.mxu0 0.0
        %1811 = vmatprep.subr.mxu0 0.0
        %1812 = vmatpush2.xpose.msra.mxu0 0.0
        %1813 = vmatprep.mubr.f32.mxu0 0.0
        %1814 = vmatmul.mubr.f32.gmra.mxu0 %v1745
        %v1815 = vpop.f32.mrf.mxu0
        %v1816 = vadd.f32 0.0, %v1815
        %v1817 = vpop.f32.mrf.mxu0
        %1818 = vdwg.mxu0
        %1819 = vrot.lane.b32.xlu0 %v1066, 112
        %v1820 = vpop.permute.xlu0 %1819
        %1821 = vrot.lane.b32.xlu0 %v1053, 80
        %v1822 = vpop.permute.xlu0 %1821
        %v1823 = vsel %vm1081, %v1820, 0
        %v1825 = vsel %vm1081, %v1822, 0
        %1827 = vmatprep.subr.mxu0 0.0
        %1828 = vmatpush1.xpose.msra.mxu0 0.0
        %1829 = vmatprep.subr.mxu0 0.0
        %1830 = vmatpush1.xpose.msra.mxu0 0.0
        %1831 = vmatprep.subr.mxu0 0.0
        %1832 = vmatpush1.xpose.msra.mxu0 0.0
        %1833 = vmatprep.subr.mxu0 0.0
        %1834 = vmatpush1.xpose.msra.mxu0 0.0
        %1835 = vmatprep.subr.mxu0 0.0
        %1836 = vmatpush1.xpose.msra.mxu0 0.0
        %1837 = vmatprep.subr.mxu0 0.0
        %1838 = vmatpush1.xpose.msra.mxu0 0.0
        %1839 = vmatprep.subr.mxu0 0.0
        %1840 = vmatpush1.xpose.msra.mxu0 0.0
        %1841 = vmatprep.subr.mxu0 0.0
        %1842 = vmatpush1.xpose.msra.mxu0 0.0
        %1843 = vmatprep.subr.mxu0 0.0
        %1844 = vmatpush1.xpose.msra.mxu0 0.0
        %1845 = vmatprep.subr.mxu0 0.0
        %1846 = vmatpush1.xpose.msra.mxu0 0.0
        %1847 = vmatprep.subr.mxu0 0.0
        %1848 = vmatpush1.xpose.msra.mxu0 0.0
        %1849 = vmatprep.subr.mxu0 0.0
        %1850 = vmatpush1.xpose.msra.mxu0 0.0
        %1851 = vmatprep.subr.mxu0 0.0
        %1852 = vmatpush1.xpose.msra.mxu0 0.0
        %1853 = vmatprep.subr.mxu0 0.0
        %1854 = vmatpush1.xpose.msra.mxu0 0.0
        %1855 = vmatprep.subr.mxu0 0.0
        %1856 = vmatpush1.xpose.msra.mxu0 0.0
        %1857 = vmatprep.subr.mxu0 0.0
        %1858 = vmatpush1.xpose.msra.mxu0 %v1825
        %1859 = vmatprep.subr.mxu0 0.0
        %1860 = vmatpush2.xpose.msra.mxu0 0.0
        %1861 = vmatprep.subr.mxu0 0.0
        %1862 = vmatpush2.xpose.msra.mxu0 0.0
        %1863 = vmatprep.subr.mxu0 0.0
        %1864 = vmatpush2.xpose.msra.mxu0 0.0
        %1865 = vmatprep.subr.mxu0 0.0
        %1866 = vmatpush2.xpose.msra.mxu0 0.0
        %1867 = vmatprep.subr.mxu0 0.0
        %1868 = vmatpush2.xpose.msra.mxu0 0.0
        %1869 = vmatprep.subr.mxu0 0.0
        %1870 = vmatpush2.xpose.msra.mxu0 0.0
        %1871 = vmatprep.subr.mxu0 0.0
        %1872 = vmatpush2.xpose.msra.mxu0 0.0
        %1873 = vmatprep.subr.mxu0 0.0
        %1874 = vmatpush2.xpose.msra.mxu0 0.0
        %1875 = vmatprep.subr.mxu0 0.0
        %1876 = vmatpush2.xpose.msra.mxu0 0.0
        %1877 = vmatprep.subr.mxu0 0.0
        %1878 = vmatpush2.xpose.msra.mxu0 0.0
        %1879 = vmatprep.subr.mxu0 0.0
        %1880 = vmatpush2.xpose.msra.mxu0 0.0
        %1881 = vmatprep.subr.mxu0 0.0
        %1882 = vmatpush2.xpose.msra.mxu0 0.0
        %1883 = vmatprep.subr.mxu0 0.0
        %1884 = vmatpush2.xpose.msra.mxu0 0.0
        %1885 = vmatprep.subr.mxu0 0.0
        %1886 = vmatpush2.xpose.msra.mxu0 0.0
        %1887 = vmatprep.subr.mxu0 0.0
        %1888 = vmatpush2.xpose.msra.mxu0 0.0
        %1889 = vmatprep.subr.mxu0 0.0
        %1890 = vmatpush2.xpose.msra.mxu0 0.0
        %1891 = vmatprep.mubr.f32.mxu0 0.0
        %1892 = vmatmul.mubr.f32.gmra.mxu0 %v1823
        %v1893 = vpop.f32.mrf.mxu0
        %v1894 = vadd.f32 0.0, %v1893
        %v1895 = vpop.f32.mrf.mxu0
        %1896 = vdwg.mxu0
        %v1897 = vsel %vm1081, %v1816, -inf
        %1898 = vmax.xlane.f32.xlu0 %v1897
        %v1899 = vpop.xlane.xlu0 %1898
        %v1900 = vsel %vm1081, %v1894, -inf
        %1901 = vmax.xlane.f32.xlu0 %v1900
        %v1902 = vpop.xlane.xlu0 %1901
        %v1903 = vsub.f32 %v1816, %v1899
        %v1904 = vsub.f32 %v1894, %v1902
        %v1905 = vmul.f32 %v1903, 1.442695
        %v1906 = vpow.pop %v1905
        %v1907 = vmul.f32 %v1904, 1.442695
        %v1908 = vpow.pop %v1907
        %v1909 = vsel %vm1081, %v1906, 0.0
        %1910 = vadd.xlane.f32.xlu0 %v1909
        %v1911 = vpop.xlane.xlu0 %1910
        %v1912 = vsel %vm1081, %v1908, 0.0
        %1913 = vadd.xlane.f32.xlu0 %v1912
        %v1914 = vpop.xlane.xlu0 %1913
        %v1915 = vrcp.pop %v1911
        %v1916 = vrcp.pop %v1914
        %v1917 = vmul.f32 %v1906, %v1915
        %v1918 = vmul.f32 %v1908, %v1916
        %1919 = vrot.lane.b32.xlu0 %v1076, 48
        %v1920 = vpop.permute.xlu0 %1919
        %v1923 = vsel %vm1081, %v1917, 0
        %1925 = vmatprep.subr.mxu0 0.0
        %1926 = vmatpush1.msra.mxu0 0.0
        %1927 = vmatprep.subr.mxu0 0.0
        %1928 = vmatpush1.msra.mxu0 0.0
        %1929 = vmatprep.subr.mxu0 0.0
        %1930 = vmatpush1.msra.mxu0 0.0
        %1931 = vmatprep.subr.mxu0 0.0
        %1932 = vmatpush1.msra.mxu0 0.0
        %1933 = vmatprep.subr.mxu0 0.0
        %1934 = vmatpush1.msra.mxu0 0.0
        %1935 = vmatprep.subr.mxu0 0.0
        %1936 = vmatpush1.msra.mxu0 0.0
        %1937 = vmatprep.subr.mxu0 0.0
        %1938 = vmatpush1.msra.mxu0 0.0
        %1939 = vmatprep.subr.mxu0 0.0
        %1940 = vmatpush1.msra.mxu0 0.0
        %1941 = vmatprep.subr.mxu0 0.0
        %1942 = vmatpush1.msra.mxu0 0.0
        %1943 = vmatprep.subr.mxu0 0.0
        %1944 = vmatpush1.msra.mxu0 0.0
        %1945 = vmatprep.subr.mxu0 0.0
        %1946 = vmatpush1.msra.mxu0 0.0
        %1947 = vmatprep.subr.mxu0 0.0
        %1948 = vmatpush1.msra.mxu0 0.0
        %1949 = vmatprep.subr.mxu0 0.0
        %1950 = vmatpush1.msra.mxu0 0.0
        %1951 = vmatprep.subr.mxu0 0.0
        %1952 = vmatpush1.msra.mxu0 0.0
        %1953 = vmatprep.subr.mxu0 0.0
        %1954 = vmatpush1.msra.mxu0 0.0
        %1955 = vmatprep.subr.mxu0 0.0
        %1956 = vmatpush1.msra.mxu0 %v1920
        %1957 = vmatprep.subr.mxu0 0.0
        %1958 = vmatpush2.msra.mxu0 0.0
        %1959 = vmatprep.subr.mxu0 0.0
        %1960 = vmatpush2.msra.mxu0 0.0
        %1961 = vmatprep.subr.mxu0 0.0
        %1962 = vmatpush2.msra.mxu0 0.0
        %1963 = vmatprep.subr.mxu0 0.0
        %1964 = vmatpush2.msra.mxu0 0.0
        %1965 = vmatprep.subr.mxu0 0.0
        %1966 = vmatpush2.msra.mxu0 0.0
        %1967 = vmatprep.subr.mxu0 0.0
        %1968 = vmatpush2.msra.mxu0 0.0
        %1969 = vmatprep.subr.mxu0 0.0
        %1970 = vmatpush2.msra.mxu0 0.0
        %1971 = vmatprep.subr.mxu0 0.0
        %1972 = vmatpush2.msra.mxu0 0.0
        %1973 = vmatprep.subr.mxu0 0.0
        %1974 = vmatpush2.msra.mxu0 0.0
        %1975 = vmatprep.subr.mxu0 0.0
        %1976 = vmatpush2.msra.mxu0 0.0
        %1977 = vmatprep.subr.mxu0 0.0
        %1978 = vmatpush2.msra.mxu0 0.0
        %1979 = vmatprep.subr.mxu0 0.0
        %1980 = vmatpush2.msra.mxu0 0.0
        %1981 = vmatprep.subr.mxu0 0.0
        %1982 = vmatpush2.msra.mxu0 0.0
        %1983 = vmatprep.subr.mxu0 0.0
        %1984 = vmatpush2.msra.mxu0 0.0
        %1985 = vmatprep.subr.mxu0 0.0
        %1986 = vmatpush2.msra.mxu0 0.0
        %1987 = vmatprep.subr.mxu0 0.0
        %1988 = vmatpush2.msra.mxu0 0.0
        %1989 = vmatprep.mubr.f32.mxu0 0.0
        %1990 = vmatmul.mubr.f32.gmra.mxu0 %v1923
        %v1991 = vpop.f32.mrf.mxu0
        %v1992 = vadd.f32 0.0, %v1991
        %v1993 = vpop.f32.mrf.mxu0
        %1994 = vdwg.mxu0
        %1995 = vrot.lane.b32.xlu0 %v1077, 48
        %v1996 = vpop.permute.xlu0 %1995
        %v1999 = vsel %vm1081, %v1918, 0
        %2001 = vmatprep.subr.mxu0 0.0
        %2002 = vmatpush1.msra.mxu0 0.0
        %2003 = vmatprep.subr.mxu0 0.0
        %2004 = vmatpush1.msra.mxu0 0.0
        %2005 = vmatprep.subr.mxu0 0.0
        %2006 = vmatpush1.msra.mxu0 0.0
        %2007 = vmatprep.subr.mxu0 0.0
        %2008 = vmatpush1.msra.mxu0 0.0
        %2009 = vmatprep.subr.mxu0 0.0
        %2010 = vmatpush1.msra.mxu0 0.0
        %2011 = vmatprep.subr.mxu0 0.0
        %2012 = vmatpush1.msra.mxu0 0.0
        %2013 = vmatprep.subr.mxu0 0.0
        %2014 = vmatpush1.msra.mxu0 0.0
        %2015 = vmatprep.subr.mxu0 0.0
        %2016 = vmatpush1.msra.mxu0 0.0
        %2017 = vmatprep.subr.mxu0 0.0
        %2018 = vmatpush1.msra.mxu0 0.0
        %2019 = vmatprep.subr.mxu0 0.0
        %2020 = vmatpush1.msra.mxu0 0.0
        %2021 = vmatprep.subr.mxu0 0.0
        %2022 = vmatpush1.msra.mxu0 0.0
        %2023 = vmatprep.subr.mxu0 0.0
        %2024 = vmatpush1.msra.mxu0 0.0
        %2025 = vmatprep.subr.mxu0 0.0
        %2026 = vmatpush1.msra.mxu0 0.0
        %2027 = vmatprep.subr.mxu0 0.0
        %2028 = vmatpush1.msra.mxu0 0.0
        %2029 = vmatprep.subr.mxu0 0.0
        %2030 = vmatpush1.msra.mxu0 0.0
        %2031 = vmatprep.subr.mxu0 0.0
        %2032 = vmatpush1.msra.mxu0 %v1996
        %2033 = vmatprep.subr.mxu0 0.0
        %2034 = vmatpush2.msra.mxu0 0.0
        %2035 = vmatprep.subr.mxu0 0.0
        %2036 = vmatpush2.msra.mxu0 0.0
        %2037 = vmatprep.subr.mxu0 0.0
        %2038 = vmatpush2.msra.mxu0 0.0
        %2039 = vmatprep.subr.mxu0 0.0
        %2040 = vmatpush2.msra.mxu0 0.0
        %2041 = vmatprep.subr.mxu0 0.0
        %2042 = vmatpush2.msra.mxu0 0.0
        %2043 = vmatprep.subr.mxu0 0.0
        %2044 = vmatpush2.msra.mxu0 0.0
        %2045 = vmatprep.subr.mxu0 0.0
        %2046 = vmatpush2.msra.mxu0 0.0
        %2047 = vmatprep.subr.mxu0 0.0
        %2048 = vmatpush2.msra.mxu0 0.0
        %2049 = vmatprep.subr.mxu0 0.0
        %2050 = vmatpush2.msra.mxu0 0.0
        %2051 = vmatprep.subr.mxu0 0.0
        %2052 = vmatpush2.msra.mxu0 0.0
        %2053 = vmatprep.subr.mxu0 0.0
        %2054 = vmatpush2.msra.mxu0 0.0
        %2055 = vmatprep.subr.mxu0 0.0
        %2056 = vmatpush2.msra.mxu0 0.0
        %2057 = vmatprep.subr.mxu0 0.0
        %2058 = vmatpush2.msra.mxu0 0.0
        %2059 = vmatprep.subr.mxu0 0.0
        %2060 = vmatpush2.msra.mxu0 0.0
        %2061 = vmatprep.subr.mxu0 0.0
        %2062 = vmatpush2.msra.mxu0 0.0
        %2063 = vmatprep.subr.mxu0 0.0
        %2064 = vmatpush2.msra.mxu0 0.0
        %2065 = vmatprep.mubr.f32.mxu0 0.0
        %2066 = vmatmul.mubr.f32.gmra.mxu0 %v1999
        %v2067 = vpop.f32.mrf.mxu0
        %v2068 = vadd.f32 0.0, %v2067
        %v2069 = vpop.f32.mrf.mxu0
        %2070 = vdwg.mxu0
        %2071 = vrot.lane.b32.xlu0 %v1065, 104
        %v2072 = vpop.permute.xlu0 %2071
        %2073 = vrot.lane.b32.xlu0 %v1048, 72
        %v2074 = vpop.permute.xlu0 %2073
        %v2075 = vsel %vm1081, %v2072, 0
        %v2077 = vsel %vm1081, %v2074, 0
        %2079 = vmatprep.subr.mxu0 0.0
        %2080 = vmatpush1.xpose.msra.mxu0 0.0
        %2081 = vmatprep.subr.mxu0 0.0
        %2082 = vmatpush1.xpose.msra.mxu0 0.0
        %2083 = vmatprep.subr.mxu0 0.0
        %2084 = vmatpush1.xpose.msra.mxu0 0.0
        %2085 = vmatprep.subr.mxu0 0.0
        %2086 = vmatpush1.xpose.msra.mxu0 0.0
        %2087 = vmatprep.subr.mxu0 0.0
        %2088 = vmatpush1.xpose.msra.mxu0 0.0
        %2089 = vmatprep.subr.mxu0 0.0
        %2090 = vmatpush1.xpose.msra.mxu0 0.0
        %2091 = vmatprep.subr.mxu0 0.0
        %2092 = vmatpush1.xpose.msra.mxu0 0.0
        %2093 = vmatprep.subr.mxu0 0.0
        %2094 = vmatpush1.xpose.msra.mxu0 0.0
        %2095 = vmatprep.subr.mxu0 0.0
        %2096 = vmatpush1.xpose.msra.mxu0 0.0
        %2097 = vmatprep.subr.mxu0 0.0
        %2098 = vmatpush1.xpose.msra.mxu0 0.0
        %2099 = vmatprep.subr.mxu0 0.0
        %2100 = vmatpush1.xpose.msra.mxu0 0.0
        %2101 = vmatprep.subr.mxu0 0.0
        %2102 = vmatpush1.xpose.msra.mxu0 0.0
        %2103 = vmatprep.subr.mxu0 0.0
        %2104 = vmatpush1.xpose.msra.mxu0 0.0
        %2105 = vmatprep.subr.mxu0 0.0
        %2106 = vmatpush1.xpose.msra.mxu0 0.0
        %2107 = vmatprep.subr.mxu0 0.0
        %2108 = vmatpush1.xpose.msra.mxu0 0.0
        %2109 = vmatprep.subr.mxu0 0.0
        %2110 = vmatpush1.xpose.msra.mxu0 %v2077
        %2111 = vmatprep.subr.mxu0 0.0
        %2112 = vmatpush2.xpose.msra.mxu0 0.0
        %2113 = vmatprep.subr.mxu0 0.0
        %2114 = vmatpush2.xpose.msra.mxu0 0.0
        %2115 = vmatprep.subr.mxu0 0.0
        %2116 = vmatpush2.xpose.msra.mxu0 0.0
        %2117 = vmatprep.subr.mxu0 0.0
        %2118 = vmatpush2.xpose.msra.mxu0 0.0
        %2119 = vmatprep.subr.mxu0 0.0
        %2120 = vmatpush2.xpose.msra.mxu0 0.0
        %2121 = vmatprep.subr.mxu0 0.0
        %2122 = vmatpush2.xpose.msra.mxu0 0.0
        %2123 = vmatprep.subr.mxu0 0.0
        %2124 = vmatpush2.xpose.msra.mxu0 0.0
        %2125 = vmatprep.subr.mxu0 0.0
        %2126 = vmatpush2.xpose.msra.mxu0 0.0
        %2127 = vmatprep.subr.mxu0 0.0
        %2128 = vmatpush2.xpose.msra.mxu0 0.0
        %2129 = vmatprep.subr.mxu0 0.0
        %2130 = vmatpush2.xpose.msra.mxu0 0.0
        %2131 = vmatprep.subr.mxu0 0.0
        %2132 = vmatpush2.xpose.msra.mxu0 0.0
        %2133 = vmatprep.subr.mxu0 0.0
        %2134 = vmatpush2.xpose.msra.mxu0 0.0
        %2135 = vmatprep.subr.mxu0 0.0
        %2136 = vmatpush2.xpose.msra.mxu0 0.0
        %2137 = vmatprep.subr.mxu0 0.0
        %2138 = vmatpush2.xpose.msra.mxu0 0.0
        %2139 = vmatprep.subr.mxu0 0.0
        %2140 = vmatpush2.xpose.msra.mxu0 0.0
        %2141 = vmatprep.subr.mxu0 0.0
        %2142 = vmatpush2.xpose.msra.mxu0 0.0
        %2143 = vmatprep.mubr.f32.mxu0 0.0
        %2144 = vmatmul.mubr.f32.gmra.mxu0 %v2075
        %v2145 = vpop.f32.mrf.mxu0
        %v2146 = vadd.f32 0.0, %v2145
        %v2147 = vpop.f32.mrf.mxu0
        %2148 = vdwg.mxu0
        %2149 = vrot.lane.b32.xlu0 %v1066, 104
        %v2150 = vpop.permute.xlu0 %2149
        %2151 = vrot.lane.b32.xlu0 %v1053, 72
        %v2152 = vpop.permute.xlu0 %2151
        %v2153 = vsel %vm1081, %v2150, 0
        %v2155 = vsel %vm1081, %v2152, 0
        %2157 = vmatprep.subr.mxu0 0.0
        %2158 = vmatpush1.xpose.msra.mxu0 0.0
        %2159 = vmatprep.subr.mxu0 0.0
        %2160 = vmatpush1.xpose.msra.mxu0 0.0
        %2161 = vmatprep.subr.mxu0 0.0
        %2162 = vmatpush1.xpose.msra.mxu0 0.0
        %2163 = vmatprep.subr.mxu0 0.0
        %2164 = vmatpush1.xpose.msra.mxu0 0.0
        %2165 = vmatprep.subr.mxu0 0.0
        %2166 = vmatpush1.xpose.msra.mxu0 0.0
        %2167 = vmatprep.subr.mxu0 0.0
        %2168 = vmatpush1.xpose.msra.mxu0 0.0
        %2169 = vmatprep.subr.mxu0 0.0
        %2170 = vmatpush1.xpose.msra.mxu0 0.0
        %2171 = vmatprep.subr.mxu0 0.0
        %2172 = vmatpush1.xpose.msra.mxu0 0.0
        %2173 = vmatprep.subr.mxu0 0.0
        %2174 = vmatpush1.xpose.msra.mxu0 0.0
        %2175 = vmatprep.subr.mxu0 0.0
        %2176 = vmatpush1.xpose.msra.mxu0 0.0
        %2177 = vmatprep.subr.mxu0 0.0
        %2178 = vmatpush1.xpose.msra.mxu0 0.0
        %2179 = vmatprep.subr.mxu0 0.0
        %2180 = vmatpush1.xpose.msra.mxu0 0.0
        %2181 = vmatprep.subr.mxu0 0.0
        %2182 = vmatpush1.xpose.msra.mxu0 0.0
        %2183 = vmatprep.subr.mxu0 0.0
        %2184 = vmatpush1.xpose.msra.mxu0 0.0
        %2185 = vmatprep.subr.mxu0 0.0
        %2186 = vmatpush1.xpose.msra.mxu0 0.0
        %2187 = vmatprep.subr.mxu0 0.0
        %2188 = vmatpush1.xpose.msra.mxu0 %v2155
        %2189 = vmatprep.subr.mxu0 0.0
        %2190 = vmatpush2.xpose.msra.mxu0 0.0
        %2191 = vmatprep.subr.mxu0 0.0
        %2192 = vmatpush2.xpose.msra.mxu0 0.0
        %2193 = vmatprep.subr.mxu0 0.0
        %2194 = vmatpush2.xpose.msra.mxu0 0.0
        %2195 = vmatprep.subr.mxu0 0.0
        %2196 = vmatpush2.xpose.msra.mxu0 0.0
        %2197 = vmatprep.subr.mxu0 0.0
        %2198 = vmatpush2.xpose.msra.mxu0 0.0
        %2199 = vmatprep.subr.mxu0 0.0
        %2200 = vmatpush2.xpose.msra.mxu0 0.0
        %2201 = vmatprep.subr.mxu0 0.0
        %2202 = vmatpush2.xpose.msra.mxu0 0.0
        %2203 = vmatprep.subr.mxu0 0.0
        %2204 = vmatpush2.xpose.msra.mxu0 0.0
        %2205 = vmatprep.subr.mxu0 0.0
        %2206 = vmatpush2.xpose.msra.mxu0 0.0
        %2207 = vmatprep.subr.mxu0 0.0
        %2208 = vmatpush2.xpose.msra.mxu0 0.0
        %2209 = vmatprep.subr.mxu0 0.0
        %2210 = vmatpush2.xpose.msra.mxu0 0.0
        %2211 = vmatprep.subr.mxu0 0.0
        %2212 = vmatpush2.xpose.msra.mxu0 0.0
        %2213 = vmatprep.subr.mxu0 0.0
        %2214 = vmatpush2.xpose.msra.mxu0 0.0
        %2215 = vmatprep.subr.mxu0 0.0
        %2216 = vmatpush2.xpose.msra.mxu0 0.0
        %2217 = vmatprep.subr.mxu0 0.0
        %2218 = vmatpush2.xpose.msra.mxu0 0.0
        %2219 = vmatprep.subr.mxu0 0.0
        %2220 = vmatpush2.xpose.msra.mxu0 0.0
        %2221 = vmatprep.mubr.f32.mxu0 0.0
        %2222 = vmatmul.mubr.f32.gmra.mxu0 %v2153
        %v2223 = vpop.f32.mrf.mxu0
        %v2224 = vadd.f32 0.0, %v2223
        %v2225 = vpop.f32.mrf.mxu0
        %2226 = vdwg.mxu0
        %v2227 = vsel %vm1081, %v2146, -inf
        %2228 = vmax.xlane.f32.xlu0 %v2227
        %v2229 = vpop.xlane.xlu0 %2228
        %v2230 = vsel %vm1081, %v2224, -inf
        %2231 = vmax.xlane.f32.xlu0 %v2230
        %v2232 = vpop.xlane.xlu0 %2231
        %v2233 = vsub.f32 %v2146, %v2229
        %v2234 = vsub.f32 %v2224, %v2232
        %v2235 = vmul.f32 %v2233, 1.442695
        %v2236 = vpow.pop %v2235
        %v2237 = vmul.f32 %v2234, 1.442695
        %v2238 = vpow.pop %v2237
        %v2239 = vsel %vm1081, %v2236, 0.0
        %2240 = vadd.xlane.f32.xlu0 %v2239
        %v2241 = vpop.xlane.xlu0 %2240
        %v2242 = vsel %vm1081, %v2238, 0.0
        %2243 = vadd.xlane.f32.xlu0 %v2242
        %v2244 = vpop.xlane.xlu0 %2243
        %v2245 = vrcp.pop %v2241
        %v2246 = vrcp.pop %v2244
        %v2247 = vmul.f32 %v2236, %v2245
        %v2248 = vmul.f32 %v2238, %v2246
        %2249 = vrot.lane.b32.xlu0 %v1076, 40
        %v2250 = vpop.permute.xlu0 %2249
        %v2253 = vsel %vm1081, %v2247, 0
        %2255 = vmatprep.subr.mxu0 0.0
        %2256 = vmatpush1.msra.mxu0 0.0
        %2257 = vmatprep.subr.mxu0 0.0
        %2258 = vmatpush1.msra.mxu0 0.0
        %2259 = vmatprep.subr.mxu0 0.0
        %2260 = vmatpush1.msra.mxu0 0.0
        %2261 = vmatprep.subr.mxu0 0.0
        %2262 = vmatpush1.msra.mxu0 0.0
        %2263 = vmatprep.subr.mxu0 0.0
        %2264 = vmatpush1.msra.mxu0 0.0
        %2265 = vmatprep.subr.mxu0 0.0
        %2266 = vmatpush1.msra.mxu0 0.0
        %2267 = vmatprep.subr.mxu0 0.0
        %2268 = vmatpush1.msra.mxu0 0.0
        %2269 = vmatprep.subr.mxu0 0.0
        %2270 = vmatpush1.msra.mxu0 0.0
        %2271 = vmatprep.subr.mxu0 0.0
        %2272 = vmatpush1.msra.mxu0 0.0
        %2273 = vmatprep.subr.mxu0 0.0
        %2274 = vmatpush1.msra.mxu0 0.0
        %2275 = vmatprep.subr.mxu0 0.0
        %2276 = vmatpush1.msra.mxu0 0.0
        %2277 = vmatprep.subr.mxu0 0.0
        %2278 = vmatpush1.msra.mxu0 0.0
        %2279 = vmatprep.subr.mxu0 0.0
        %2280 = vmatpush1.msra.mxu0 0.0
        %2281 = vmatprep.subr.mxu0 0.0
        %2282 = vmatpush1.msra.mxu0 0.0
        %2283 = vmatprep.subr.mxu0 0.0
        %2284 = vmatpush1.msra.mxu0 0.0
        %2285 = vmatprep.subr.mxu0 0.0
        %2286 = vmatpush1.msra.mxu0 %v2250
        %2287 = vmatprep.subr.mxu0 0.0
        %2288 = vmatpush2.msra.mxu0 0.0
        %2289 = vmatprep.subr.mxu0 0.0
        %2290 = vmatpush2.msra.mxu0 0.0
        %2291 = vmatprep.subr.mxu0 0.0
        %2292 = vmatpush2.msra.mxu0 0.0
        %2293 = vmatprep.subr.mxu0 0.0
        %2294 = vmatpush2.msra.mxu0 0.0
        %2295 = vmatprep.subr.mxu0 0.0
        %2296 = vmatpush2.msra.mxu0 0.0
        %2297 = vmatprep.subr.mxu0 0.0
        %2298 = vmatpush2.msra.mxu0 0.0
        %2299 = vmatprep.subr.mxu0 0.0
        %2300 = vmatpush2.msra.mxu0 0.0
        %2301 = vmatprep.subr.mxu0 0.0
        %2302 = vmatpush2.msra.mxu0 0.0
        %2303 = vmatprep.subr.mxu0 0.0
        %2304 = vmatpush2.msra.mxu0 0.0
        %2305 = vmatprep.subr.mxu0 0.0
        %2306 = vmatpush2.msra.mxu0 0.0
        %2307 = vmatprep.subr.mxu0 0.0
        %2308 = vmatpush2.msra.mxu0 0.0
        %2309 = vmatprep.subr.mxu0 0.0
        %2310 = vmatpush2.msra.mxu0 0.0
        %2311 = vmatprep.subr.mxu0 0.0
        %2312 = vmatpush2.msra.mxu0 0.0
        %2313 = vmatprep.subr.mxu0 0.0
        %2314 = vmatpush2.msra.mxu0 0.0
        %2315 = vmatprep.subr.mxu0 0.0
        %2316 = vmatpush2.msra.mxu0 0.0
        %2317 = vmatprep.subr.mxu0 0.0
        %2318 = vmatpush2.msra.mxu0 0.0
        %2319 = vmatprep.mubr.f32.mxu0 0.0
        %2320 = vmatmul.mubr.f32.gmra.mxu0 %v2253
        %v2321 = vpop.f32.mrf.mxu0
        %v2322 = vadd.f32 0.0, %v2321
        %v2323 = vpop.f32.mrf.mxu0
        %2324 = vdwg.mxu0
        %2325 = vrot.lane.b32.xlu0 %v1077, 40
        %v2326 = vpop.permute.xlu0 %2325
        %v2329 = vsel %vm1081, %v2248, 0
        %2331 = vmatprep.subr.mxu0 0.0
        %2332 = vmatpush1.msra.mxu0 0.0
        %2333 = vmatprep.subr.mxu0 0.0
        %2334 = vmatpush1.msra.mxu0 0.0
        %2335 = vmatprep.subr.mxu0 0.0
        %2336 = vmatpush1.msra.mxu0 0.0
        %2337 = vmatprep.subr.mxu0 0.0
        %2338 = vmatpush1.msra.mxu0 0.0
        %2339 = vmatprep.subr.mxu0 0.0
        %2340 = vmatpush1.msra.mxu0 0.0
        %2341 = vmatprep.subr.mxu0 0.0
        %2342 = vmatpush1.msra.mxu0 0.0
        %2343 = vmatprep.subr.mxu0 0.0
        %2344 = vmatpush1.msra.mxu0 0.0
        %2345 = vmatprep.subr.mxu0 0.0
        %2346 = vmatpush1.msra.mxu0 0.0
        %2347 = vmatprep.subr.mxu0 0.0
        %2348 = vmatpush1.msra.mxu0 0.0
        %2349 = vmatprep.subr.mxu0 0.0
        %2350 = vmatpush1.msra.mxu0 0.0
        %2351 = vmatprep.subr.mxu0 0.0
        %2352 = vmatpush1.msra.mxu0 0.0
        %2353 = vmatprep.subr.mxu0 0.0
        %2354 = vmatpush1.msra.mxu0 0.0
        %2355 = vmatprep.subr.mxu0 0.0
        %2356 = vmatpush1.msra.mxu0 0.0
        %2357 = vmatprep.subr.mxu0 0.0
        %2358 = vmatpush1.msra.mxu0 0.0
        %2359 = vmatprep.subr.mxu0 0.0
        %2360 = vmatpush1.msra.mxu0 0.0
        %2361 = vmatprep.subr.mxu0 0.0
        %2362 = vmatpush1.msra.mxu0 %v2326
        %2363 = vmatprep.subr.mxu0 0.0
        %2364 = vmatpush2.msra.mxu0 0.0
        %2365 = vmatprep.subr.mxu0 0.0
        %2366 = vmatpush2.msra.mxu0 0.0
        %2367 = vmatprep.subr.mxu0 0.0
        %2368 = vmatpush2.msra.mxu0 0.0
        %2369 = vmatprep.subr.mxu0 0.0
        %2370 = vmatpush2.msra.mxu0 0.0
        %2371 = vmatprep.subr.mxu0 0.0
        %2372 = vmatpush2.msra.mxu0 0.0
        %2373 = vmatprep.subr.mxu0 0.0
        %2374 = vmatpush2.msra.mxu0 0.0
        %2375 = vmatprep.subr.mxu0 0.0
        %2376 = vmatpush2.msra.mxu0 0.0
        %2377 = vmatprep.subr.mxu0 0.0
        %2378 = vmatpush2.msra.mxu0 0.0
        %2379 = vmatprep.subr.mxu0 0.0
        %2380 = vmatpush2.msra.mxu0 0.0
        %2381 = vmatprep.subr.mxu0 0.0
        %2382 = vmatpush2.msra.mxu0 0.0
        %2383 = vmatprep.subr.mxu0 0.0
        %2384 = vmatpush2.msra.mxu0 0.0
        %2385 = vmatprep.subr.mxu0 0.0
        %2386 = vmatpush2.msra.mxu0 0.0
        %2387 = vmatprep.subr.mxu0 0.0
        %2388 = vmatpush2.msra.mxu0 0.0
        %2389 = vmatprep.subr.mxu0 0.0
        %2390 = vmatpush2.msra.mxu0 0.0
        %2391 = vmatprep.subr.mxu0 0.0
        %2392 = vmatpush2.msra.mxu0 0.0
        %2393 = vmatprep.subr.mxu0 0.0
        %2394 = vmatpush2.msra.mxu0 0.0
        %2395 = vmatprep.mubr.f32.mxu0 0.0
        %2396 = vmatmul.mubr.f32.gmra.mxu0 %v2329
        %v2397 = vpop.f32.mrf.mxu0
        %v2398 = vadd.f32 0.0, %v2397
        %v2399 = vpop.f32.mrf.mxu0
        %2400 = vdwg.mxu0
        %2403 = vrot.lane.b32.xlu0 %v1662, 8
        %v2404 = vpop.permute.xlu0 %2403
        %2405 = vrot.lane.b32.xlu0 %v1738, 8
        %v2406 = vpop.permute.xlu0 %2405
        %2411 = vrot.lane.b32.xlu0 %v1992, 16
        %v2412 = vpop.permute.xlu0 %2411
        %2413 = vrot.lane.b32.xlu0 %v2068, 16
        %v2414 = vpop.permute.xlu0 %2413
        %2419 = vrot.lane.b32.xlu0 %v2322, 24
        %v2420 = vpop.permute.xlu0 %2419
        %2421 = vrot.lane.b32.xlu0 %v2398, 24
        %v2422 = vpop.permute.xlu0 %2421
        %v2425 = vsel %vm1081, %v1331, %v2404
        %v2426 = vsel %vm1081, %v1408, %v2406
        %vm2427 = vcmask 130048
        %v2428 = vsel %vm2427, %v2425, %v2412
        %v2429 = vsel %vm2427, %v2426, %v2414
        %vm2430 = vcmask 195584
        %v2431 = vsel %vm2430, %v2428, %v2420
        %v2432 = vsel %vm2430, %v2429, %v2422
        %v2433 = vld [vmem:[%s874] sm:$0xff]
        %v2434 = vld [vmem:[%s874 + $0x8] sm:$0xff]
        %v2435 = vld [vmem:[%s874 + $0x10] sm:$0xff]
        %v2436 = vld [vmem:[%s874 + $0x18] sm:$0xff]
        %v2437 = vld [vmem:[%s877] sm:$0x1]
        %v2439 = vlaneseq
        %v2440 = vshrl.u32 %v2439, 7
        %v2441 = vsub.s32 0, %v2440
        %v2442 = vrot.slane %v2437, %v2441
        %v2445 = vsel %vm920, %v2431, 0
        %v2448 = vsel %vm920, %v2432, 0
        %2450 = vmatprep.subr.mxu0 0.0
        %2451 = vmatpush1.msra.mxu0 0.0
        %2452 = vmatprep.subr.mxu0 0.0
        %2453 = vmatpush1.msra.mxu0 0.0
        %2454 = vmatprep.subr.mxu0 0.0
        %2455 = vmatpush1.msra.mxu0 0.0
        %2456 = vmatprep.subr.mxu0 0.0
        %2457 = vmatpush1.msra.mxu0 0.0
        %2458 = vmatprep.subr.mxu0 0.0
        %2459 = vmatpush1.msra.mxu0 0.0
        %2460 = vmatprep.subr.mxu0 0.0
        %2461 = vmatpush1.msra.mxu0 0.0
        %2462 = vmatprep.subr.mxu0 0.0
        %2463 = vmatpush1.msra.mxu0 0.0
        %2464 = vmatprep.subr.mxu0 0.0
        %2465 = vmatpush1.msra.mxu0 0.0
        %2466 = vmatprep.subr.mxu0 0.0
        %2467 = vmatpush1.msra.mxu0 0.0
        %2468 = vmatprep.subr.mxu0 0.0
        %2469 = vmatpush1.msra.mxu0 0.0
        %2470 = vmatprep.subr.mxu0 0.0
        %2471 = vmatpush1.msra.mxu0 0.0
        %2472 = vmatprep.subr.mxu0 0.0
        %2473 = vmatpush1.msra.mxu0 0.0
        %2474 = vmatprep.subr.mxu0 0.0
        %2475 = vmatpush1.msra.mxu0 %v2436
        %2476 = vmatprep.subr.mxu0 0.0
        %2477 = vmatpush1.msra.mxu0 %v2435
        %2478 = vmatprep.subr.mxu0 0.0
        %2479 = vmatpush1.msra.mxu0 %v2434
        %2480 = vmatprep.subr.mxu0 0.0
        %2481 = vmatpush1.msra.mxu0 %v2433
        %2482 = vmatprep.subr.mxu0 0.0
        %2483 = vmatpush2.msra.mxu0 0.0
        %2484 = vmatprep.subr.mxu0 0.0
        %2485 = vmatpush2.msra.mxu0 0.0
        %2486 = vmatprep.subr.mxu0 0.0
        %2487 = vmatpush2.msra.mxu0 0.0
        %2488 = vmatprep.subr.mxu0 0.0
        %2489 = vmatpush2.msra.mxu0 0.0
        %2490 = vmatprep.subr.mxu0 0.0
        %2491 = vmatpush2.msra.mxu0 0.0
        %2492 = vmatprep.subr.mxu0 0.0
        %2493 = vmatpush2.msra.mxu0 0.0
        %2494 = vmatprep.subr.mxu0 0.0
        %2495 = vmatpush2.msra.mxu0 0.0
        %2496 = vmatprep.subr.mxu0 0.0
        %2497 = vmatpush2.msra.mxu0 0.0
        %2498 = vmatprep.subr.mxu0 0.0
        %2499 = vmatpush2.msra.mxu0 0.0
        %2500 = vmatprep.subr.mxu0 0.0
        %2501 = vmatpush2.msra.mxu0 0.0
        %2502 = vmatprep.subr.mxu0 0.0
        %2503 = vmatpush2.msra.mxu0 0.0
        %2504 = vmatprep.subr.mxu0 0.0
        %2505 = vmatpush2.msra.mxu0 0.0
        %2506 = vmatprep.subr.mxu0 0.0
        %2507 = vmatpush2.msra.mxu0 0.0
        %2508 = vmatprep.subr.mxu0 0.0
        %2509 = vmatpush2.msra.mxu0 0.0
        %2510 = vmatprep.subr.mxu0 0.0
        %2511 = vmatpush2.msra.mxu0 0.0
        %2512 = vmatprep.subr.mxu0 0.0
        %2513 = vmatpush2.msra.mxu0 0.0
        %2514 = vmatprep.mubr.f32.mxu0 0.0
        %2515 = vmatmul.mubr.f32.gmra.mxu0 %v2445
        %v2516 = vpop.f32.mrf.mxu0
        %v2517 = vadd.f32 %v2442, %v2516
        %v2518 = vpop.f32.mrf.mxu0
        %2519 = vmatprep.mubr.f32.mxu0 0.0
        %2520 = vmatmul.mubr.f32.gmra.mxu0 %v2448
        %v2521 = vpop.f32.mrf.mxu0
        %v2522 = vadd.f32 %v2442, %v2521
        %v2523 = vpop.f32.mrf.mxu0
        %2524 = vdwg.mxu0
        %v2525 = vadd.f32 %v916, %v2517
        %v2526 = vadd.f32 %v917, %v2522
        %v2527 = vld [vmem:[%s880] sm:$0x1]
        %v2528 = vld [vmem:[%s883] sm:$0x1]
        %v2529 = vsel %vm920, %v2525, 0.0
        %2530 = vadd.xlane.f32.xlu0 %v2529
        %v2531 = vpop.xlane.xlu0 %2530
        %v2532 = vsel %vm920, %v2526, 0.0
        %2533 = vadd.xlane.f32.xlu0 %v2532
        %v2534 = vpop.xlane.xlu0 %2533
        %v2535 = vmul.f32 %v2531, %v927
        %v2536 = vmul.f32 %v2534, %v927
        %v2537 = vsub.f32 %v2525, %v2535
        %v2538 = vsub.f32 %v2526, %v2536
        %v2539 = vmul.f32 %v2537, %v2537
        %v2540 = vmul.f32 %v2538, %v2538
        %v2541 = vsel %vm920, %v2539, 0.0
        %2542 = vadd.xlane.f32.xlu0 %v2541
        %v2543 = vpop.xlane.xlu0 %2542
        %v2544 = vsel %vm920, %v2540, 0.0
        %2545 = vadd.xlane.f32.xlu0 %v2544
        %v2546 = vpop.xlane.xlu0 %2545
        %v2547 = vmul.f32 %v2543, %v927
        %v2548 = vmul.f32 %v2546, %v927
        %v2549 = vadd.f32 %v2547, 1e-05
        %v2550 = vadd.f32 %v2548, 1e-05
        %v2551 = vrsqrt.pop %v2549
        %v2552 = vrsqrt.pop %v2550
        %v2553 = vmul.f32 %v2537, %v2551
        %v2554 = vmul.f32 %v2538, %v2552
        %v2556 = vlaneseq
        %v2557 = vshrl.u32 %v2556, 7
        %v2558 = vsub.s32 0, %v2557
        %v2559 = vrot.slane %v2527, %v2558
        %v2561 = vmul.f32 %v2553, %v2559
        %v2562 = vmul.f32 %v2554, %v2559
        %v2564 = vlaneseq
        %v2565 = vshrl.u32 %v2564, 7
        %v2566 = vsub.s32 0, %v2565
        %v2567 = vrot.slane %v2528, %v2566
        %v2569 = vadd.f32 %v2561, %v2567
        %v2570 = vadd.f32 %v2562, %v2567
        %v2571 = vld [vmem:[%s888] sm:$0xff]
        %v2572 = vld [vmem:[%s888 + $0x8] sm:$0xff]
        %v2573 = vld [vmem:[%s888 + $0x10] sm:$0xff]
        %v2574 = vld [vmem:[%s888 + $0x18] sm:$0xff]
        %v2575 = vld [vmem:[%s891] sm:$0x1]
        %v2577 = vlaneseq
        %v2578 = vshrl.u32 %v2577, 7
        %v2579 = vsub.s32 0, %v2578
        %v2580 = vrot.slane %v2575, %v2579
        %v2583 = vsel %vm920, %v2569, 0
        %v2586 = vsel %vm920, %v2570, 0
        %2588 = vmatprep.subr.mxu0 0.0
        %2589 = vmatpush1.msra.mxu0 0.0
        %2590 = vmatprep.subr.mxu0 0.0
        %2591 = vmatpush1.msra.mxu0 0.0
        %2592 = vmatprep.subr.mxu0 0.0
        %2593 = vmatpush1.msra.mxu0 0.0
        %2594 = vmatprep.subr.mxu0 0.0
        %2595 = vmatpush1.msra.mxu0 0.0
        %2596 = vmatprep.subr.mxu0 0.0
        %2597 = vmatpush1.msra.mxu0 0.0
        %2598 = vmatprep.subr.mxu0 0.0
        %2599 = vmatpush1.msra.mxu0 0.0
        %2600 = vmatprep.subr.mxu0 0.0
        %2601 = vmatpush1.msra.mxu0 0.0
        %2602 = vmatprep.subr.mxu0 0.0
        %2603 = vmatpush1.msra.mxu0 0.0
        %2604 = vmatprep.subr.mxu0 0.0
        %2605 = vmatpush1.msra.mxu0 0.0
        %2606 = vmatprep.subr.mxu0 0.0
        %2607 = vmatpush1.msra.mxu0 0.0
        %2608 = vmatprep.subr.mxu0 0.0
        %2609 = vmatpush1.msra.mxu0 0.0
        %2610 = vmatprep.subr.mxu0 0.0
        %2611 = vmatpush1.msra.mxu0 0.0
        %2612 = vmatprep.subr.mxu0 0.0
        %2613 = vmatpush1.msra.mxu0 %v2574
        %2614 = vmatprep.subr.mxu0 0.0
        %2615 = vmatpush1.msra.mxu0 %v2573
        %2616 = vmatprep.subr.mxu0 0.0
        %2617 = vmatpush1.msra.mxu0 %v2572
        %2618 = vmatprep.subr.mxu0 0.0
        %2619 = vmatpush1.msra.mxu0 %v2571
        %2620 = vmatprep.subr.mxu0 0.0
        %2621 = vmatpush2.msra.mxu0 0.0
        %2622 = vmatprep.subr.mxu0 0.0
        %2623 = vmatpush2.msra.mxu0 0.0
        %2624 = vmatprep.subr.mxu0 0.0
        %2625 = vmatpush2.msra.mxu0 0.0
        %2626 = vmatprep.subr.mxu0 0.0
        %2627 = vmatpush2.msra.mxu0 0.0
        %2628 = vmatprep.subr.mxu0 0.0
        %2629 = vmatpush2.msra.mxu0 0.0
        %2630 = vmatprep.subr.mxu0 0.0
        %2631 = vmatpush2.msra.mxu0 0.0
        %2632 = vmatprep.subr.mxu0 0.0
        %2633 = vmatpush2.msra.mxu0 0.0
        %2634 = vmatprep.subr.mxu0 0.0
        %2635 = vmatpush2.msra.mxu0 0.0
        %2636 = vmatprep.subr.mxu0 0.0
        %2637 = vmatpush2.msra.mxu0 0.0
        %2638 = vmatprep.subr.mxu0 0.0
        %2639 = vmatpush2.msra.mxu0 0.0
        %2640 = vmatprep.subr.mxu0 0.0
        %2641 = vmatpush2.msra.mxu0 0.0
        %2642 = vmatprep.subr.mxu0 0.0
        %2643 = vmatpush2.msra.mxu0 0.0
        %2644 = vmatprep.subr.mxu0 0.0
        %2645 = vmatpush2.msra.mxu0 0.0
        %2646 = vmatprep.subr.mxu0 0.0
        %2647 = vmatpush2.msra.mxu0 0.0
        %2648 = vmatprep.subr.mxu0 0.0
        %2649 = vmatpush2.msra.mxu0 0.0
        %2650 = vmatprep.subr.mxu0 0.0
        %2651 = vmatpush2.msra.mxu0 0.0
        %2652 = vmatprep.mubr.f32.mxu0 0.0
        %2653 = vmatmul.mubr.f32.gmra.mxu0 %v2583
        %v2654 = vpop.f32.mrf.mxu0
        %v2655 = vadd.f32 %v2580, %v2654
        %v2656 = vpop.f32.mrf.mxu0
        %2657 = vmatprep.mubr.f32.mxu0 0.0
        %2658 = vmatmul.mubr.f32.gmra.mxu0 %v2586
        %v2659 = vpop.f32.mrf.mxu0
        %v2660 = vadd.f32 %v2580, %v2659
        %v2661 = vpop.f32.mrf.mxu0
        %2662 = vdwg.mxu0
        %v2663 = vld [vmem:[%s737] sm:$0xff]
        %v2664 = vld [vmem:[%s737 + $0x8] sm:$0xff]
        %v2665 = vld [vmem:[%s737 + $0x10] sm:$0xff]
        %v2666 = vld [vmem:[%s737 + $0x18] sm:$0xff]
        %v2667 = vld [vmem:[%s894] sm:$0x1]
        %v2669 = vlaneseq
        %v2670 = vshrl.u32 %v2669, 7
        %v2671 = vsub.s32 0, %v2670
        %v2672 = vrot.slane %v2667, %v2671
        %2674 = vmatprep.subr.mxu0 0.0
        %2675 = vmatpush1.msra.mxu0 0.0
        %2676 = vmatprep.subr.mxu0 0.0
        %2677 = vmatpush1.msra.mxu0 0.0
        %2678 = vmatprep.subr.mxu0 0.0
        %2679 = vmatpush1.msra.mxu0 0.0
        %2680 = vmatprep.subr.mxu0 0.0
        %2681 = vmatpush1.msra.mxu0 0.0
        %2682 = vmatprep.subr.mxu0 0.0
        %2683 = vmatpush1.msra.mxu0 0.0
        %2684 = vmatprep.subr.mxu0 0.0
        %2685 = vmatpush1.msra.mxu0 0.0
        %2686 = vmatprep.subr.mxu0 0.0
        %2687 = vmatpush1.msra.mxu0 0.0
        %2688 = vmatprep.subr.mxu0 0.0
        %2689 = vmatpush1.msra.mxu0 0.0
        %2690 = vmatprep.subr.mxu0 0.0
        %2691 = vmatpush1.msra.mxu0 0.0
        %2692 = vmatprep.subr.mxu0 0.0
        %2693 = vmatpush1.msra.mxu0 0.0
        %2694 = vmatprep.subr.mxu0 0.0
        %2695 = vmatpush1.msra.mxu0 0.0
        %2696 = vmatprep.subr.mxu0 0.0
        %2697 = vmatpush1.msra.mxu0 0.0
        %2698 = vmatprep.subr.mxu0 0.0
        %2699 = vmatpush1.msra.mxu0 %v2666
        %2700 = vmatprep.subr.mxu0 0.0
        %2701 = vmatpush1.msra.mxu0 %v2665
        %2702 = vmatprep.subr.mxu0 0.0
        %2703 = vmatpush1.msra.mxu0 %v2664
        %2704 = vmatprep.subr.mxu0 0.0
        %2705 = vmatpush1.msra.mxu0 %v2663
        %2706 = vmatprep.subr.mxu0 0.0
        %2707 = vmatpush2.msra.mxu0 0.0
        %2708 = vmatprep.subr.mxu0 0.0
        %2709 = vmatpush2.msra.mxu0 0.0
        %2710 = vmatprep.subr.mxu0 0.0
        %2711 = vmatpush2.msra.mxu0 0.0
        %2712 = vmatprep.subr.mxu0 0.0
        %2713 = vmatpush2.msra.mxu0 0.0
        %2714 = vmatprep.subr.mxu0 0.0
        %2715 = vmatpush2.msra.mxu0 0.0
        %2716 = vmatprep.subr.mxu0 0.0
        %2717 = vmatpush2.msra.mxu0 0.0
        %2718 = vmatprep.subr.mxu0 0.0
        %2719 = vmatpush2.msra.mxu0 0.0
        %2720 = vmatprep.subr.mxu0 0.0
        %2721 = vmatpush2.msra.mxu0 0.0
        %2722 = vmatprep.subr.mxu0 0.0
        %2723 = vmatpush2.msra.mxu0 0.0
        %2724 = vmatprep.subr.mxu0 0.0
        %2725 = vmatpush2.msra.mxu0 0.0
        %2726 = vmatprep.subr.mxu0 0.0
        %2727 = vmatpush2.msra.mxu0 0.0
        %2728 = vmatprep.subr.mxu0 0.0
        %2729 = vmatpush2.msra.mxu0 0.0
        %2730 = vmatprep.subr.mxu0 0.0
        %2731 = vmatpush2.msra.mxu0 0.0
        %2732 = vmatprep.subr.mxu0 0.0
        %2733 = vmatpush2.msra.mxu0 0.0
        %2734 = vmatprep.subr.mxu0 0.0
        %2735 = vmatpush2.msra.mxu0 0.0
        %2736 = vmatprep.subr.mxu0 0.0
        %2737 = vmatpush2.msra.mxu0 0.0
        %2738 = vmatprep.mubr.f32.mxu0 0.0
        %2739 = vmatmul.mubr.f32.gmra.mxu0 %v2583
        %v2740 = vpop.f32.mrf.mxu0
        %v2741 = vadd.f32 %v2672, %v2740
        %v2742 = vpop.f32.mrf.mxu0
        %2743 = vmatprep.mubr.f32.mxu0 0.0
        %2744 = vmatmul.mubr.f32.gmra.mxu0 %v2586
        %v2745 = vpop.f32.mrf.mxu0
        %v2746 = vadd.f32 %v2672, %v2745
        %v2747 = vpop.f32.mrf.mxu0
        %2748 = vdwg.mxu0
        %v2749 = vmax.f32 %v2741, 0.0
        %v2750 = vmax.f32 %v2746, 0.0
        %v2751 = vmul.f32 %v2655, %v2749
        %v2752 = vmul.f32 %v2660, %v2750
        %v2753 = vld [vmem:[%s899] sm:$0xff]
        %v2754 = vld [vmem:[%s899 + $0x8] sm:$0xff]
        %v2755 = vld [vmem:[%s899 + $0x10] sm:$0xff]
        %v2756 = vld [vmem:[%s899 + $0x18] sm:$0xff]
        %v2757 = vld [vmem:[%s899 + $0x20] sm:$0xff]
        %v2758 = vld [vmem:[%s899 + $0x28] sm:$0xff]
        %v2759 = vld [vmem:[%s899 + $0x30] sm:$0xff]
        %v2760 = vld [vmem:[%s899 + $0x38] sm:$0xff]
        %vm2761 = vcmask 523264
        %v2763 = vsel %vm2761, %v2751, 0
        %v2766 = vsel %vm2761, %v2752, 0
        %2768 = vmatprep.subr.mxu0 0.0
        %2769 = vmatpush1.msra.mxu0 0.0
        %2770 = vmatprep.subr.mxu0 0.0
        %2771 = vmatpush1.msra.mxu0 0.0
        %2772 = vmatprep.subr.mxu0 0.0
        %2773 = vmatpush1.msra.mxu0 0.0
        %2774 = vmatprep.subr.mxu0 0.0
        %2775 = vmatpush1.msra.mxu0 0.0
        %2776 = vmatprep.subr.mxu0 0.0
        %2777 = vmatpush1.msra.mxu0 0.0
        %2778 = vmatprep.subr.mxu0 0.0
        %2779 = vmatpush1.msra.mxu0 0.0
        %2780 = vmatprep.subr.mxu0 0.0
        %2781 = vmatpush1.msra.mxu0 0.0
        %2782 = vmatprep.subr.mxu0 0.0
        %2783 = vmatpush1.msra.mxu0 0.0
        %2784 = vmatprep.subr.mxu0 0.0
        %2785 = vmatpush1.msra.mxu0 %v2760
        %2786 = vmatprep.subr.mxu0 0.0
        %2787 = vmatpush1.msra.mxu0 %v2759
        %2788 = vmatprep.subr.mxu0 0.0
        %2789 = vmatpush1.msra.mxu0 %v2758
        %2790 = vmatprep.subr.mxu0 0.0
        %2791 = vmatpush1.msra.mxu0 %v2757
        %2792 = vmatprep.subr.mxu0 0.0
        %2793 = vmatpush1.msra.mxu0 %v2756
        %2794 = vmatprep.subr.mxu0 0.0
        %2795 = vmatpush1.msra.mxu0 %v2755
        %2796 = vmatprep.subr.mxu0 0.0
        %2797 = vmatpush1.msra.mxu0 %v2754
        %2798 = vmatprep.subr.mxu0 0.0
        %2799 = vmatpush1.msra.mxu0 %v2753
        %2800 = vmatprep.subr.mxu0 0.0
        %2801 = vmatpush2.msra.mxu0 0.0
        %2802 = vmatprep.subr.mxu0 0.0
        %2803 = vmatpush2.msra.mxu0 0.0
        %2804 = vmatprep.subr.mxu0 0.0
        %2805 = vmatpush2.msra.mxu0 0.0
        %2806 = vmatprep.subr.mxu0 0.0
        %2807 = vmatpush2.msra.mxu0 0.0
        %2808 = vmatprep.subr.mxu0 0.0
        %2809 = vmatpush2.msra.mxu0 0.0
        %2810 = vmatprep.subr.mxu0 0.0
        %2811 = vmatpush2.msra.mxu0 0.0
        %2812 = vmatprep.subr.mxu0 0.0
        %2813 = vmatpush2.msra.mxu0 0.0
        %2814 = vmatprep.subr.mxu0 0.0
        %2815 = vmatpush2.msra.mxu0 0.0
        %2816 = vmatprep.subr.mxu0 0.0
        %2817 = vmatpush2.msra.mxu0 0.0
        %2818 = vmatprep.subr.mxu0 0.0
        %2819 = vmatpush2.msra.mxu0 0.0
        %2820 = vmatprep.subr.mxu0 0.0
        %2821 = vmatpush2.msra.mxu0 0.0
        %2822 = vmatprep.subr.mxu0 0.0
        %2823 = vmatpush2.msra.mxu0 0.0
        %2824 = vmatprep.subr.mxu0 0.0
        %2825 = vmatpush2.msra.mxu0 0.0
        %2826 = vmatprep.subr.mxu0 0.0
        %2827 = vmatpush2.msra.mxu0 0.0
        %2828 = vmatprep.subr.mxu0 0.0
        %2829 = vmatpush2.msra.mxu0 0.0
        %2830 = vmatprep.subr.mxu0 0.0
        %2831 = vmatpush2.msra.mxu0 0.0
        %2832 = vmatprep.mubr.f32.mxu0 0.0
        %2833 = vmatmul.mubr.f32.gmra.mxu0 %v2763
        %v2834 = vpop.f32.mrf.mxu0
        %v2835 = vadd.f32 0.0, %v2834
        %v2836 = vpop.f32.mrf.mxu0
        %2837 = vmatprep.mubr.f32.mxu0 0.0
        %2838 = vmatmul.mubr.f32.gmra.mxu0 %v2766
        %v2839 = vpop.f32.mrf.mxu0
        %v2840 = vadd.f32 0.0, %v2839
        %v2841 = vpop.f32.mrf.mxu0
        %2842 = vdwg.mxu0
        %v2843 = vadd.f32 %v2525, %v2835
        %v2844 = vadd.f32 %v2526, %v2840
        %v2845 = vld [vmem:[%s902] sm:$0x1]
        %v2847 = vlaneseq
        %v2848 = vshrl.u32 %v2847, 7
        %v2849 = vsub.s32 0, %v2848
        %v2850 = vrot.slane %v2845, %v2849
        %v2852 = vadd.f32 %v2843, %v2850
        %v2853 = vadd.f32 %v2844, %v2850
        %2854 = vst.msk [vmem:[#allocation2] sm:$0xff] %vm920, %v2852
        %2855 = vst.msk [vmem:[#allocation2 + $0x8] sm:$0xff] %vm920, %v2853
        %p2856 = scmp.eq.s32.totalorder %s46, 1
        // Predicated region
        $region109: #{tpu_custom_call.1} parent=99 // pred_check
          %p2857 = pneg %p2856
        $region110: #{tpu_custom_call.1} parent=99 // pred_check_branch
          %2859 = sbr.rel (%p2857) target = $region112
        $region111: #{tpu_custom_call.1} parent=99 // pred_region
          %s2860 = scalar_lea.vmem [#allocation2], 7
          %v2861 = vld [vmem:[%s2860] ss:$8 sm:$0x3]
          %v2862 = vld [vmem:[%s17] sm:$0x1]
          %v2863 = vld [vmem:[%s18] sm:$0x1]
          %vm2864 = vcmask 254976
          %v2865 = vsel %vm2864, %v2861, 0.0
          %2866 = vadd.xlane.f32.xlu0 %v2865
          %v2867 = vpop.xlane.xlu0 %2866
          %v2868 = vmul.f32 %v2867, %v927
          %v2869 = vsub.f32 %v2861, %v2868
          %v2870 = vmul.f32 %v2869, %v2869
          %v2871 = vsel %vm2864, %v2870, 0.0
          %2872 = vadd.xlane.f32.xlu0 %v2871
          %v2873 = vpop.xlane.xlu0 %2872
          %v2874 = vmul.f32 %v2873, %v927
          %v2875 = vadd.f32 %v2874, 1e-05
          %v2876 = vrsqrt.pop %v2875
          %v2877 = vmul.f32 %v2869, %v2876
          %v2879 = vlaneseq
          %v2880 = vshrl.u32 %v2879, 7
          %v2881 = vsub.s32 0, %v2880
          %v2882 = vrot.slane %v2862, %v2881
          %v2884 = vmul.f32 %v2877, %v2882
          %v2886 = vlaneseq
          %v2887 = vshrl.u32 %v2886, 7
          %v2888 = vsub.s32 0, %v2887
          %v2889 = vrot.slane %v2863, %v2888
          %v2891 = vadd.f32 %v2884, %v2889
          %v2892 = vmax.f32 %v2891, 0.0
          %v2893 = vld [vmem:[%s19] sm:$0xff]
          %v2894 = vld [vmem:[%s19 + $0x8] sm:$0xff]
          %v2895 = vld [vmem:[%s19 + $0x10] sm:$0xff]
          %v2896 = vld [vmem:[%s19 + $0x18] sm:$0xff]
          %v2897 = vld [vmem:[#allocation5] sm:$0x1]
          %v2899 = vlaneseq
          %v2900 = vshrl.u32 %v2899, 7
          %v2901 = vsub.s32 0, %v2900
          %v2902 = vrot.slane %v2897, %v2901
          %v2905 = vsel %vm920, %v2892, 0
          %2907 = vmatprep.subr.mxu0 0.0
          %2908 = vmatpush1.msra.mxu0 0.0
          %2909 = vmatprep.subr.mxu0 0.0
          %2910 = vmatpush1.msra.mxu0 0.0
          %2911 = vmatprep.subr.mxu0 0.0
          %2912 = vmatpush1.msra.mxu0 0.0
          %2913 = vmatprep.subr.mxu0 0.0
          %2914 = vmatpush1.msra.mxu0 0.0
          %2915 = vmatprep.subr.mxu0 0.0
          %2916 = vmatpush1.msra.mxu0 0.0
          %2917 = vmatprep.subr.mxu0 0.0
          %2918 = vmatpush1.msra.mxu0 0.0
          %2919 = vmatprep.subr.mxu0 0.0
          %2920 = vmatpush1.msra.mxu0 0.0
          %2921 = vmatprep.subr.mxu0 0.0
          %2922 = vmatpush1.msra.mxu0 0.0
          %2923 = vmatprep.subr.mxu0 0.0
          %2924 = vmatpush1.msra.mxu0 0.0
          %2925 = vmatprep.subr.mxu0 0.0
          %2926 = vmatpush1.msra.mxu0 0.0
          %2927 = vmatprep.subr.mxu0 0.0
          %2928 = vmatpush1.msra.mxu0 0.0
          %2929 = vmatprep.subr.mxu0 0.0
          %2930 = vmatpush1.msra.mxu0 0.0
          %2931 = vmatprep.subr.mxu0 0.0
          %2932 = vmatpush1.msra.mxu0 %v2896
          %2933 = vmatprep.subr.mxu0 0.0
          %2934 = vmatpush1.msra.mxu0 %v2895
          %2935 = vmatprep.subr.mxu0 0.0
          %2936 = vmatpush1.msra.mxu0 %v2894
          %2937 = vmatprep.subr.mxu0 0.0
          %2938 = vmatpush1.msra.mxu0 %v2893
          %2939 = vmatprep.subr.mxu0 0.0
          %2940 = vmatpush2.msra.mxu0 0.0
          %2941 = vmatprep.subr.mxu0 0.0
          %2942 = vmatpush2.msra.mxu0 0.0
          %2943 = vmatprep.subr.mxu0 0.0
          %2944 = vmatpush2.msra.mxu0 0.0
          %2945 = vmatprep.subr.mxu0 0.0
          %2946 = vmatpush2.msra.mxu0 0.0
          %2947 = vmatprep.subr.mxu0 0.0
          %2948 = vmatpush2.msra.mxu0 0.0
          %2949 = vmatprep.subr.mxu0 0.0
          %2950 = vmatpush2.msra.mxu0 0.0
          %2951 = vmatprep.subr.mxu0 0.0
          %2952 = vmatpush2.msra.mxu0 0.0
          %2953 = vmatprep.subr.mxu0 0.0
          %2954 = vmatpush2.msra.mxu0 0.0
          %2955 = vmatprep.subr.mxu0 0.0
          %2956 = vmatpush2.msra.mxu0 0.0
          %2957 = vmatprep.subr.mxu0 0.0
          %2958 = vmatpush2.msra.mxu0 0.0
          %2959 = vmatprep.subr.mxu0 0.0
          %2960 = vmatpush2.msra.mxu0 0.0
          %2961 = vmatprep.subr.mxu0 0.0
          %2962 = vmatpush2.msra.mxu0 0.0
          %2963 = vmatprep.subr.mxu0 0.0
          %2964 = vmatpush2.msra.mxu0 0.0
          %2965 = vmatprep.subr.mxu0 0.0
          %2966 = vmatpush2.msra.mxu0 0.0
          %2967 = vmatprep.subr.mxu0 0.0
          %2968 = vmatpush2.msra.mxu0 0.0
          %2969 = vmatprep.subr.mxu0 0.0
          %2970 = vmatpush2.msra.mxu0 0.0
          %2971 = vmatprep.mubr.f32.mxu0 0.0
          %2972 = vmatmul.mubr.f32.gmra.mxu0 %v2905
          %v2973 = vpop.f32.mrf.mxu0
          %v2974 = vadd.f32 %v2902, %v2973
          %v2975 = vpop.f32.mrf.mxu0
          %2976 = vdwg.mxu0
          %vm2977 = vcmask 1024
          %2978 = vst.msk [vmem:[%s906] sm:$0x3] %vm2977, %v2974
        $region112: #{tpu_custom_call.1} parent=99 // pred_fallthru
          _
        %p2979 = scmp.lt.s32.totalorder %s45, 1
        %s2980 = scalar_select %p2979, %s45, 1
        %s2981 = smul.addr %s2980, 2
        %s2982 = scalar_lea.vmem %s21, %s2981
        // Predicated region
        $region113: #{tpu_custom_call.1} parent=99 // pred_check
          %p2983 = pneg %p571
        $region114: #{tpu_custom_call.1} parent=99 // pred_check_branch
          %2985 = sbr.rel (%p2983) target = $region116
        $region115: #{tpu_custom_call.1} parent=99 // pred_region
          _
        $region116: #{tpu_custom_call.1} parent=99 // pred_fallthru
          _
      $region100: #{tpu_custom_call.1} parent=5 // pred_fallthru
        _
      %p2986 = scmp.le.s32.totalorder 2, %s36
      // Predicated region
      $region117: #{tpu_custom_call.1} parent=5 // pred_check
        %p2987 = pneg %p2986
      $region118: #{tpu_custom_call.1} parent=5 // pred_check_branch
        %2989 = sbr.rel (%p2987) target = $region120
      $region119: #{tpu_custom_call.1} parent=5 // pred_region
        %s2990 = ssub.s32 %s36, 2
        // Predicated region
        $region121: #{tpu_custom_call.1} parent=119 // pred_check
          %p2991 = pneg %p577
        $region122: #{tpu_custom_call.1} parent=119 // pred_check_branch
          %2993 = sbr.rel (%p2991) target = $region124
        $region123: #{tpu_custom_call.1} parent=119 // pred_region
          %p2994 = scmp.lt.s32.totalorder %s47, 1
          %s2995 = scalar_select %p2994, %s47, 1
          %s2996 = smul.addr %s2995, 2
          %s2997 = scalar_lea.vmem %s21, %s2996
        $region124: #{tpu_custom_call.1} parent=119 // pred_fallthru
          _
      $region120: #{tpu_custom_call.1} parent=5 // pred_fallthru
        _
    $region6: #{tpu_custom_call.1} parent=1 // loop_footer
      %s40 = sadd.s32 1, %s36
    $region7: #{tpu_custom_call.1} parent=1 // loop_footer_branch
      %35 = sbr.rel target = $region3
    $region8: #{tpu_custom_call.1} parent=1 // loop_exit
      _
    %2998 = vsyncpa [#allocation7], 1
    %s2999 = scalar_lea.sflag [#allocation7], 1
    %3000 = vsyncpa %s2999, 1

</llo_original>
